<compile_context>
chip_gen: v6e
topology: v6e:2x2x1
jax: 0.10.0
libtpu: 0.0.40
codegen_flags: <defaults>
</compile_context>

<pallas_src>
import math
import jax
import jax.numpy as jnp
from jax import lax
from jax.experimental import pallas as pl
from jax.experimental.pallas import tpu as pltpu

# ---------------- config (small, consistent with nanoGPTConfig) ----------------
VOCAB   = 64
MAX_LEN = 16
N_EMBD  = 32
N_HEAD  = 4
N_LAYER = 2
D_K     = N_EMBD // N_HEAD
LN_EPS  = 1e-5


# ---------------- in-kernel math helpers ----------------
def _layernorm(x, a, b, eps=LN_EPS):
    # matches the torch module: a * (x - mean) / (std + eps) + b, with
    # torch.std's default *unbiased* (N-1) estimator and eps added to std.
    n = x.shape[-1]
    mean = jnp.mean(x, axis=-1, keepdims=True)
    var = jnp.sum((x - mean) ** 2, axis=-1, keepdims=True) / (n - 1)
    std = jnp.sqrt(var)
    return a * (x - mean) / (std + eps) + b


def _new_gelu(x):
    c = math.sqrt(2.0 / math.pi)
    return 0.5 * x * (1.0 + jnp.tanh(c * (x + 0.044715 * x ** 3)))


# ---------------- fully fused forward kernel (one batch element per grid step) ----------------
def fused_forward_kernel(x_ref, lnw_ref, lnf_ref,
                         wqkv_ref, bqkv_ref, wo_ref, bo_ref,
                         wfc_ref, bfc_ref, wpr_ref, bpr_ref, wlm_ref,
                         lhs_ref, logits_ref, hid_ref, attn_ref, attw_ref):
    x = x_ref[0]                                   # (T, C)
    T, C = x.shape
    scale = 1.0 / math.sqrt(D_K)

    row = lax.broadcasted_iota(jnp.int32, (T, T), 0)
    col = lax.broadcasted_iota(jnp.int32, (T, T), 1)
    causal = row >= col                            # (T, T) lower-triangular

    lnf_p = lnf_ref[...]                           # (2, C)
    lnf_a = lnf_p[0:1]
    lnf_b = lnf_p[1:2]

    h = x
    for li in range(N_LAYER):                      # static unroll: all layers in one kernel
        lnp = lnw_ref[li]                          # (4, C): ln1_a, ln1_b, ln2_a, ln2_b

        # ---- ln_1 + fused QKV projection (one (T,C)@(C,3C) matmul) ----
        h_ln = _layernorm(h, lnp[0:1], lnp[1:2])
        qkv = jnp.dot(h_ln, wqkv_ref[li],
                      preferred_element_type=jnp.float32) + bqkv_ref[li]   # (T, 3C)

        # ---- split heads -> (N_HEAD, T, D_K), batched attention over heads ----
        qh = jnp.stack([qkv[:, hh * D_K:(hh + 1) * D_K]
                        for hh in range(N_HEAD)], axis=0)
        kh = jnp.stack([qkv[:, C + hh * D_K: C + (hh + 1) * D_K]
                        for hh in range(N_HEAD)], axis=0)
        vh = jnp.stack([qkv[:, 2 * C + hh * D_K: 2 * C + (hh + 1) * D_K]
                        for hh in range(N_HEAD)], axis=0)

        att = jnp.einsum("htd,hsd->hts", qh, kh,
                         preferred_element_type=jnp.float32) * scale       # (H, T, T)
        att = jnp.where(causal, att, -jnp.inf)     # masked_fill(mask == 0, -inf)
        m = jnp.max(att, axis=-1, keepdims=True)
        e = jnp.exp(att - m)
        p = e / jnp.sum(e, axis=-1, keepdims=True) # softmax; p == att_wei
        attw_ref[0, li * N_HEAD:(li + 1) * N_HEAD] = p   # single store per layer

        z = jnp.einsum("hts,hsd->htd", p, vh,
                       preferred_element_type=jnp.float32)                 # (H, T, D_K)
        z = jnp.concatenate([z[hh] for hh in range(N_HEAD)], axis=-1)      # (T, C)

        # ---- c_proj (+ resid dropout == identity) ----
        attn_out = jnp.dot(z, wo_ref[li],
                           preferred_element_type=jnp.float32) + bo_ref[li]
        attn_ref[0, li] = attn_out

        # ---- residual, ln_2, MLP, residual ----
        h1 = h + attn_out
        ff = jnp.dot(_layernorm(h1, lnp[2:3], lnp[3:4]), wfc_ref[li],
                     preferred_element_type=jnp.float32) + bfc_ref[li]
        ff = _new_gelu(ff)
        ff = jnp.dot(ff, wpr_ref[li],
                     preferred_element_type=jnp.float32) + bpr_ref[li]
        h = h1 + ff

        # ---- ln_f of this layer's hidden state (fused, no extra kernel) ----
        hid_li = _layernorm(h, lnf_a, lnf_b)
        hid_ref[0, li] = hid_li

        if li == N_LAYER - 1:
            # last_hidden_state == ln_f of final layer output (reuse, no recompute)
            lhs_ref[0] = hid_li
            # tied lm_head on the last token only (targets=None path)
            logits_ref[0] = jnp.dot(hid_li[T - 1:T, :], wlm_ref[...],
                                    preferred_element_type=jnp.float32)


def run_fused(x, params):
    B, T, C = x.shape
    V = params["w_lm"].shape[1]

    weights = [params["lnw"], params["lnf"],
               params["wqkv"], params["bqkv"], params["wo"], params["bo"],
               params["wfc"], params["bfc"], params["wpr"], params["bpr"],
               params["w_lm"]]

    def const_spec(arr):
        nd = arr.ndim
        return pl.BlockSpec(arr.shape, lambda b, _nd=nd: (0,) * _nd)

    in_specs = [pl.BlockSpec((1, T, C), lambda b: (b, 0, 0))] + \
               [const_spec(w) for w in weights]

    out_specs = [
        pl.BlockSpec((1, T, C), lambda b: (b, 0, 0)),                      # last_hidden_state
        pl.BlockSpec((1, 1, V), lambda b: (b, 0, 0)),                      # logits (last token)
        pl.BlockSpec((1, N_LAYER, T, C), lambda b: (b, 0, 0, 0)),          # ln_f'd hidden states
        pl.BlockSpec((1, N_LAYER, T, C), lambda b: (b, 0, 0, 0)),          # attention outputs
        pl.BlockSpec((1, N_LAYER * N_HEAD, T, T), lambda b: (b, 0, 0, 0)), # attention weights
    ]
    out_shape = (
        jax.ShapeDtypeStruct((B, T, C), jnp.float32),
        jax.ShapeDtypeStruct((B, 1, V), jnp.float32),
        jax.ShapeDtypeStruct((B, N_LAYER, T, C), jnp.float32),
        jax.ShapeDtypeStruct((B, N_LAYER, T, C), jnp.float32),
        jax.ShapeDtypeStruct((B, N_LAYER * N_HEAD, T, T), jnp.float32),
    )

    return pl.pallas_call(
        fused_forward_kernel,
        grid=(B,),
        in_specs=in_specs,
        out_specs=out_specs,
        out_shape=out_shape,
        compiler_params=pltpu.CompilerParams(
            dimension_semantics=("parallel",),       # B=2 -> one element per TC on v7x
            vmem_limit_bytes=16 * 1024 * 1024,       # tiny model; well under limit everywhere
        ),
    )(x, *weights)


# ---------------- parameter init (deterministic, mirrors _init_weights; packed layout) ----------------
def init_params(key):
    ks = jax.random.split(key, 2 + 6 * N_LAYER)
    wte = 0.02 * jax.random.normal(ks[0], (VOCAB, N_EMBD), jnp.float32)
    wpe = 0.02 * jax.random.normal(ks[1], (MAX_LEN, N_EMBD), jnp.float32)
    cproj_std = 0.02 / math.sqrt(2 * N_LAYER)

    wqkv, wo, wfc, wpr = [], [], [], []
    for li in range(N_LAYER):
        k0, k1, k2, k3, k4, k5 = ks[2 + 6 * li: 2 + 6 * (li + 1)]
        wq = 0.02 * jax.random.normal(k0, (N_EMBD, N_EMBD), jnp.float32)
        wk = 0.02 * jax.random.normal(k1, (N_EMBD, N_EMBD), jnp.float32)
        wv = 0.02 * jax.random.normal(k2, (N_EMBD, N_EMBD), jnp.float32)
        wqkv.append(jnp.concatenate([wq, wk, wv], axis=1))                # (C, 3C)
        wo.append(cproj_std * jax.random.normal(k3, (N_EMBD, N_EMBD), jnp.float32))
        wfc.append(0.02 * jax.random.normal(k4, (N_EMBD, 4 * N_EMBD), jnp.float32))
        wpr.append(cproj_std * jax.random.normal(k5, (4 * N_EMBD, N_EMBD), jnp.float32))

    ln_rows = jnp.stack([jnp.ones((N_EMBD,), jnp.float32),
                         jnp.zeros((N_EMBD,), jnp.float32),
                         jnp.ones((N_EMBD,), jnp.float32),
                         jnp.zeros((N_EMBD,), jnp.float32)], axis=0)      # (4, C)

    return dict(
        wte=wte,
        wpe=wpe,
        w_lm=wte.T,                                                        # tied lm_head weight, pre-transposed (C, V)
        lnw=jnp.tile(ln_rows[None], (N_LAYER, 1, 1)),                      # (L, 4, C)
        lnf=jnp.stack([jnp.ones((N_EMBD,), jnp.float32),
                       jnp.zeros((N_EMBD,), jnp.float32)], axis=0),        # (2, C)
        wqkv=jnp.stack(wqkv),                                              # (L, C, 3C)
        bqkv=jnp.zeros((N_LAYER, 1, 3 * N_EMBD), jnp.float32),
        wo=jnp.stack(wo),                                                  # (L, C, C)
        bo=jnp.zeros((N_LAYER, 1, N_EMBD), jnp.float32),
        wfc=jnp.stack(wfc),                                                # (L, C, 4C)
        bfc=jnp.zeros((N_LAYER, 1, 4 * N_EMBD), jnp.float32),
        wpr=jnp.stack(wpr),                                                # (L, 4C, C)
        bpr=jnp.zeros((N_LAYER, 1, N_EMBD), jnp.float32),
    )


# ---------------- full forward (targets=None path) ----------------
def nanogpt_forward(idx, params):
    B, T = idx.shape
    assert T <= MAX_LEN
    # Embedding gathers stay in plain JAX; dropout(p=0) == identity.
    tok_emb = jnp.take(params["wte"], idx, axis=0)            # (B, T, C)
    pos_emb = params["wpe"][:T][None, :, :]                   # (1, T, C)
    x = tok_emb + pos_emb

    lhs, logits, hid, attn, attw = run_fused(x, params)
    attw = attw.reshape(B, N_LAYER, N_HEAD, T, T)

    hidden_states = [hid[:, li] for li in range(N_LAYER)]             # ln_f'd per-layer outputs
    attentions = [attn[:, li] for li in range(N_LAYER)]               # pre-residual attn outputs
    attentions_weights = [attw[:, li] for li in range(N_LAYER)]       # post-softmax weights

    return dict(last_hidden_state=lhs,
                logits=logits,
                loss=None,
                hidden_states=hidden_states,
                attentions=attentions,
                attentions_weights=attentions_weights)


if __name__ == "__main__":
    key = jax.random.PRNGKey(0)
    pkey, ikey = jax.random.split(key)
    params = init_params(pkey)

    B, T = 2, 8
    idx = jax.random.randint(ikey, (B, T), 0, VOCAB, dtype=jnp.int32)

    out = nanogpt_forward(idx, params)
    jax.block_until_ready(out["logits"])
    jax.block_until_ready(out["last_hidden_state"])

    assert out["last_hidden_state"].shape == (B, T, N_EMBD)
    assert out["logits"].shape == (B, 1, VOCAB)
    assert len(out["hidden_states"]) == N_LAYER
    assert len(out["attentions"]) == N_LAYER
    assert out["attentions"][0].shape == (B, T, N_EMBD)
    assert out["attentions_weights"][0].shape == (B, N_HEAD, T, T)
    assert bool(jnp.all(jnp.isfinite(out["logits"])))
    assert bool(jnp.all(jnp.isfinite(out["last_hidden_state"])))
    print("KERNEL_OK")
</pallas_src>

<mosaic_0001>
module attributes {stable_mosaic.version = 11 : i64} {
  func.func @fused_forward_kernel(%arg0: i32, %arg1: memref<1x8x32xf32, #tpu.memory_space<vmem>>, %arg2: memref<2x4x32xf32, #tpu.memory_space<vmem>>, %arg3: memref<2x32xf32, #tpu.memory_space<vmem>>, %arg4: memref<2x32x96xf32, #tpu.memory_space<vmem>>, %arg5: memref<2x1x96xf32, #tpu.memory_space<vmem>>, %arg6: memref<2x32x32xf32, #tpu.memory_space<vmem>>, %arg7: memref<2x1x32xf32, #tpu.memory_space<vmem>>, %arg8: memref<2x32x128xf32, #tpu.memory_space<vmem>>, %arg9: memref<2x1x128xf32, #tpu.memory_space<vmem>>, %arg10: memref<2x128x32xf32, #tpu.memory_space<vmem>>, %arg11: memref<2x1x32xf32, #tpu.memory_space<vmem>>, %arg12: memref<32x64xf32, #tpu.memory_space<vmem>>, %arg13: memref<1x8x32xf32, #tpu.memory_space<vmem>>, %arg14: memref<1x1x64xf32, #tpu.memory_space<vmem>>, %arg15: memref<1x2x8x32xf32, #tpu.memory_space<vmem>>, %arg16: memref<1x2x8x32xf32, #tpu.memory_space<vmem>>, %arg17: memref<1x8x8x8xf32, #tpu.memory_space<vmem>>) attributes {dimension_semantics = [#tpu.dimension_semantics<parallel>], iteration_bounds = array<i64: 2>, scalar_prefetch = 0 : i64, scratch_operands = 0 : i64, tpu.core_type = #tpu.core_type<tc>, window_params = [{transform_indices = @transform_0, window_bounds = array<i64: 1, 8, 32>}, {pipeline_mode = #tpu.pipeline_mode<synchronous>, transform_indices = @transform_1, window_bounds = array<i64: 2, 4, 32>}, {pipeline_mode = #tpu.pipeline_mode<synchronous>, transform_indices = @transform_2, window_bounds = array<i64: 2, 32>}, {pipeline_mode = #tpu.pipeline_mode<synchronous>, transform_indices = @transform_3, window_bounds = array<i64: 2, 32, 96>}, {pipeline_mode = #tpu.pipeline_mode<synchronous>, transform_indices = @transform_4, window_bounds = array<i64: 2, 1, 96>}, {pipeline_mode = #tpu.pipeline_mode<synchronous>, transform_indices = @transform_5, window_bounds = array<i64: 2, 32, 32>}, {pipeline_mode = #tpu.pipeline_mode<synchronous>, transform_indices = @transform_6, window_bounds = array<i64: 2, 1, 32>}, {pipeline_mode = #tpu.pipeline_mode<synchronous>, transform_indices = @transform_7, window_bounds = array<i64: 2, 32, 128>}, {pipeline_mode = #tpu.pipeline_mode<synchronous>, transform_indices = @transform_8, window_bounds = array<i64: 2, 1, 128>}, {pipeline_mode = #tpu.pipeline_mode<synchronous>, transform_indices = @transform_9, window_bounds = array<i64: 2, 128, 32>}, {pipeline_mode = #tpu.pipeline_mode<synchronous>, transform_indices = @transform_10, window_bounds = array<i64: 2, 1, 32>}, {pipeline_mode = #tpu.pipeline_mode<synchronous>, transform_indices = @transform_11, window_bounds = array<i64: 32, 64>}, {transform_indices = @transform_12, window_bounds = array<i64: 1, 8, 32>}, {transform_indices = @transform_13, window_bounds = array<i64: 1, 1, 64>}, {transform_indices = @transform_14, window_bounds = array<i64: 1, 2, 8, 32>}, {transform_indices = @transform_15, window_bounds = array<i64: 1, 2, 8, 32>}, {transform_indices = @transform_16, window_bounds = array<i64: 1, 8, 8, 8>}]} {
    %c0 = arith.constant 0 : index
    %c0_0 = arith.constant 0 : index
    %c0_1 = arith.constant 0 : index
    %0 = vector.load %arg1[%c0, %c0_0, %c0_1] : memref<1x8x32xf32, #tpu.memory_space<vmem>>, vector<1x8x32xf32>
    %1 = vector.shape_cast %0 : vector<1x8x32xf32> to vector<8x32xf32>
    %2 = tpu.iota {dimensions = array<i32: 0>} : vector<8x8xi32>
    %3 = tpu.iota {dimensions = array<i32: 1>} : vector<8x8xi32>
    %4 = arith.cmpi sge, %2, %3 : vector<8x8xi32>
    %c0_2 = arith.constant 0 : index
    %c0_3 = arith.constant 0 : index
    %5 = vector.load %arg3[%c0_2, %c0_3] : memref<2x32xf32, #tpu.memory_space<vmem>>, vector<2x32xf32>
    %6 = vector.extract_strided_slice %5 {offsets = [0, 0], sizes = [1, 32], strides = [1, 1]} : vector<2x32xf32> to vector<1x32xf32>
    %7 = vector.extract_strided_slice %5 {offsets = [1, 0], sizes = [1, 32], strides = [1, 1]} : vector<2x32xf32> to vector<1x32xf32>
    %c0_4 = arith.constant 0 : index
    %c0_5 = arith.constant 0 : index
    %c0_6 = arith.constant 0 : index
    %8 = vector.load %arg2[%c0_4, %c0_5, %c0_6] : memref<2x4x32xf32, #tpu.memory_space<vmem>>, vector<1x4x32xf32>
    %9 = vector.shape_cast %8 : vector<1x4x32xf32> to vector<4x32xf32>
    %10 = vector.extract_strided_slice %9 {offsets = [0, 0], sizes = [1, 32], strides = [1, 1]} : vector<4x32xf32> to vector<1x32xf32>
    %11 = vector.extract_strided_slice %9 {offsets = [1, 0], sizes = [1, 32], strides = [1, 1]} : vector<4x32xf32> to vector<1x32xf32>
    %cst = arith.constant dense<0.000000e+00> : vector<8xf32>
    %12 = vector.multi_reduction <add>, %1, %cst [1] : vector<8x32xf32> to vector<8xf32>
    %13 = vector.shape_cast %12 : vector<8xf32> to vector<8x1xf32>
    %cst_7 = arith.constant 3.200000e+01 : f32
    %14 = vector.broadcast %cst_7 : f32 to vector<8x1xf32>
    %15 = arith.divf %13, %14 : vector<8x1xf32>
    %16 = vector.broadcast %15 : vector<8x1xf32> to vector<8x32xf32>
    %17 = arith.subf %1, %16 : vector<8x32xf32>
    %18 = arith.mulf %17, %17 : vector<8x32xf32>
    %cst_8 = arith.constant dense<0.000000e+00> : vector<8xf32>
    %19 = vector.multi_reduction <add>, %18, %cst_8 [1] : vector<8x32xf32> to vector<8xf32>
    %20 = vector.shape_cast %19 : vector<8xf32> to vector<8x1xf32>
    %cst_9 = arith.constant 3.100000e+01 : f32
    %21 = vector.broadcast %cst_9 : f32 to vector<8x1xf32>
    %22 = arith.divf %20, %21 : vector<8x1xf32>
    %23 = math.sqrt %22 : vector<8x1xf32>
    %24 = vector.broadcast %15 : vector<8x1xf32> to vector<8x32xf32>
    %25 = arith.subf %1, %24 : vector<8x32xf32>
    %26 = vector.broadcast %10 : vector<1x32xf32> to vector<8x32xf32>
    %27 = arith.mulf %26, %25 : vector<8x32xf32>
    %cst_10 = arith.constant 9.99999974E-6 : f32
    %28 = vector.broadcast %cst_10 : f32 to vector<8x1xf32>
    %29 = arith.addf %23, %28 : vector<8x1xf32>
    %30 = vector.broadcast %29 : vector<8x1xf32> to vector<8x32xf32>
    %31 = arith.divf %27, %30 : vector<8x32xf32>
    %32 = vector.broadcast %11 : vector<1x32xf32> to vector<8x32xf32>
    %33 = arith.addf %31, %32 : vector<8x32xf32>
    %c0_11 = arith.constant 0 : index
    %c0_12 = arith.constant 0 : index
    %c0_13 = arith.constant 0 : index
    %34 = vector.load %arg4[%c0_11, %c0_12, %c0_13] : memref<2x32x96xf32, #tpu.memory_space<vmem>>, vector<1x32x96xf32>
    %35 = vector.shape_cast %34 : vector<1x32x96xf32> to vector<32x96xf32>
    %cst_14 = arith.constant dense<0.000000e+00> : vector<8x96xf32>
    %36 = tpu.matmul %33, %35, %cst_14 {dimension_numbers = #tpu.dot_dimension_numbers<[1], [0], [0], [1], [0, 0, 1, 1], [], []>} : vector<8x32xf32>, vector<32x96xf32>, vector<8x96xf32> -> vector<8x96xf32>
    %c0_15 = arith.constant 0 : index
    %c0_16 = arith.constant 0 : index
    %c0_17 = arith.constant 0 : index
    %37 = vector.load %arg5[%c0_15, %c0_16, %c0_17] : memref<2x1x96xf32, #tpu.memory_space<vmem>>, vector<1x1x96xf32>
    %38 = vector.shape_cast %37 : vector<1x1x96xf32> to vector<1x96xf32>
    %39 = vector.broadcast %38 : vector<1x96xf32> to vector<8x96xf32>
    %40 = arith.addf %36, %39 : vector<8x96xf32>
    %41 = vector.extract_strided_slice %40 {offsets = [0, 0], sizes = [8, 8], strides = [1, 1]} : vector<8x96xf32> to vector<8x8xf32>
    %42 = vector.extract_strided_slice %40 {offsets = [0, 8], sizes = [8, 8], strides = [1, 1]} : vector<8x96xf32> to vector<8x8xf32>
    %43 = vector.extract_strided_slice %40 {offsets = [0, 16], sizes = [8, 8], strides = [1, 1]} : vector<8x96xf32> to vector<8x8xf32>
    %44 = vector.extract_strided_slice %40 {offsets = [0, 24], sizes = [8, 8], strides = [1, 1]} : vector<8x96xf32> to vector<8x8xf32>
    %45 = vector.shape_cast %41 : vector<8x8xf32> to vector<1x8x8xf32>
    %46 = vector.shape_cast %42 : vector<8x8xf32> to vector<1x8x8xf32>
    %47 = vector.shape_cast %43 : vector<8x8xf32> to vector<1x8x8xf32>
    %48 = vector.shape_cast %44 : vector<8x8xf32> to vector<1x8x8xf32>
    %49 = tpu.concatenate %45, %46, %47, %48 in 0 : vector<1x8x8xf32>, vector<1x8x8xf32>, vector<1x8x8xf32>, vector<1x8x8xf32> -> vector<4x8x8xf32>
    %50 = vector.extract_strided_slice %40 {offsets = [0, 32], sizes = [8, 8], strides = [1, 1]} : vector<8x96xf32> to vector<8x8xf32>
    %51 = vector.extract_strided_slice %40 {offsets = [0, 40], sizes = [8, 8], strides = [1, 1]} : vector<8x96xf32> to vector<8x8xf32>
    %52 = vector.extract_strided_slice %40 {offsets = [0, 48], sizes = [8, 8], strides = [1, 1]} : vector<8x96xf32> to vector<8x8xf32>
    %53 = vector.extract_strided_slice %40 {offsets = [0, 56], sizes = [8, 8], strides = [1, 1]} : vector<8x96xf32> to vector<8x8xf32>
    %54 = vector.shape_cast %50 : vector<8x8xf32> to vector<1x8x8xf32>
    %55 = vector.shape_cast %51 : vector<8x8xf32> to vector<1x8x8xf32>
    %56 = vector.shape_cast %52 : vector<8x8xf32> to vector<1x8x8xf32>
    %57 = vector.shape_cast %53 : vector<8x8xf32> to vector<1x8x8xf32>
    %58 = tpu.concatenate %54, %55, %56, %57 in 0 : vector<1x8x8xf32>, vector<1x8x8xf32>, vector<1x8x8xf32>, vector<1x8x8xf32> -> vector<4x8x8xf32>
    %59 = vector.extract_strided_slice %40 {offsets = [0, 64], sizes = [8, 8], strides = [1, 1]} : vector<8x96xf32> to vector<8x8xf32>
    %60 = vector.extract_strided_slice %40 {offsets = [0, 72], sizes = [8, 8], strides = [1, 1]} : vector<8x96xf32> to vector<8x8xf32>
    %61 = vector.extract_strided_slice %40 {offsets = [0, 80], sizes = [8, 8], strides = [1, 1]} : vector<8x96xf32> to vector<8x8xf32>
    %62 = vector.extract_strided_slice %40 {offsets = [0, 88], sizes = [8, 8], strides = [1, 1]} : vector<8x96xf32> to vector<8x8xf32>
    %63 = vector.shape_cast %59 : vector<8x8xf32> to vector<1x8x8xf32>
    %64 = vector.shape_cast %60 : vector<8x8xf32> to vector<1x8x8xf32>
    %65 = vector.shape_cast %61 : vector<8x8xf32> to vector<1x8x8xf32>
    %66 = vector.shape_cast %62 : vector<8x8xf32> to vector<1x8x8xf32>
    %67 = tpu.concatenate %63, %64, %65, %66 in 0 : vector<1x8x8xf32>, vector<1x8x8xf32>, vector<1x8x8xf32>, vector<1x8x8xf32> -> vector<4x8x8xf32>
    "tpu.trace_start"() <{level = 10 : i32, message = "htd,hsd->hts"}> : () -> ()
    %cst_18 = arith.constant dense<0.000000e+00> : vector<4x8x8xf32>
    %68 = tpu.matmul %49, %58, %cst_18 {dimension_numbers = #tpu.dot_dimension_numbers<[2], [2], [1], [1], [0, 0, 0, 1, 1, 1], [0], [0]>} : vector<4x8x8xf32>, vector<4x8x8xf32>, vector<4x8x8xf32> -> vector<4x8x8xf32>
    "tpu.trace_stop"() : () -> ()
    %cst_19 = arith.constant 0.353553385 : f32
    %69 = vector.broadcast %cst_19 : f32 to vector<4x8x8xf32>
    %70 = arith.mulf %68, %69 : vector<4x8x8xf32>
    %cst_20 = arith.constant 0xFF800000 : f32
    %71 = vector.shape_cast %4 : vector<8x8xi1> to vector<1x8x8xi1>
    %72 = vector.broadcast %71 : vector<1x8x8xi1> to vector<4x8x8xi1>
    %73 = vector.broadcast %cst_20 : f32 to vector<4x8x8xf32>
    %74 = arith.select %72, %70, %73 : vector<4x8x8xi1>, vector<4x8x8xf32>
    %cst_21 = arith.constant dense<0xFF800000> : vector<4x8xf32>
    %75 = vector.multi_reduction <maximumf>, %74, %cst_21 [2] : vector<4x8x8xf32> to vector<4x8xf32>
    %76 = vector.shape_cast %75 : vector<4x8xf32> to vector<4x8x1xf32>
    %77 = vector.broadcast %76 : vector<4x8x1xf32> to vector<4x8x8xf32>
    %78 = arith.subf %74, %77 : vector<4x8x8xf32>
    %79 = math.exp %78 : vector<4x8x8xf32>
    %cst_22 = arith.constant dense<0.000000e+00> : vector<4x8xf32>
    %80 = vector.multi_reduction <add>, %79, %cst_22 [2] : vector<4x8x8xf32> to vector<4x8xf32>
    %81 = vector.shape_cast %80 : vector<4x8xf32> to vector<4x8x1xf32>
    %82 = vector.broadcast %81 : vector<4x8x1xf32> to vector<4x8x8xf32>
    %83 = arith.divf %79, %82 : vector<4x8x8xf32>
    %c0_23 = arith.constant 0 : index
    %c0_24 = arith.constant 0 : index
    %c0_25 = arith.constant 0 : index
    %c0_26 = arith.constant 0 : index
    %84 = vector.load %arg17[%c0_23, %c0_24, %c0_25, %c0_26] : memref<1x8x8x8xf32, #tpu.memory_space<vmem>>, vector<1x4x8x8xf32>
    %85 = vector.shape_cast %84 : vector<1x4x8x8xf32> to vector<4x8x8xf32>
    %86 = vector.shape_cast %83 : vector<4x8x8xf32> to vector<1x4x8x8xf32>
    tpu.vector_store %arg17[%c0_23, %c0_24, %c0_25, %c0_26], %86 {strides = array<i32>} : memref<1x8x8x8xf32, #tpu.memory_space<vmem>>, vector<1x4x8x8xf32>,
    "tpu.trace_start"() <{level = 10 : i32, message = "hts,hsd->htd"}> : () -> ()
    %cst_27 = arith.constant dense<0.000000e+00> : vector<4x8x8xf32>
    %87 = tpu.matmul %83, %67, %cst_27 {dimension_numbers = #tpu.dot_dimension_numbers<[2], [1], [1], [2], [0, 0, 0, 1, 1, 2], [0], [0]>} : vector<4x8x8xf32>, vector<4x8x8xf32>, vector<4x8x8xf32> -> vector<4x8x8xf32>
    "tpu.trace_stop"() : () -> ()
    %88 = vector.extract_strided_slice %87 {offsets = [0, 0, 0], sizes = [1, 8, 8], strides = [1, 1, 1]} : vector<4x8x8xf32> to vector<1x8x8xf32>
    %89 = vector.shape_cast %88 : vector<1x8x8xf32> to vector<8x8xf32>
    %90 = vector.extract_strided_slice %87 {offsets = [1, 0, 0], sizes = [1, 8, 8], strides = [1, 1, 1]} : vector<4x8x8xf32> to vector<1x8x8xf32>
    %91 = vector.shape_cast %90 : vector<1x8x8xf32> to vector<8x8xf32>
    %92 = vector.extract_strided_slice %87 {offsets = [2, 0, 0], sizes = [1, 8, 8], strides = [1, 1, 1]} : vector<4x8x8xf32> to vector<1x8x8xf32>
    %93 = vector.shape_cast %92 : vector<1x8x8xf32> to vector<8x8xf32>
    %94 = vector.extract_strided_slice %87 {offsets = [3, 0, 0], sizes = [1, 8, 8], strides = [1, 1, 1]} : vector<4x8x8xf32> to vector<1x8x8xf32>
    %95 = vector.shape_cast %94 : vector<1x8x8xf32> to vector<8x8xf32>
    %96 = tpu.concatenate %89, %91, %93, %95 in 1 : vector<8x8xf32>, vector<8x8xf32>, vector<8x8xf32>, vector<8x8xf32> -> vector<8x32xf32>
    %c0_28 = arith.constant 0 : index
    %c0_29 = arith.constant 0 : index
    %c0_30 = arith.constant 0 : index
    %97 = vector.load %arg6[%c0_28, %c0_29, %c0_30] : memref<2x32x32xf32, #tpu.memory_space<vmem>>, vector<1x32x32xf32>
    %98 = vector.shape_cast %97 : vector<1x32x32xf32> to vector<32x32xf32>
    %cst_31 = arith.constant dense<0.000000e+00> : vector<8x32xf32>
    %99 = tpu.matmul %96, %98, %cst_31 {dimension_numbers = #tpu.dot_dimension_numbers<[1], [0], [0], [1], [0, 0, 1, 1], [], []>} : vector<8x32xf32>, vector<32x32xf32>, vector<8x32xf32> -> vector<8x32xf32>
    %c0_32 = arith.constant 0 : index
    %c0_33 = arith.constant 0 : index
    %c0_34 = arith.constant 0 : index
    %100 = vector.load %arg7[%c0_32, %c0_33, %c0_34] : memref<2x1x32xf32, #tpu.memory_space<vmem>>, vector<1x1x32xf32>
    %101 = vector.shape_cast %100 : vector<1x1x32xf32> to vector<1x32xf32>
    %102 = vector.broadcast %101 : vector<1x32xf32> to vector<8x32xf32>
    %103 = arith.addf %99, %102 : vector<8x32xf32>
    %c0_35 = arith.constant 0 : index
    %c0_36 = arith.constant 0 : index
    %c0_37 = arith.constant 0 : index
    %c0_38 = arith.constant 0 : index
    %104 = vector.load %arg16[%c0_35, %c0_36, %c0_37, %c0_38] : memref<1x2x8x32xf32, #tpu.memory_space<vmem>>, vector<1x1x8x32xf32>
    %105 = vector.shape_cast %104 : vector<1x1x8x32xf32> to vector<8x32xf32>
    %106 = vector.shape_cast %103 : vector<8x32xf32> to vector<1x1x8x32xf32>
    tpu.vector_store %arg16[%c0_35, %c0_36, %c0_37, %c0_38], %106 {strides = array<i32>} : memref<1x2x8x32xf32, #tpu.memory_space<vmem>>, vector<1x1x8x32xf32>,
    %107 = arith.addf %1, %103 : vector<8x32xf32>
    %108 = vector.extract_strided_slice %9 {offsets = [2, 0], sizes = [1, 32], strides = [1, 1]} : vector<4x32xf32> to vector<1x32xf32>
    %109 = vector.extract_strided_slice %9 {offsets = [3, 0], sizes = [1, 32], strides = [1, 1]} : vector<4x32xf32> to vector<1x32xf32>
    %cst_39 = arith.constant dense<0.000000e+00> : vector<8xf32>
    %110 = vector.multi_reduction <add>, %107, %cst_39 [1] : vector<8x32xf32> to vector<8xf32>
    %111 = vector.shape_cast %110 : vector<8xf32> to vector<8x1xf32>
    %cst_40 = arith.constant 3.200000e+01 : f32
    %112 = vector.broadcast %cst_40 : f32 to vector<8x1xf32>
    %113 = arith.divf %111, %112 : vector<8x1xf32>
    %114 = vector.broadcast %113 : vector<8x1xf32> to vector<8x32xf32>
    %115 = arith.subf %107, %114 : vector<8x32xf32>
    %116 = arith.mulf %115, %115 : vector<8x32xf32>
    %cst_41 = arith.constant dense<0.000000e+00> : vector<8xf32>
    %117 = vector.multi_reduction <add>, %116, %cst_41 [1] : vector<8x32xf32> to vector<8xf32>
    %118 = vector.shape_cast %117 : vector<8xf32> to vector<8x1xf32>
    %cst_42 = arith.constant 3.100000e+01 : f32
    %119 = vector.broadcast %cst_42 : f32 to vector<8x1xf32>
    %120 = arith.divf %118, %119 : vector<8x1xf32>
    %121 = math.sqrt %120 : vector<8x1xf32>
    %122 = vector.broadcast %113 : vector<8x1xf32> to vector<8x32xf32>
    %123 = arith.subf %107, %122 : vector<8x32xf32>
    %124 = vector.broadcast %108 : vector<1x32xf32> to vector<8x32xf32>
    %125 = arith.mulf %124, %123 : vector<8x32xf32>
    %cst_43 = arith.constant 9.99999974E-6 : f32
    %126 = vector.broadcast %cst_43 : f32 to vector<8x1xf32>
    %127 = arith.addf %121, %126 : vector<8x1xf32>
    %128 = vector.broadcast %127 : vector<8x1xf32> to vector<8x32xf32>
    %129 = arith.divf %125, %128 : vector<8x32xf32>
    %130 = vector.broadcast %109 : vector<1x32xf32> to vector<8x32xf32>
    %131 = arith.addf %129, %130 : vector<8x32xf32>
    %c0_44 = arith.constant 0 : index
    %c0_45 = arith.constant 0 : index
    %c0_46 = arith.constant 0 : index
    %132 = vector.load %arg8[%c0_44, %c0_45, %c0_46] : memref<2x32x128xf32, #tpu.memory_space<vmem>>, vector<1x32x128xf32>
    %133 = vector.shape_cast %132 : vector<1x32x128xf32> to vector<32x128xf32>
    %cst_47 = arith.constant dense<0.000000e+00> : vector<8x128xf32>
    %134 = tpu.matmul %131, %133, %cst_47 {dimension_numbers = #tpu.dot_dimension_numbers<[1], [0], [0], [1], [0, 0, 1, 1], [], []>} : vector<8x32xf32>, vector<32x128xf32>, vector<8x128xf32> -> vector<8x128xf32>
    %c0_48 = arith.constant 0 : index
    %c0_49 = arith.constant 0 : index
    %c0_50 = arith.constant 0 : index
    %135 = vector.load %arg9[%c0_48, %c0_49, %c0_50] : memref<2x1x128xf32, #tpu.memory_space<vmem>>, vector<1x1x128xf32>
    %136 = vector.shape_cast %135 : vector<1x1x128xf32> to vector<1x128xf32>
    %137 = vector.broadcast %136 : vector<1x128xf32> to vector<8x128xf32>
    %138 = arith.addf %134, %137 : vector<8x128xf32>
    %cst_51 = arith.constant 5.000000e-01 : f32
    %139 = vector.broadcast %cst_51 : f32 to vector<8x128xf32>
    %140 = arith.mulf %139, %138 : vector<8x128xf32>
    %141 = arith.mulf %138, %138 : vector<8x128xf32>
    %142 = arith.mulf %138, %141 : vector<8x128xf32>
    %cst_52 = arith.constant 4.471500e-02 : f32
    %143 = vector.broadcast %cst_52 : f32 to vector<8x128xf32>
    %144 = arith.mulf %143, %142 : vector<8x128xf32>
    %145 = arith.addf %138, %144 : vector<8x128xf32>
    %cst_53 = arith.constant 0.797884583 : f32
    %146 = vector.broadcast %cst_53 : f32 to vector<8x128xf32>
    %147 = arith.mulf %146, %145 : vector<8x128xf32>
    %148 = math.tanh %147 : vector<8x128xf32>
    %cst_54 = arith.constant 1.000000e+00 : f32
    %149 = vector.broadcast %cst_54 : f32 to vector<8x128xf32>
    %150 = arith.addf %149, %148 : vector<8x128xf32>
    %151 = arith.mulf %140, %150 : vector<8x128xf32>
    %c0_55 = arith.constant 0 : index
    %c0_56 = arith.constant 0 : index
    %c0_57 = arith.constant 0 : index
    %152 = vector.load %arg10[%c0_55, %c0_56, %c0_57] : memref<2x128x32xf32, #tpu.memory_space<vmem>>, vector<1x128x32xf32>
    %153 = vector.shape_cast %152 : vector<1x128x32xf32> to vector<128x32xf32>
    %cst_58 = arith.constant dense<0.000000e+00> : vector<8x32xf32>
    %154 = tpu.matmul %151, %153, %cst_58 {dimension_numbers = #tpu.dot_dimension_numbers<[1], [0], [0], [1], [0, 0, 1, 1], [], []>} : vector<8x128xf32>, vector<128x32xf32>, vector<8x32xf32> -> vector<8x32xf32>
    %c0_59 = arith.constant 0 : index
    %c0_60 = arith.constant 0 : index
    %c0_61 = arith.constant 0 : index
    %155 = vector.load %arg11[%c0_59, %c0_60, %c0_61] : memref<2x1x32xf32, #tpu.memory_space<vmem>>, vector<1x1x32xf32>
    %156 = vector.shape_cast %155 : vector<1x1x32xf32> to vector<1x32xf32>
    %157 = vector.broadcast %156 : vector<1x32xf32> to vector<8x32xf32>
    %158 = arith.addf %154, %157 : vector<8x32xf32>
    %159 = arith.addf %107, %158 : vector<8x32xf32>
    %cst_62 = arith.constant dense<0.000000e+00> : vector<8xf32>
    %160 = vector.multi_reduction <add>, %159, %cst_62 [1] : vector<8x32xf32> to vector<8xf32>
    %161 = vector.shape_cast %160 : vector<8xf32> to vector<8x1xf32>
    %cst_63 = arith.constant 3.200000e+01 : f32
    %162 = vector.broadcast %cst_63 : f32 to vector<8x1xf32>
    %163 = arith.divf %161, %162 : vector<8x1xf32>
    %164 = vector.broadcast %163 : vector<8x1xf32> to vector<8x32xf32>
    %165 = arith.subf %159, %164 : vector<8x32xf32>
    %166 = arith.mulf %165, %165 : vector<8x32xf32>
    %cst_64 = arith.constant dense<0.000000e+00> : vector<8xf32>
    %167 = vector.multi_reduction <add>, %166, %cst_64 [1] : vector<8x32xf32> to vector<8xf32>
    %168 = vector.shape_cast %167 : vector<8xf32> to vector<8x1xf32>
    %cst_65 = arith.constant 3.100000e+01 : f32
    %169 = vector.broadcast %cst_65 : f32 to vector<8x1xf32>
    %170 = arith.divf %168, %169 : vector<8x1xf32>
    %171 = math.sqrt %170 : vector<8x1xf32>
    %172 = vector.broadcast %163 : vector<8x1xf32> to vector<8x32xf32>
    %173 = arith.subf %159, %172 : vector<8x32xf32>
    %174 = vector.broadcast %6 : vector<1x32xf32> to vector<8x32xf32>
    %175 = arith.mulf %174, %173 : vector<8x32xf32>
    %cst_66 = arith.constant 9.99999974E-6 : f32
    %176 = vector.broadcast %cst_66 : f32 to vector<8x1xf32>
    %177 = arith.addf %171, %176 : vector<8x1xf32>
    %178 = vector.broadcast %177 : vector<8x1xf32> to vector<8x32xf32>
    %179 = arith.divf %175, %178 : vector<8x32xf32>
    %180 = vector.broadcast %7 : vector<1x32xf32> to vector<8x32xf32>
    %181 = arith.addf %179, %180 : vector<8x32xf32>
    %c0_67 = arith.constant 0 : index
    %c0_68 = arith.constant 0 : index
    %c0_69 = arith.constant 0 : index
    %c0_70 = arith.constant 0 : index
    %182 = vector.load %arg15[%c0_67, %c0_68, %c0_69, %c0_70] : memref<1x2x8x32xf32, #tpu.memory_space<vmem>>, vector<1x1x8x32xf32>
    %183 = vector.shape_cast %182 : vector<1x1x8x32xf32> to vector<8x32xf32>
    %184 = vector.shape_cast %181 : vector<8x32xf32> to vector<1x1x8x32xf32>
    tpu.vector_store %arg15[%c0_67, %c0_68, %c0_69, %c0_70], %184 {strides = array<i32>} : memref<1x2x8x32xf32, #tpu.memory_space<vmem>>, vector<1x1x8x32xf32>,
    %c1 = arith.constant 1 : index
    %c0_71 = arith.constant 0 : index
    %c0_72 = arith.constant 0 : index
    %185 = vector.load %arg2[%c1, %c0_71, %c0_72] : memref<2x4x32xf32, #tpu.memory_space<vmem>>, vector<1x4x32xf32>
    %186 = vector.shape_cast %185 : vector<1x4x32xf32> to vector<4x32xf32>
    %187 = vector.extract_strided_slice %186 {offsets = [0, 0], sizes = [1, 32], strides = [1, 1]} : vector<4x32xf32> to vector<1x32xf32>
    %188 = vector.extract_strided_slice %186 {offsets = [1, 0], sizes = [1, 32], strides = [1, 1]} : vector<4x32xf32> to vector<1x32xf32>
    %cst_73 = arith.constant dense<0.000000e+00> : vector<8xf32>
    %189 = vector.multi_reduction <add>, %159, %cst_73 [1] : vector<8x32xf32> to vector<8xf32>
    %190 = vector.shape_cast %189 : vector<8xf32> to vector<8x1xf32>
    %cst_74 = arith.constant 3.200000e+01 : f32
    %191 = vector.broadcast %cst_74 : f32 to vector<8x1xf32>
    %192 = arith.divf %190, %191 : vector<8x1xf32>
    %193 = vector.broadcast %192 : vector<8x1xf32> to vector<8x32xf32>
    %194 = arith.subf %159, %193 : vector<8x32xf32>
    %195 = arith.mulf %194, %194 : vector<8x32xf32>
    %cst_75 = arith.constant dense<0.000000e+00> : vector<8xf32>
    %196 = vector.multi_reduction <add>, %195, %cst_75 [1] : vector<8x32xf32> to vector<8xf32>
    %197 = vector.shape_cast %196 : vector<8xf32> to vector<8x1xf32>
    %cst_76 = arith.constant 3.100000e+01 : f32
    %198 = vector.broadcast %cst_76 : f32 to vector<8x1xf32>
    %199 = arith.divf %197, %198 : vector<8x1xf32>
    %200 = math.sqrt %199 : vector<8x1xf32>
    %201 = vector.broadcast %192 : vector<8x1xf32> to vector<8x32xf32>
    %202 = arith.subf %159, %201 : vector<8x32xf32>
    %203 = vector.broadcast %187 : vector<1x32xf32> to vector<8x32xf32>
    %204 = arith.mulf %203, %202 : vector<8x32xf32>
    %cst_77 = arith.constant 9.99999974E-6 : f32
    %205 = vector.broadcast %cst_77 : f32 to vector<8x1xf32>
    %206 = arith.addf %200, %205 : vector<8x1xf32>
    %207 = vector.broadcast %206 : vector<8x1xf32> to vector<8x32xf32>
    %208 = arith.divf %204, %207 : vector<8x32xf32>
    %209 = vector.broadcast %188 : vector<1x32xf32> to vector<8x32xf32>
    %210 = arith.addf %208, %209 : vector<8x32xf32>
    %c1_78 = arith.constant 1 : index
    %c0_79 = arith.constant 0 : index
    %c0_80 = arith.constant 0 : index
    %211 = vector.load %arg4[%c1_78, %c0_79, %c0_80] : memref<2x32x96xf32, #tpu.memory_space<vmem>>, vector<1x32x96xf32>
    %212 = vector.shape_cast %211 : vector<1x32x96xf32> to vector<32x96xf32>
    %cst_81 = arith.constant dense<0.000000e+00> : vector<8x96xf32>
    %213 = tpu.matmul %210, %212, %cst_81 {dimension_numbers = #tpu.dot_dimension_numbers<[1], [0], [0], [1], [0, 0, 1, 1], [], []>} : vector<8x32xf32>, vector<32x96xf32>, vector<8x96xf32> -> vector<8x96xf32>
    %c1_82 = arith.constant 1 : index
    %c0_83 = arith.constant 0 : index
    %c0_84 = arith.constant 0 : index
    %214 = vector.load %arg5[%c1_82, %c0_83, %c0_84] : memref<2x1x96xf32, #tpu.memory_space<vmem>>, vector<1x1x96xf32>
    %215 = vector.shape_cast %214 : vector<1x1x96xf32> to vector<1x96xf32>
    %216 = vector.broadcast %215 : vector<1x96xf32> to vector<8x96xf32>
    %217 = arith.addf %213, %216 : vector<8x96xf32>
    %218 = vector.extract_strided_slice %217 {offsets = [0, 0], sizes = [8, 8], strides = [1, 1]} : vector<8x96xf32> to vector<8x8xf32>
    %219 = vector.extract_strided_slice %217 {offsets = [0, 8], sizes = [8, 8], strides = [1, 1]} : vector<8x96xf32> to vector<8x8xf32>
    %220 = vector.extract_strided_slice %217 {offsets = [0, 16], sizes = [8, 8], strides = [1, 1]} : vector<8x96xf32> to vector<8x8xf32>
    %221 = vector.extract_strided_slice %217 {offsets = [0, 24], sizes = [8, 8], strides = [1, 1]} : vector<8x96xf32> to vector<8x8xf32>
    %222 = vector.shape_cast %218 : vector<8x8xf32> to vector<1x8x8xf32>
    %223 = vector.shape_cast %219 : vector<8x8xf32> to vector<1x8x8xf32>
    %224 = vector.shape_cast %220 : vector<8x8xf32> to vector<1x8x8xf32>
    %225 = vector.shape_cast %221 : vector<8x8xf32> to vector<1x8x8xf32>
    %226 = tpu.concatenate %222, %223, %224, %225 in 0 : vector<1x8x8xf32>, vector<1x8x8xf32>, vector<1x8x8xf32>, vector<1x8x8xf32> -> vector<4x8x8xf32>
    %227 = vector.extract_strided_slice %217 {offsets = [0, 32], sizes = [8, 8], strides = [1, 1]} : vector<8x96xf32> to vector<8x8xf32>
    %228 = vector.extract_strided_slice %217 {offsets = [0, 40], sizes = [8, 8], strides = [1, 1]} : vector<8x96xf32> to vector<8x8xf32>
    %229 = vector.extract_strided_slice %217 {offsets = [0, 48], sizes = [8, 8], strides = [1, 1]} : vector<8x96xf32> to vector<8x8xf32>
    %230 = vector.extract_strided_slice %217 {offsets = [0, 56], sizes = [8, 8], strides = [1, 1]} : vector<8x96xf32> to vector<8x8xf32>
    %231 = vector.shape_cast %227 : vector<8x8xf32> to vector<1x8x8xf32>
    %232 = vector.shape_cast %228 : vector<8x8xf32> to vector<1x8x8xf32>
    %233 = vector.shape_cast %229 : vector<8x8xf32> to vector<1x8x8xf32>
    %234 = vector.shape_cast %230 : vector<8x8xf32> to vector<1x8x8xf32>
    %235 = tpu.concatenate %231, %232, %233, %234 in 0 : vector<1x8x8xf32>, vector<1x8x8xf32>, vector<1x8x8xf32>, vector<1x8x8xf32> -> vector<4x8x8xf32>
    %236 = vector.extract_strided_slice %217 {offsets = [0, 64], sizes = [8, 8], strides = [1, 1]} : vector<8x96xf32> to vector<8x8xf32>
    %237 = vector.extract_strided_slice %217 {offsets = [0, 72], sizes = [8, 8], strides = [1, 1]} : vector<8x96xf32> to vector<8x8xf32>
    %238 = vector.extract_strided_slice %217 {offsets = [0, 80], sizes = [8, 8], strides = [1, 1]} : vector<8x96xf32> to vector<8x8xf32>
    %239 = vector.extract_strided_slice %217 {offsets = [0, 88], sizes = [8, 8], strides = [1, 1]} : vector<8x96xf32> to vector<8x8xf32>
    %240 = vector.shape_cast %236 : vector<8x8xf32> to vector<1x8x8xf32>
    %241 = vector.shape_cast %237 : vector<8x8xf32> to vector<1x8x8xf32>
    %242 = vector.shape_cast %238 : vector<8x8xf32> to vector<1x8x8xf32>
    %243 = vector.shape_cast %239 : vector<8x8xf32> to vector<1x8x8xf32>
    %244 = tpu.concatenate %240, %241, %242, %243 in 0 : vector<1x8x8xf32>, vector<1x8x8xf32>, vector<1x8x8xf32>, vector<1x8x8xf32> -> vector<4x8x8xf32>
    "tpu.trace_start"() <{level = 10 : i32, message = "htd,hsd->hts"}> : () -> ()
    %cst_85 = arith.constant dense<0.000000e+00> : vector<4x8x8xf32>
    %245 = tpu.matmul %226, %235, %cst_85 {dimension_numbers = #tpu.dot_dimension_numbers<[2], [2], [1], [1], [0, 0, 0, 1, 1, 1], [0], [0]>} : vector<4x8x8xf32>, vector<4x8x8xf32>, vector<4x8x8xf32> -> vector<4x8x8xf32>
    "tpu.trace_stop"() : () -> ()
    %cst_86 = arith.constant 0.353553385 : f32
    %246 = vector.broadcast %cst_86 : f32 to vector<4x8x8xf32>
    %247 = arith.mulf %245, %246 : vector<4x8x8xf32>
    %cst_87 = arith.constant 0xFF800000 : f32
    %248 = vector.shape_cast %4 : vector<8x8xi1> to vector<1x8x8xi1>
    %249 = vector.broadcast %248 : vector<1x8x8xi1> to vector<4x8x8xi1>
    %250 = vector.broadcast %cst_87 : f32 to vector<4x8x8xf32>
    %251 = arith.select %249, %247, %250 : vector<4x8x8xi1>, vector<4x8x8xf32>
    %cst_88 = arith.constant dense<0xFF800000> : vector<4x8xf32>
    %252 = vector.multi_reduction <maximumf>, %251, %cst_88 [2] : vector<4x8x8xf32> to vector<4x8xf32>
    %253 = vector.shape_cast %252 : vector<4x8xf32> to vector<4x8x1xf32>
    %254 = vector.broadcast %253 : vector<4x8x1xf32> to vector<4x8x8xf32>
    %255 = arith.subf %251, %254 : vector<4x8x8xf32>
    %256 = math.exp %255 : vector<4x8x8xf32>
    %cst_89 = arith.constant dense<0.000000e+00> : vector<4x8xf32>
    %257 = vector.multi_reduction <add>, %256, %cst_89 [2] : vector<4x8x8xf32> to vector<4x8xf32>
    %258 = vector.shape_cast %257 : vector<4x8xf32> to vector<4x8x1xf32>
    %259 = vector.broadcast %258 : vector<4x8x1xf32> to vector<4x8x8xf32>
    %260 = arith.divf %256, %259 : vector<4x8x8xf32>
    %c0_90 = arith.constant 0 : index
    %c4 = arith.constant 4 : index
    %c0_91 = arith.constant 0 : index
    %c0_92 = arith.constant 0 : index
    %261 = vector.load %arg17[%c0_90, %c4, %c0_91, %c0_92] : memref<1x8x8x8xf32, #tpu.memory_space<vmem>>, vector<1x4x8x8xf32>
    %262 = vector.shape_cast %261 : vector<1x4x8x8xf32> to vector<4x8x8xf32>
    %263 = vector.shape_cast %260 : vector<4x8x8xf32> to vector<1x4x8x8xf32>
    tpu.vector_store %arg17[%c0_90, %c4, %c0_91, %c0_92], %263 {strides = array<i32>} : memref<1x8x8x8xf32, #tpu.memory_space<vmem>>, vector<1x4x8x8xf32>,
    "tpu.trace_start"() <{level = 10 : i32, message = "hts,hsd->htd"}> : () -> ()
    %cst_93 = arith.constant dense<0.000000e+00> : vector<4x8x8xf32>
    %264 = tpu.matmul %260, %244, %cst_93 {dimension_numbers = #tpu.dot_dimension_numbers<[2], [1], [1], [2], [0, 0, 0, 1, 1, 2], [0], [0]>} : vector<4x8x8xf32>, vector<4x8x8xf32>, vector<4x8x8xf32> -> vector<4x8x8xf32>
    "tpu.trace_stop"() : () -> ()
    %265 = vector.extract_strided_slice %264 {offsets = [0, 0, 0], sizes = [1, 8, 8], strides = [1, 1, 1]} : vector<4x8x8xf32> to vector<1x8x8xf32>
    %266 = vector.shape_cast %265 : vector<1x8x8xf32> to vector<8x8xf32>
    %267 = vector.extract_strided_slice %264 {offsets = [1, 0, 0], sizes = [1, 8, 8], strides = [1, 1, 1]} : vector<4x8x8xf32> to vector<1x8x8xf32>
    %268 = vector.shape_cast %267 : vector<1x8x8xf32> to vector<8x8xf32>
    %269 = vector.extract_strided_slice %264 {offsets = [2, 0, 0], sizes = [1, 8, 8], strides = [1, 1, 1]} : vector<4x8x8xf32> to vector<1x8x8xf32>
    %270 = vector.shape_cast %269 : vector<1x8x8xf32> to vector<8x8xf32>
    %271 = vector.extract_strided_slice %264 {offsets = [3, 0, 0], sizes = [1, 8, 8], strides = [1, 1, 1]} : vector<4x8x8xf32> to vector<1x8x8xf32>
    %272 = vector.shape_cast %271 : vector<1x8x8xf32> to vector<8x8xf32>
    %273 = tpu.concatenate %266, %268, %270, %272 in 1 : vector<8x8xf32>, vector<8x8xf32>, vector<8x8xf32>, vector<8x8xf32> -> vector<8x32xf32>
    %c1_94 = arith.constant 1 : index
    %c0_95 = arith.constant 0 : index
    %c0_96 = arith.constant 0 : index
    %274 = vector.load %arg6[%c1_94, %c0_95, %c0_96] : memref<2x32x32xf32, #tpu.memory_space<vmem>>, vector<1x32x32xf32>
    %275 = vector.shape_cast %274 : vector<1x32x32xf32> to vector<32x32xf32>
    %cst_97 = arith.constant dense<0.000000e+00> : vector<8x32xf32>
    %276 = tpu.matmul %273, %275, %cst_97 {dimension_numbers = #tpu.dot_dimension_numbers<[1], [0], [0], [1], [0, 0, 1, 1], [], []>} : vector<8x32xf32>, vector<32x32xf32>, vector<8x32xf32> -> vector<8x32xf32>
    %c1_98 = arith.constant 1 : index
    %c0_99 = arith.constant 0 : index
    %c0_100 = arith.constant 0 : index
    %277 = vector.load %arg7[%c1_98, %c0_99, %c0_100] : memref<2x1x32xf32, #tpu.memory_space<vmem>>, vector<1x1x32xf32>
    %278 = vector.shape_cast %277 : vector<1x1x32xf32> to vector<1x32xf32>
    %279 = vector.broadcast %278 : vector<1x32xf32> to vector<8x32xf32>
    %280 = arith.addf %276, %279 : vector<8x32xf32>
    %c0_101 = arith.constant 0 : index
    %c1_102 = arith.constant 1 : index
    %c0_103 = arith.constant 0 : index
    %c0_104 = arith.constant 0 : index
    %281 = vector.load %arg16[%c0_101, %c1_102, %c0_103, %c0_104] : memref<1x2x8x32xf32, #tpu.memory_space<vmem>>, vector<1x1x8x32xf32>
    %282 = vector.shape_cast %281 : vector<1x1x8x32xf32> to vector<8x32xf32>
    %283 = vector.shape_cast %280 : vector<8x32xf32> to vector<1x1x8x32xf32>
    tpu.vector_store %arg16[%c0_101, %c1_102, %c0_103, %c0_104], %283 {strides = array<i32>} : memref<1x2x8x32xf32, #tpu.memory_space<vmem>>, vector<1x1x8x32xf32>,
    %284 = arith.addf %159, %280 : vector<8x32xf32>
    %285 = vector.extract_strided_slice %186 {offsets = [2, 0], sizes = [1, 32], strides = [1, 1]} : vector<4x32xf32> to vector<1x32xf32>
    %286 = vector.extract_strided_slice %186 {offsets = [3, 0], sizes = [1, 32], strides = [1, 1]} : vector<4x32xf32> to vector<1x32xf32>
    %cst_105 = arith.constant dense<0.000000e+00> : vector<8xf32>
    %287 = vector.multi_reduction <add>, %284, %cst_105 [1] : vector<8x32xf32> to vector<8xf32>
    %288 = vector.shape_cast %287 : vector<8xf32> to vector<8x1xf32>
    %cst_106 = arith.constant 3.200000e+01 : f32
    %289 = vector.broadcast %cst_106 : f32 to vector<8x1xf32>
    %290 = arith.divf %288, %289 : vector<8x1xf32>
    %291 = vector.broadcast %290 : vector<8x1xf32> to vector<8x32xf32>
    %292 = arith.subf %284, %291 : vector<8x32xf32>
    %293 = arith.mulf %292, %292 : vector<8x32xf32>
    %cst_107 = arith.constant dense<0.000000e+00> : vector<8xf32>
    %294 = vector.multi_reduction <add>, %293, %cst_107 [1] : vector<8x32xf32> to vector<8xf32>
    %295 = vector.shape_cast %294 : vector<8xf32> to vector<8x1xf32>
    %cst_108 = arith.constant 3.100000e+01 : f32
    %296 = vector.broadcast %cst_108 : f32 to vector<8x1xf32>
    %297 = arith.divf %295, %296 : vector<8x1xf32>
    %298 = math.sqrt %297 : vector<8x1xf32>
    %299 = vector.broadcast %290 : vector<8x1xf32> to vector<8x32xf32>
    %300 = arith.subf %284, %299 : vector<8x32xf32>
    %301 = vector.broadcast %285 : vector<1x32xf32> to vector<8x32xf32>
    %302 = arith.mulf %301, %300 : vector<8x32xf32>
    %cst_109 = arith.constant 9.99999974E-6 : f32
    %303 = vector.broadcast %cst_109 : f32 to vector<8x1xf32>
    %304 = arith.addf %298, %303 : vector<8x1xf32>
    %305 = vector.broadcast %304 : vector<8x1xf32> to vector<8x32xf32>
    %306 = arith.divf %302, %305 : vector<8x32xf32>
    %307 = vector.broadcast %286 : vector<1x32xf32> to vector<8x32xf32>
    %308 = arith.addf %306, %307 : vector<8x32xf32>
    %c1_110 = arith.constant 1 : index
    %c0_111 = arith.constant 0 : index
    %c0_112 = arith.constant 0 : index
    %309 = vector.load %arg8[%c1_110, %c0_111, %c0_112] : memref<2x32x128xf32, #tpu.memory_space<vmem>>, vector<1x32x128xf32>
    %310 = vector.shape_cast %309 : vector<1x32x128xf32> to vector<32x128xf32>
    %cst_113 = arith.constant dense<0.000000e+00> : vector<8x128xf32>
    %311 = tpu.matmul %308, %310, %cst_113 {dimension_numbers = #tpu.dot_dimension_numbers<[1], [0], [0], [1], [0, 0, 1, 1], [], []>} : vector<8x32xf32>, vector<32x128xf32>, vector<8x128xf32> -> vector<8x128xf32>
    %c1_114 = arith.constant 1 : index
    %c0_115 = arith.constant 0 : index
    %c0_116 = arith.constant 0 : index
    %312 = vector.load %arg9[%c1_114, %c0_115, %c0_116] : memref<2x1x128xf32, #tpu.memory_space<vmem>>, vector<1x1x128xf32>
    %313 = vector.shape_cast %312 : vector<1x1x128xf32> to vector<1x128xf32>
    %314 = vector.broadcast %313 : vector<1x128xf32> to vector<8x128xf32>
    %315 = arith.addf %311, %314 : vector<8x128xf32>
    %cst_117 = arith.constant 5.000000e-01 : f32
    %316 = vector.broadcast %cst_117 : f32 to vector<8x128xf32>
    %317 = arith.mulf %316, %315 : vector<8x128xf32>
    %318 = arith.mulf %315, %315 : vector<8x128xf32>
    %319 = arith.mulf %315, %318 : vector<8x128xf32>
    %cst_118 = arith.constant 4.471500e-02 : f32
    %320 = vector.broadcast %cst_118 : f32 to vector<8x128xf32>
    %321 = arith.mulf %320, %319 : vector<8x128xf32>
    %322 = arith.addf %315, %321 : vector<8x128xf32>
    %cst_119 = arith.constant 0.797884583 : f32
    %323 = vector.broadcast %cst_119 : f32 to vector<8x128xf32>
    %324 = arith.mulf %323, %322 : vector<8x128xf32>
    %325 = math.tanh %324 : vector<8x128xf32>
    %cst_120 = arith.constant 1.000000e+00 : f32
    %326 = vector.broadcast %cst_120 : f32 to vector<8x128xf32>
    %327 = arith.addf %326, %325 : vector<8x128xf32>
    %328 = arith.mulf %317, %327 : vector<8x128xf32>
    %c1_121 = arith.constant 1 : index
    %c0_122 = arith.constant 0 : index
    %c0_123 = arith.constant 0 : index
    %329 = vector.load %arg10[%c1_121, %c0_122, %c0_123] : memref<2x128x32xf32, #tpu.memory_space<vmem>>, vector<1x128x32xf32>
    %330 = vector.shape_cast %329 : vector<1x128x32xf32> to vector<128x32xf32>
    %cst_124 = arith.constant dense<0.000000e+00> : vector<8x32xf32>
    %331 = tpu.matmul %328, %330, %cst_124 {dimension_numbers = #tpu.dot_dimension_numbers<[1], [0], [0], [1], [0, 0, 1, 1], [], []>} : vector<8x128xf32>, vector<128x32xf32>, vector<8x32xf32> -> vector<8x32xf32>
    %c1_125 = arith.constant 1 : index
    %c0_126 = arith.constant 0 : index
    %c0_127 = arith.constant 0 : index
    %332 = vector.load %arg11[%c1_125, %c0_126, %c0_127] : memref<2x1x32xf32, #tpu.memory_space<vmem>>, vector<1x1x32xf32>
    %333 = vector.shape_cast %332 : vector<1x1x32xf32> to vector<1x32xf32>
    %334 = vector.broadcast %333 : vector<1x32xf32> to vector<8x32xf32>
    %335 = arith.addf %331, %334 : vector<8x32xf32>
    %336 = arith.addf %284, %335 : vector<8x32xf32>
    %cst_128 = arith.constant dense<0.000000e+00> : vector<8xf32>
    %337 = vector.multi_reduction <add>, %336, %cst_128 [1] : vector<8x32xf32> to vector<8xf32>
    %338 = vector.shape_cast %337 : vector<8xf32> to vector<8x1xf32>
    %cst_129 = arith.constant 3.200000e+01 : f32
    %339 = vector.broadcast %cst_129 : f32 to vector<8x1xf32>
    %340 = arith.divf %338, %339 : vector<8x1xf32>
    %341 = vector.broadcast %340 : vector<8x1xf32> to vector<8x32xf32>
    %342 = arith.subf %336, %341 : vector<8x32xf32>
    %343 = arith.mulf %342, %342 : vector<8x32xf32>
    %cst_130 = arith.constant dense<0.000000e+00> : vector<8xf32>
    %344 = vector.multi_reduction <add>, %343, %cst_130 [1] : vector<8x32xf32> to vector<8xf32>
    %345 = vector.shape_cast %344 : vector<8xf32> to vector<8x1xf32>
    %cst_131 = arith.constant 3.100000e+01 : f32
    %346 = vector.broadcast %cst_131 : f32 to vector<8x1xf32>
    %347 = arith.divf %345, %346 : vector<8x1xf32>
    %348 = math.sqrt %347 : vector<8x1xf32>
    %349 = vector.broadcast %340 : vector<8x1xf32> to vector<8x32xf32>
    %350 = arith.subf %336, %349 : vector<8x32xf32>
    %351 = vector.broadcast %6 : vector<1x32xf32> to vector<8x32xf32>
    %352 = arith.mulf %351, %350 : vector<8x32xf32>
    %cst_132 = arith.constant 9.99999974E-6 : f32
    %353 = vector.broadcast %cst_132 : f32 to vector<8x1xf32>
    %354 = arith.addf %348, %353 : vector<8x1xf32>
    %355 = vector.broadcast %354 : vector<8x1xf32> to vector<8x32xf32>
    %356 = arith.divf %352, %355 : vector<8x32xf32>
    %357 = vector.broadcast %7 : vector<1x32xf32> to vector<8x32xf32>
    %358 = arith.addf %356, %357 : vector<8x32xf32>
    %c0_133 = arith.constant 0 : index
    %c1_134 = arith.constant 1 : index
    %c0_135 = arith.constant 0 : index
    %c0_136 = arith.constant 0 : index
    %359 = vector.load %arg15[%c0_133, %c1_134, %c0_135, %c0_136] : memref<1x2x8x32xf32, #tpu.memory_space<vmem>>, vector<1x1x8x32xf32>
    %360 = vector.shape_cast %359 : vector<1x1x8x32xf32> to vector<8x32xf32>
    %361 = vector.shape_cast %358 : vector<8x32xf32> to vector<1x1x8x32xf32>
    tpu.vector_store %arg15[%c0_133, %c1_134, %c0_135, %c0_136], %361 {strides = array<i32>} : memref<1x2x8x32xf32, #tpu.memory_space<vmem>>, vector<1x1x8x32xf32>,
    %c0_137 = arith.constant 0 : index
    %c0_138 = arith.constant 0 : index
    %c0_139 = arith.constant 0 : index
    %362 = vector.load %arg13[%c0_137, %c0_138, %c0_139] : memref<1x8x32xf32, #tpu.memory_space<vmem>>, vector<1x8x32xf32>
    %363 = vector.shape_cast %362 : vector<1x8x32xf32> to vector<8x32xf32>
    %364 = vector.shape_cast %358 : vector<8x32xf32> to vector<1x8x32xf32>
    tpu.vector_store %arg13[%c0_137, %c0_138, %c0_139], %364 {strides = array<i32>} : memref<1x8x32xf32, #tpu.memory_space<vmem>>, vector<1x8x32xf32>,
    %365 = vector.extract_strided_slice %358 {offsets = [7, 0], sizes = [1, 32], strides = [1, 1]} : vector<8x32xf32> to vector<1x32xf32>
    %c0_140 = arith.constant 0 : index
    %c0_141 = arith.constant 0 : index
    %366 = vector.load %arg12[%c0_140, %c0_141] : memref<32x64xf32, #tpu.memory_space<vmem>>, vector<32x64xf32>
    %cst_142 = arith.constant dense<0.000000e+00> : vector<1x64xf32>
    %367 = tpu.matmul %365, %366, %cst_142 {dimension_numbers = #tpu.dot_dimension_numbers<[1], [0], [0], [1], [0, 0, 1, 1], [], []>} : vector<1x32xf32>, vector<32x64xf32>, vector<1x64xf32> -> vector<1x64xf32>
    %c0_143 = arith.constant 0 : index
    %c0_144 = arith.constant 0 : index
    %c0_145 = arith.constant 0 : index
    %368 = vector.load %arg14[%c0_143, %c0_144, %c0_145] : memref<1x1x64xf32, #tpu.memory_space<vmem>>, vector<1x1x64xf32>
    %369 = vector.shape_cast %368 : vector<1x1x64xf32> to vector<1x64xf32>
    %370 = vector.shape_cast %367 : vector<1x64xf32> to vector<1x1x64xf32>
    tpu.vector_store %arg14[%c0_143, %c0_144, %c0_145], %370 {strides = array<i32>} : memref<1x1x64xf32, #tpu.memory_space<vmem>>, vector<1x1x64xf32>,
    return
  }
  func.func @transform_0(%arg0: i32) -> (i32, i32, i32) {
    %c0_i32 = arith.constant 0 : i32
    %c0_i32_0 = arith.constant 0 : i32
    %c0_i32_1 = arith.constant 0 : i32
    return %arg0, %c0_i32, %c0_i32_0 : i32, i32, i32
  }
  func.func @transform_1(%arg0: i32) -> (i32, i32, i32) {
    %c0_i32 = arith.constant 0 : i32
    %c0_i32_0 = arith.constant 0 : i32
    %c0_i32_1 = arith.constant 0 : i32
    %c0_i32_2 = arith.constant 0 : i32
    return %c0_i32, %c0_i32_0, %c0_i32_1 : i32, i32, i32
  }
  func.func @transform_2(%arg0: i32) -> (i32, i32) {
    %c0_i32 = arith.constant 0 : i32
    %c0_i32_0 = arith.constant 0 : i32
    %c0_i32_1 = arith.constant 0 : i32
    return %c0_i32, %c0_i32_0 : i32, i32
  }
  func.func @transform_3(%arg0: i32) -> (i32, i32, i32) {
    %c0_i32 = arith.constant 0 : i32
    %c0_i32_0 = arith.constant 0 : i32
    %c0_i32_1 = arith.constant 0 : i32
    %c0_i32_2 = arith.constant 0 : i32
    return %c0_i32, %c0_i32_0, %c0_i32_1 : i32, i32, i32
  }
  func.func @transform_4(%arg0: i32) -> (i32, i32, i32) {
    %c0_i32 = arith.constant 0 : i32
    %c0_i32_0 = arith.constant 0 : i32
    %c0_i32_1 = arith.constant 0 : i32
    %c0_i32_2 = arith.constant 0 : i32
    return %c0_i32, %c0_i32_0, %c0_i32_1 : i32, i32, i32
  }
  func.func @transform_5(%arg0: i32) -> (i32, i32, i32) {
    %c0_i32 = arith.constant 0 : i32
    %c0_i32_0 = arith.constant 0 : i32
    %c0_i32_1 = arith.constant 0 : i32
    %c0_i32_2 = arith.constant 0 : i32
    return %c0_i32, %c0_i32_0, %c0_i32_1 : i32, i32, i32
  }
  func.func @transform_6(%arg0: i32) -> (i32, i32, i32) {
    %c0_i32 = arith.constant 0 : i32
    %c0_i32_0 = arith.constant 0 : i32
    %c0_i32_1 = arith.constant 0 : i32
    %c0_i32_2 = arith.constant 0 : i32
    return %c0_i32, %c0_i32_0, %c0_i32_1 : i32, i32, i32
  }
  func.func @transform_7(%arg0: i32) -> (i32, i32, i32) {
    %c0_i32 = arith.constant 0 : i32
    %c0_i32_0 = arith.constant 0 : i32
    %c0_i32_1 = arith.constant 0 : i32
    %c0_i32_2 = arith.constant 0 : i32
    return %c0_i32, %c0_i32_0, %c0_i32_1 : i32, i32, i32
  }
  func.func @transform_8(%arg0: i32) -> (i32, i32, i32) {
    %c0_i32 = arith.constant 0 : i32
    %c0_i32_0 = arith.constant 0 : i32
    %c0_i32_1 = arith.constant 0 : i32
    %c0_i32_2 = arith.constant 0 : i32
    return %c0_i32, %c0_i32_0, %c0_i32_1 : i32, i32, i32
  }
  func.func @transform_9(%arg0: i32) -> (i32, i32, i32) {
    %c0_i32 = arith.constant 0 : i32
    %c0_i32_0 = arith.constant 0 : i32
    %c0_i32_1 = arith.constant 0 : i32
    %c0_i32_2 = arith.constant 0 : i32
    return %c0_i32, %c0_i32_0, %c0_i32_1 : i32, i32, i32
  }
  func.func @transform_10(%arg0: i32) -> (i32, i32, i32) {
    %c0_i32 = arith.constant 0 : i32
    %c0_i32_0 = arith.constant 0 : i32
    %c0_i32_1 = arith.constant 0 : i32
    %c0_i32_2 = arith.constant 0 : i32
    return %c0_i32, %c0_i32_0, %c0_i32_1 : i32, i32, i32
  }
  func.func @transform_11(%arg0: i32) -> (i32, i32) {
    %c0_i32 = arith.constant 0 : i32
    %c0_i32_0 = arith.constant 0 : i32
    %c0_i32_1 = arith.constant 0 : i32
    return %c0_i32, %c0_i32_0 : i32, i32
  }
  func.func @transform_12(%arg0: i32) -> (i32, i32, i32) {
    %c0_i32 = arith.constant 0 : i32
    %c0_i32_0 = arith.constant 0 : i32
    %c0_i32_1 = arith.constant 0 : i32
    return %arg0, %c0_i32, %c0_i32_0 : i32, i32, i32
  }
  func.func @transform_13(%arg0: i32) -> (i32, i32, i32) {
    %c0_i32 = arith.constant 0 : i32
    %c0_i32_0 = arith.constant 0 : i32
    %c0_i32_1 = arith.constant 0 : i32
    return %arg0, %c0_i32, %c0_i32_0 : i32, i32, i32
  }
  func.func @transform_14(%arg0: i32) -> (i32, i32, i32, i32) {
    %c0_i32 = arith.constant 0 : i32
    %c0_i32_0 = arith.constant 0 : i32
    %c0_i32_1 = arith.constant 0 : i32
    %c0_i32_2 = arith.constant 0 : i32
    return %arg0, %c0_i32, %c0_i32_0, %c0_i32_1 : i32, i32, i32, i32
  }
  func.func @transform_15(%arg0: i32) -> (i32, i32, i32, i32) {
    %c0_i32 = arith.constant 0 : i32
    %c0_i32_0 = arith.constant 0 : i32
    %c0_i32_1 = arith.constant 0 : i32
    %c0_i32_2 = arith.constant 0 : i32
    return %arg0, %c0_i32, %c0_i32_0, %c0_i32_1 : i32, i32, i32, i32
  }
  func.func @transform_16(%arg0: i32) -> (i32, i32, i32, i32) {
    %c0_i32 = arith.constant 0 : i32
    %c0_i32_0 = arith.constant 0 : i32
    %c0_i32_1 = arith.constant 0 : i32
    %c0_i32_2 = arith.constant 0 : i32
    return %arg0, %c0_i32, %c0_i32_0, %c0_i32_1 : i32, i32, i32, i32
  }
}

</mosaic_0001>

<llo_original>
// kernel: tpu_custom_call.1
$region0: #{tpu_custom_call.1}
  #allocation0 [shape = 'u32[]', space=smem, size = 0x4, offset = 0x4, fixed_abs, tag = 'smem constant byte address 0x4 - core index']
  #allocation1 [shape = 'u32[144,128]{1,0:T(1,128)}', space=vmem, size = 0x12000, scoped, tag = 'internal scratch']
  %s0 = inlined_call_operand.vmem [shape: f32[2,8,32], index: 0, kind: input, shape index: {}]
  %s1 = inlined_call_operand.vmem [shape: f32[2,4,32], index: 1, kind: input, shape index: {}]
  %s2 = inlined_call_operand.vmem [shape: f32[2,32], index: 2, kind: input, shape index: {}]
  %s3 = inlined_call_operand.vmem [shape: f32[2,32,96], index: 3, kind: input, shape index: {}]
  %s4 = inlined_call_operand.vmem [shape: f32[2,1,96], index: 4, kind: input, shape index: {}]
  %s5 = inlined_call_operand.vmem [shape: f32[2,32,32], index: 5, kind: input, shape index: {}]
  %s6 = inlined_call_operand.vmem [shape: f32[2,1,32], index: 6, kind: input, shape index: {}]
  %s7 = inlined_call_operand.vmem [shape: f32[2,32,128], index: 7, kind: input, shape index: {}]
  %s8 = inlined_call_operand.vmem [shape: f32[2,1,128], index: 8, kind: input, shape index: {}]
  %s9 = inlined_call_operand.vmem [shape: f32[2,128,32], index: 9, kind: input, shape index: {}]
  %s10 = inlined_call_operand.vmem [shape: f32[2,1,32], index: 10, kind: input, shape index: {}]
  %s11 = inlined_call_operand.vmem [shape: f32[32,64], index: 11, kind: input, shape index: {}]
  %s12 = inlined_call_operand.hbm [shape: f32[2,8,32], index: 12, kind: output, shape index: {0}]
  %s13 = inlined_call_operand.hbm [shape: f32[2,1,64], index: 13, kind: output, shape index: {1}]
  %s14 = inlined_call_operand.hbm [shape: f32[2,2,8,32], index: 14, kind: output, shape index: {2}]
  %s15 = inlined_call_operand.hbm [shape: f32[2,2,8,32], index: 15, kind: output, shape index: {3}]
  %s16 = inlined_call_operand.hbm [shape: f32[2,8,8,8], index: 16, kind: output, shape index: {4}]
  %17 = xla_tuple %s12, %s13, %s14, %s15, %s16
  %s18 = sld [smem:[#allocation0]]
  $region113: #{tpu_custom_call.1} parent=0
    _
  %s20 = ssub.s32 1, %s18
  %s21 = scalar_select 0, %s20, %s18
  $region1: #{tpu_custom_call.1} parent=0
    #allocation2 [shape = 'u8[8192]{0}', space=vmem, size = 0x2000, scoped, tag = 'output window, operand 0']
    #allocation3 [shape = 's32[2]{0}', space=sflag, size = 0x8, scoped, tag = 'scoped memory for tpu_custom_call.1']
    #allocation4 [shape = 'u8[1024]{0}', space=vmem, size = 0x400, scoped, tag = 'output window, operand 1']
    #allocation5 [shape = 's32[2]{0}', space=sflag, size = 0x8, scoped, tag = 'scoped memory for tpu_custom_call.1']
    #allocation6 [shape = 'u8[16384]{0}', space=vmem, size = 0x4000, scoped, tag = 'output window, operand 2']
    #allocation7 [shape = 'u8[16384]{0}', space=vmem, size = 0x4000, scoped, tag = 'output window, operand 3']
    #allocation8 [shape = 's32[2]{0}', space=sflag, size = 0x8, scoped, tag = 'scoped memory for tpu_custom_call.1']
    #allocation9 [shape = 'u8[65536]{0}', space=vmem, size = 0x10000, scoped, tag = 'output window, operand 4']
    %22 = vsyncpa [#allocation3], 0
    %s23 = scalar_lea.sflag [#allocation3], 1
    %24 = vsyncpa %s23, 0
    %25 = vsyncpa [#allocation5], 0
    %s26 = scalar_lea.sflag [#allocation5], 1
    %27 = vsyncpa %s26, 0
    %28 = vsyncpa [#allocation8], 0
    %s29 = scalar_lea.sflag [#allocation8], 1
    %30 = vsyncpa %s29, 0
    loop: start=0, step=1, limit=4
    $region2: #{tpu_custom_call.1} parent=1 // loop_pre_header
      _
    $region3: #{tpu_custom_call.1} parent=1 // loop_header
      %s32 = sphi 0, %s36
      %p33 = scmp.ge.s32.totalorder %s32, 4
      %s42 = sphi 0, %s44
      %s45 = sphi 0, %s42
      %s46 = sphi 0, %s45
      %s62 = sphi 0, %s46
      %s66 = sphi 0, %s66
      %s68 = sphi 0, %s66
      %s69 = sphi 0, %s68
      %s83 = sphi 0, %s69
      %s87 = sphi 0, %s87
      %s89 = sphi 0, %s87
      %s90 = sphi 0, %s89
      %s104 = sphi 0, %s90
      %s108 = sphi 0, %s108
      %s110 = sphi 0, %s108
      %s111 = sphi 0, %s110
      %s125 = sphi 0, %s111
      %s129 = sphi 0, %s129
      %s131 = sphi 0, %s129
      %s132 = sphi 0, %s131
      %s146 = sphi 0, %s132
      %s150 = sphi 0, %s150
      %s152 = sphi 0, %s150
      %s153 = sphi 0, %s152
      %s167 = sphi 0, %s153
      %s171 = sphi 0, %s171
      %s173 = sphi 0, %s171
      %s174 = sphi 0, %s173
      %s188 = sphi 0, %s174
      %s192 = sphi 0, %s192
      %s194 = sphi 0, %s192
      %s195 = sphi 0, %s194
      %s209 = sphi 0, %s195
      %s213 = sphi 0, %s213
      %s215 = sphi 0, %s213
      %s216 = sphi 0, %s215
      %s230 = sphi 0, %s216
      %s234 = sphi 0, %s234
      %s236 = sphi 0, %s234
      %s237 = sphi 0, %s236
      %s251 = sphi 0, %s237
      %s255 = sphi 0, %s255
      %s257 = sphi 0, %s255
      %s258 = sphi 0, %s257
      %s272 = sphi 0, %s258
      %s276 = sphi 0, %s276
      %s278 = sphi 0, %s276
      %s279 = sphi 0, %s278
      %s293 = sphi 0, %s279
      %s299 = sphi 0, %s301
      %s302 = sphi 0, %s299
      %s303 = sphi 0, %s302
      %s319 = sphi 0, %s303
      %s325 = sphi 0, %s327
      %s328 = sphi 0, %s325
      %s329 = sphi 0, %s328
      %s345 = sphi 0, %s329
      %s351 = sphi 0, %s353
      %s354 = sphi 0, %s351
      %s355 = sphi 0, %s354
      %s371 = sphi 0, %s355
      %s377 = sphi 0, %s379
      %s380 = sphi 0, %s377
      %s381 = sphi 0, %s380
      %s397 = sphi 0, %s381
      %s403 = sphi 0, %s405
      %s406 = sphi 0, %s403
      %s407 = sphi 0, %s406
      %s423 = sphi 0, %s407
    $region4: #{tpu_custom_call.1} parent=1 // loop_header_branch
      %35 = sbr.rel (%p33) target = $region8
    $region5: #{tpu_custom_call.1} parent=1 // loop_body
      %s37 = ssub.s32 %s32, 1
      %s38 = ssub.s32 %s32, 2
      %s39 = sadd.s32 %s32, 1
      %s40 = ssub.s32 %s32, %s39
      %p41 = scmp.eq.s32.totalorder %s40, 0
      %s43 = sadd.s32 %s42, 1
      %s44 = scalar_select %p41, %s42, %s43
      %p47 = pneg %p41
      %p48 = scmp.eq.s32.totalorder %s32, 1
      %p49 = por %p47, %p48
      %p50 = scmp.ne.s32.totalorder %s42, %s45
      %p51 = scmp.eq.s32.totalorder %s32, 0
      %p52 = por %p50, %p51
      %p53 = scmp.ne.s32.totalorder %s42, %s45
      %p54 = scmp.eq.s32.totalorder %s37, 1
      %p55 = por %p53, %p54
      %p56 = scmp.ne.s32.totalorder %s45, %s46
      %p57 = scmp.eq.s32.totalorder %s37, 0
      %p58 = por %p56, %p57
      %p59 = scmp.ne.s32.totalorder %s45, %s46
      %p60 = scmp.eq.s32.totalorder %s38, 1
      %p61 = por %p59, %p60
      %p63 = scmp.ne.s32.totalorder %s46, %s62
      %p64 = scmp.eq.s32.totalorder %s38, 0
      %p65 = por %p63, %p64
      %s67 = sadd.s32 %s66, 1
      %p70 = scmp.eq.s32.totalorder %s32, 1
      %p71 = scmp.ne.s32.totalorder %s66, %s68
      %p72 = scmp.eq.s32.totalorder %s32, 0
      %p73 = por %p71, %p72
      %p74 = scmp.ne.s32.totalorder %s66, %s68
      %p75 = scmp.eq.s32.totalorder %s37, 1
      %p76 = por %p74, %p75
      %p77 = scmp.ne.s32.totalorder %s68, %s69
      %p78 = scmp.eq.s32.totalorder %s37, 0
      %p79 = por %p77, %p78
      %p80 = scmp.ne.s32.totalorder %s68, %s69
      %p81 = scmp.eq.s32.totalorder %s38, 1
      %p82 = por %p80, %p81
      %p84 = scmp.ne.s32.totalorder %s69, %s83
      %p85 = scmp.eq.s32.totalorder %s38, 0
      %p86 = por %p84, %p85
      %s88 = sadd.s32 %s87, 1
      %p91 = scmp.eq.s32.totalorder %s32, 1
      %p92 = scmp.ne.s32.totalorder %s87, %s89
      %p93 = scmp.eq.s32.totalorder %s32, 0
      %p94 = por %p92, %p93
      %p95 = scmp.ne.s32.totalorder %s87, %s89
      %p96 = scmp.eq.s32.totalorder %s37, 1
      %p97 = por %p95, %p96
      %p98 = scmp.ne.s32.totalorder %s89, %s90
      %p99 = scmp.eq.s32.totalorder %s37, 0
      %p100 = por %p98, %p99
      %p101 = scmp.ne.s32.totalorder %s89, %s90
      %p102 = scmp.eq.s32.totalorder %s38, 1
      %p103 = por %p101, %p102
      %p105 = scmp.ne.s32.totalorder %s90, %s104
      %p106 = scmp.eq.s32.totalorder %s38, 0
      %p107 = por %p105, %p106
      %s109 = sadd.s32 %s108, 1
      %p112 = scmp.eq.s32.totalorder %s32, 1
      %p113 = scmp.ne.s32.totalorder %s108, %s110
      %p114 = scmp.eq.s32.totalorder %s32, 0
      %p115 = por %p113, %p114
      %p116 = scmp.ne.s32.totalorder %s108, %s110
      %p117 = scmp.eq.s32.totalorder %s37, 1
      %p118 = por %p116, %p117
      %p119 = scmp.ne.s32.totalorder %s110, %s111
      %p120 = scmp.eq.s32.totalorder %s37, 0
      %p121 = por %p119, %p120
      %p122 = scmp.ne.s32.totalorder %s110, %s111
      %p123 = scmp.eq.s32.totalorder %s38, 1
      %p124 = por %p122, %p123
      %p126 = scmp.ne.s32.totalorder %s111, %s125
      %p127 = scmp.eq.s32.totalorder %s38, 0
      %p128 = por %p126, %p127
      %s130 = sadd.s32 %s129, 1
      %p133 = scmp.eq.s32.totalorder %s32, 1
      %p134 = scmp.ne.s32.totalorder %s129, %s131
      %p135 = scmp.eq.s32.totalorder %s32, 0
      %p136 = por %p134, %p135
      %p137 = scmp.ne.s32.totalorder %s129, %s131
      %p138 = scmp.eq.s32.totalorder %s37, 1
      %p139 = por %p137, %p138
      %p140 = scmp.ne.s32.totalorder %s131, %s132
      %p141 = scmp.eq.s32.totalorder %s37, 0
      %p142 = por %p140, %p141
      %p143 = scmp.ne.s32.totalorder %s131, %s132
      %p144 = scmp.eq.s32.totalorder %s38, 1
      %p145 = por %p143, %p144
      %p147 = scmp.ne.s32.totalorder %s132, %s146
      %p148 = scmp.eq.s32.totalorder %s38, 0
      %p149 = por %p147, %p148
      %s151 = sadd.s32 %s150, 1
      %p154 = scmp.eq.s32.totalorder %s32, 1
      %p155 = scmp.ne.s32.totalorder %s150, %s152
      %p156 = scmp.eq.s32.totalorder %s32, 0
      %p157 = por %p155, %p156
      %p158 = scmp.ne.s32.totalorder %s150, %s152
      %p159 = scmp.eq.s32.totalorder %s37, 1
      %p160 = por %p158, %p159
      %p161 = scmp.ne.s32.totalorder %s152, %s153
      %p162 = scmp.eq.s32.totalorder %s37, 0
      %p163 = por %p161, %p162
      %p164 = scmp.ne.s32.totalorder %s152, %s153
      %p165 = scmp.eq.s32.totalorder %s38, 1
      %p166 = por %p164, %p165
      %p168 = scmp.ne.s32.totalorder %s153, %s167
      %p169 = scmp.eq.s32.totalorder %s38, 0
      %p170 = por %p168, %p169
      %s172 = sadd.s32 %s171, 1
      %p175 = scmp.eq.s32.totalorder %s32, 1
      %p176 = scmp.ne.s32.totalorder %s171, %s173
      %p177 = scmp.eq.s32.totalorder %s32, 0
      %p178 = por %p176, %p177
      %p179 = scmp.ne.s32.totalorder %s171, %s173
      %p180 = scmp.eq.s32.totalorder %s37, 1
      %p181 = por %p179, %p180
      %p182 = scmp.ne.s32.totalorder %s173, %s174
      %p183 = scmp.eq.s32.totalorder %s37, 0
      %p184 = por %p182, %p183
      %p185 = scmp.ne.s32.totalorder %s173, %s174
      %p186 = scmp.eq.s32.totalorder %s38, 1
      %p187 = por %p185, %p186
      %p189 = scmp.ne.s32.totalorder %s174, %s188
      %p190 = scmp.eq.s32.totalorder %s38, 0
      %p191 = por %p189, %p190
      %s193 = sadd.s32 %s192, 1
      %p196 = scmp.eq.s32.totalorder %s32, 1
      %p197 = scmp.ne.s32.totalorder %s192, %s194
      %p198 = scmp.eq.s32.totalorder %s32, 0
      %p199 = por %p197, %p198
      %p200 = scmp.ne.s32.totalorder %s192, %s194
      %p201 = scmp.eq.s32.totalorder %s37, 1
      %p202 = por %p200, %p201
      %p203 = scmp.ne.s32.totalorder %s194, %s195
      %p204 = scmp.eq.s32.totalorder %s37, 0
      %p205 = por %p203, %p204
      %p206 = scmp.ne.s32.totalorder %s194, %s195
      %p207 = scmp.eq.s32.totalorder %s38, 1
      %p208 = por %p206, %p207
      %p210 = scmp.ne.s32.totalorder %s195, %s209
      %p211 = scmp.eq.s32.totalorder %s38, 0
      %p212 = por %p210, %p211
      %s214 = sadd.s32 %s213, 1
      %p217 = scmp.eq.s32.totalorder %s32, 1
      %p218 = scmp.ne.s32.totalorder %s213, %s215
      %p219 = scmp.eq.s32.totalorder %s32, 0
      %p220 = por %p218, %p219
      %p221 = scmp.ne.s32.totalorder %s213, %s215
      %p222 = scmp.eq.s32.totalorder %s37, 1
      %p223 = por %p221, %p222
      %p224 = scmp.ne.s32.totalorder %s215, %s216
      %p225 = scmp.eq.s32.totalorder %s37, 0
      %p226 = por %p224, %p225
      %p227 = scmp.ne.s32.totalorder %s215, %s216
      %p228 = scmp.eq.s32.totalorder %s38, 1
      %p229 = por %p227, %p228
      %p231 = scmp.ne.s32.totalorder %s216, %s230
      %p232 = scmp.eq.s32.totalorder %s38, 0
      %p233 = por %p231, %p232
      %s235 = sadd.s32 %s234, 1
      %p238 = scmp.eq.s32.totalorder %s32, 1
      %p239 = scmp.ne.s32.totalorder %s234, %s236
      %p240 = scmp.eq.s32.totalorder %s32, 0
      %p241 = por %p239, %p240
      %p242 = scmp.ne.s32.totalorder %s234, %s236
      %p243 = scmp.eq.s32.totalorder %s37, 1
      %p244 = por %p242, %p243
      %p245 = scmp.ne.s32.totalorder %s236, %s237
      %p246 = scmp.eq.s32.totalorder %s37, 0
      %p247 = por %p245, %p246
      %p248 = scmp.ne.s32.totalorder %s236, %s237
      %p249 = scmp.eq.s32.totalorder %s38, 1
      %p250 = por %p248, %p249
      %p252 = scmp.ne.s32.totalorder %s237, %s251
      %p253 = scmp.eq.s32.totalorder %s38, 0
      %p254 = por %p252, %p253
      %s256 = sadd.s32 %s255, 1
      %p259 = scmp.eq.s32.totalorder %s32, 1
      %p260 = scmp.ne.s32.totalorder %s255, %s257
      %p261 = scmp.eq.s32.totalorder %s32, 0
      %p262 = por %p260, %p261
      %p263 = scmp.ne.s32.totalorder %s255, %s257
      %p264 = scmp.eq.s32.totalorder %s37, 1
      %p265 = por %p263, %p264
      %p266 = scmp.ne.s32.totalorder %s257, %s258
      %p267 = scmp.eq.s32.totalorder %s37, 0
      %p268 = por %p266, %p267
      %p269 = scmp.ne.s32.totalorder %s257, %s258
      %p270 = scmp.eq.s32.totalorder %s38, 1
      %p271 = por %p269, %p270
      %p273 = scmp.ne.s32.totalorder %s258, %s272
      %p274 = scmp.eq.s32.totalorder %s38, 0
      %p275 = por %p273, %p274
      %s277 = sadd.s32 %s276, 1
      %p280 = scmp.eq.s32.totalorder %s32, 1
      %p281 = scmp.ne.s32.totalorder %s276, %s278
      %p282 = scmp.eq.s32.totalorder %s32, 0
      %p283 = por %p281, %p282
      %p284 = scmp.ne.s32.totalorder %s276, %s278
      %p285 = scmp.eq.s32.totalorder %s37, 1
      %p286 = por %p284, %p285
      %p287 = scmp.ne.s32.totalorder %s278, %s279
      %p288 = scmp.eq.s32.totalorder %s37, 0
      %p289 = por %p287, %p288
      %p290 = scmp.ne.s32.totalorder %s278, %s279
      %p291 = scmp.eq.s32.totalorder %s38, 1
      %p292 = por %p290, %p291
      %p294 = scmp.ne.s32.totalorder %s279, %s293
      %p295 = scmp.eq.s32.totalorder %s38, 0
      %p296 = por %p294, %p295
      %s297 = ssub.s32 %s32, %s39
      %p298 = scmp.eq.s32.totalorder %s297, 0
      %s300 = sadd.s32 %s299, 1
      %s301 = scalar_select %p298, %s299, %s300
      %p304 = pneg %p298
      %p305 = scmp.eq.s32.totalorder %s32, 1
      %p306 = por %p304, %p305
      %p307 = scmp.ne.s32.totalorder %s299, %s302
      %p308 = scmp.eq.s32.totalorder %s32, 0
      %p309 = por %p307, %p308
      %p310 = scmp.ne.s32.totalorder %s299, %s302
      %p311 = scmp.eq.s32.totalorder %s37, 1
      %p312 = por %p310, %p311
      %p313 = scmp.ne.s32.totalorder %s302, %s303
      %p314 = scmp.eq.s32.totalorder %s37, 0
      %p315 = por %p313, %p314
      %p316 = scmp.ne.s32.totalorder %s302, %s303
      %p317 = scmp.eq.s32.totalorder %s38, 1
      %p318 = por %p316, %p317
      %p320 = scmp.ne.s32.totalorder %s303, %s319
      %p321 = scmp.eq.s32.totalorder %s38, 0
      %p322 = por %p320, %p321
      %s323 = ssub.s32 %s32, %s39
      %p324 = scmp.eq.s32.totalorder %s323, 0
      %s326 = sadd.s32 %s325, 1
      %s327 = scalar_select %p324, %s325, %s326
      %p330 = pneg %p324
      %p331 = scmp.eq.s32.totalorder %s32, 1
      %p332 = por %p330, %p331
      %p333 = scmp.ne.s32.totalorder %s325, %s328
      %p334 = scmp.eq.s32.totalorder %s32, 0
      %p335 = por %p333, %p334
      %p336 = scmp.ne.s32.totalorder %s325, %s328
      %p337 = scmp.eq.s32.totalorder %s37, 1
      %p338 = por %p336, %p337
      %p339 = scmp.ne.s32.totalorder %s328, %s329
      %p340 = scmp.eq.s32.totalorder %s37, 0
      %p341 = por %p339, %p340
      %p342 = scmp.ne.s32.totalorder %s328, %s329
      %p343 = scmp.eq.s32.totalorder %s38, 1
      %p344 = por %p342, %p343
      %p346 = scmp.ne.s32.totalorder %s329, %s345
      %p347 = scmp.eq.s32.totalorder %s38, 0
      %p348 = por %p346, %p347
      %s349 = ssub.s32 %s32, %s39
      %p350 = scmp.eq.s32.totalorder %s349, 0
      %s352 = sadd.s32 %s351, 1
      %s353 = scalar_select %p350, %s351, %s352
      %p356 = pneg %p350
      %p357 = scmp.eq.s32.totalorder %s32, 1
      %p358 = por %p356, %p357
      %p359 = scmp.ne.s32.totalorder %s351, %s354
      %p360 = scmp.eq.s32.totalorder %s32, 0
      %p361 = por %p359, %p360
      %p362 = scmp.ne.s32.totalorder %s351, %s354
      %p363 = scmp.eq.s32.totalorder %s37, 1
      %p364 = por %p362, %p363
      %p365 = scmp.ne.s32.totalorder %s354, %s355
      %p366 = scmp.eq.s32.totalorder %s37, 0
      %p367 = por %p365, %p366
      %p368 = scmp.ne.s32.totalorder %s354, %s355
      %p369 = scmp.eq.s32.totalorder %s38, 1
      %p370 = por %p368, %p369
      %p372 = scmp.ne.s32.totalorder %s355, %s371
      %p373 = scmp.eq.s32.totalorder %s38, 0
      %p374 = por %p372, %p373
      %s375 = ssub.s32 %s32, %s39
      %p376 = scmp.eq.s32.totalorder %s375, 0
      %s378 = sadd.s32 %s377, 1
      %s379 = scalar_select %p376, %s377, %s378
      %p382 = pneg %p376
      %p383 = scmp.eq.s32.totalorder %s32, 1
      %p384 = por %p382, %p383
      %p385 = scmp.ne.s32.totalorder %s377, %s380
      %p386 = scmp.eq.s32.totalorder %s32, 0
      %p387 = por %p385, %p386
      %p388 = scmp.ne.s32.totalorder %s377, %s380
      %p389 = scmp.eq.s32.totalorder %s37, 1
      %p390 = por %p388, %p389
      %p391 = scmp.ne.s32.totalorder %s380, %s381
      %p392 = scmp.eq.s32.totalorder %s37, 0
      %p393 = por %p391, %p392
      %p394 = scmp.ne.s32.totalorder %s380, %s381
      %p395 = scmp.eq.s32.totalorder %s38, 1
      %p396 = por %p394, %p395
      %p398 = scmp.ne.s32.totalorder %s381, %s397
      %p399 = scmp.eq.s32.totalorder %s38, 0
      %p400 = por %p398, %p399
      %s401 = ssub.s32 %s32, %s39
      %p402 = scmp.eq.s32.totalorder %s401, 0
      %s404 = sadd.s32 %s403, 1
      %s405 = scalar_select %p402, %s403, %s404
      %p408 = pneg %p402
      %p409 = scmp.eq.s32.totalorder %s32, 1
      %p410 = por %p408, %p409
      %p411 = scmp.ne.s32.totalorder %s403, %s406
      %p412 = scmp.eq.s32.totalorder %s32, 0
      %p413 = por %p411, %p412
      %p414 = scmp.ne.s32.totalorder %s403, %s406
      %p415 = scmp.eq.s32.totalorder %s37, 1
      %p416 = por %p414, %p415
      %p417 = scmp.ne.s32.totalorder %s406, %s407
      %p418 = scmp.eq.s32.totalorder %s37, 0
      %p419 = por %p417, %p418
      %p420 = scmp.ne.s32.totalorder %s406, %s407
      %p421 = scmp.eq.s32.totalorder %s38, 1
      %p422 = por %p420, %p421
      %p424 = scmp.ne.s32.totalorder %s407, %s423
      %p425 = scmp.eq.s32.totalorder %s38, 0
      %p426 = por %p424, %p425
      %p427 = scmp.le.s32.totalorder 1, %s32
      %p428 = scmp.lt.s32.totalorder %s32, 3
      %p429 = pnand %p427, %p428
      %p430 = pneg %p429
      // Predicated region
      $region9: #{tpu_custom_call.1} parent=5 // pred_check
        _
      $region10: #{tpu_custom_call.1} parent=5 // pred_check_branch
        %432 = sbr.rel (%p429) target = $region12
      $region11: #{tpu_custom_call.1} parent=5 // pred_region
        %s433 = ssub.s32 %s32, 1
        // Predicated region
        $region13: #{tpu_custom_call.1} parent=11 // pred_check
          %p434 = pneg %p79
        $region14: #{tpu_custom_call.1} parent=11 // pred_check_branch
          %436 = sbr.rel (%p434) target = $region16
        $region15: #{tpu_custom_call.1} parent=11 // pred_region
          _
        $region16: #{tpu_custom_call.1} parent=11 // pred_fallthru
          _
        // Predicated region
        $region17: #{tpu_custom_call.1} parent=11 // pred_check
          %p437 = pneg %p100
        $region18: #{tpu_custom_call.1} parent=11 // pred_check_branch
          %439 = sbr.rel (%p437) target = $region20
        $region19: #{tpu_custom_call.1} parent=11 // pred_region
          _
        $region20: #{tpu_custom_call.1} parent=11 // pred_fallthru
          _
        // Predicated region
        $region21: #{tpu_custom_call.1} parent=11 // pred_check
          %p440 = pneg %p121
        $region22: #{tpu_custom_call.1} parent=11 // pred_check_branch
          %442 = sbr.rel (%p440) target = $region24
        $region23: #{tpu_custom_call.1} parent=11 // pred_region
          _
        $region24: #{tpu_custom_call.1} parent=11 // pred_fallthru
          _
        // Predicated region
        $region25: #{tpu_custom_call.1} parent=11 // pred_check
          %p443 = pneg %p142
        $region26: #{tpu_custom_call.1} parent=11 // pred_check_branch
          %445 = sbr.rel (%p443) target = $region28
        $region27: #{tpu_custom_call.1} parent=11 // pred_region
          _
        $region28: #{tpu_custom_call.1} parent=11 // pred_fallthru
          _
        // Predicated region
        $region29: #{tpu_custom_call.1} parent=11 // pred_check
          %p446 = pneg %p163
        $region30: #{tpu_custom_call.1} parent=11 // pred_check_branch
          %448 = sbr.rel (%p446) target = $region32
        $region31: #{tpu_custom_call.1} parent=11 // pred_region
          _
        $region32: #{tpu_custom_call.1} parent=11 // pred_fallthru
          _
        // Predicated region
        $region33: #{tpu_custom_call.1} parent=11 // pred_check
          %p449 = pneg %p184
        $region34: #{tpu_custom_call.1} parent=11 // pred_check_branch
          %451 = sbr.rel (%p449) target = $region36
        $region35: #{tpu_custom_call.1} parent=11 // pred_region
          _
        $region36: #{tpu_custom_call.1} parent=11 // pred_fallthru
          _
        // Predicated region
        $region37: #{tpu_custom_call.1} parent=11 // pred_check
          %p452 = pneg %p205
        $region38: #{tpu_custom_call.1} parent=11 // pred_check_branch
          %454 = sbr.rel (%p452) target = $region40
        $region39: #{tpu_custom_call.1} parent=11 // pred_region
          _
        $region40: #{tpu_custom_call.1} parent=11 // pred_fallthru
          _
        // Predicated region
        $region41: #{tpu_custom_call.1} parent=11 // pred_check
          %p455 = pneg %p226
        $region42: #{tpu_custom_call.1} parent=11 // pred_check_branch
          %457 = sbr.rel (%p455) target = $region44
        $region43: #{tpu_custom_call.1} parent=11 // pred_region
          _
        $region44: #{tpu_custom_call.1} parent=11 // pred_fallthru
          _
        // Predicated region
        $region45: #{tpu_custom_call.1} parent=11 // pred_check
          %p458 = pneg %p247
        $region46: #{tpu_custom_call.1} parent=11 // pred_check_branch
          %460 = sbr.rel (%p458) target = $region48
        $region47: #{tpu_custom_call.1} parent=11 // pred_region
          _
        $region48: #{tpu_custom_call.1} parent=11 // pred_fallthru
          _
        // Predicated region
        $region49: #{tpu_custom_call.1} parent=11 // pred_check
          %p461 = pneg %p268
        $region50: #{tpu_custom_call.1} parent=11 // pred_check_branch
          %463 = sbr.rel (%p461) target = $region52
        $region51: #{tpu_custom_call.1} parent=11 // pred_region
          _
        $region52: #{tpu_custom_call.1} parent=11 // pred_fallthru
          _
        // Predicated region
        $region53: #{tpu_custom_call.1} parent=11 // pred_check
          %p464 = pneg %p289
        $region54: #{tpu_custom_call.1} parent=11 // pred_check_branch
          %466 = sbr.rel (%p464) target = $region56
        $region55: #{tpu_custom_call.1} parent=11 // pred_region
          _
        $region56: #{tpu_custom_call.1} parent=11 // pred_fallthru
          _
      $region12: #{tpu_custom_call.1} parent=5 // pred_fallthru
        _
      %p467 = scmp.lt.s32.totalorder %s32, 2
      // Predicated region
      $region57: #{tpu_custom_call.1} parent=5 // pred_check
        %p468 = pneg %p467
      $region58: #{tpu_custom_call.1} parent=5 // pred_check_branch
        %470 = sbr.rel (%p468) target = $region60
      $region59: #{tpu_custom_call.1} parent=5 // pred_region
        // Predicated region
        $region61: #{tpu_custom_call.1} parent=59 // pred_check
          %p471 = pneg %p52
        $region62: #{tpu_custom_call.1} parent=59 // pred_check_branch
          %473 = sbr.rel (%p471) target = $region64
        $region63: #{tpu_custom_call.1} parent=59 // pred_region
          %p474 = scmp.lt.s32.totalorder %s32, 1
          %s475 = scalar_select %p474, %s32, 1
          %s476 = smul.addr %s475, 8
          %s477 = scalar_lea.vmem %s0, %s476
        $region64: #{tpu_custom_call.1} parent=59 // pred_fallthru
          _
      $region60: #{tpu_custom_call.1} parent=5 // pred_fallthru
        _
      %p478 = scmp.le.s32.totalorder 1, %s32
      %p479 = scmp.lt.s32.totalorder %s32, 3
      %p480 = pnand %p478, %p479
      %p481 = pneg %p480
      // Predicated region
      $region65: #{tpu_custom_call.1} parent=5 // pred_check
        _
      $region66: #{tpu_custom_call.1} parent=5 // pred_check_branch
        %483 = sbr.rel (%p480) target = $region68
      $region67: #{tpu_custom_call.1} parent=5 // pred_region
        %s484 = ssub.s32 %s32, 1
        %p485 = scmp.lt.s32.totalorder %s37, 1
        %s486 = scalar_select %p485, %s37, 1
        %s487 = smul.addr %s486, 8
        %s488 = scalar_lea.vmem %s0, %s487
        %p489 = pneg %p58
        %p490 = pneg %p55
        %p491 = pneg %p79
        %p492 = pneg %p76
        %p493 = pneg %p100
        %p494 = pneg %p97
        %p495 = pneg %p121
        %p496 = pneg %p118
        %p497 = pneg %p142
        %p498 = pneg %p139
        %p499 = pneg %p163
        %p500 = pneg %p160
        %p501 = pneg %p184
        %p502 = pneg %p181
        %p503 = pneg %p205
        %p504 = pneg %p202
        %p505 = pneg %p226
        %p506 = pneg %p223
        %p507 = pneg %p247
        %p508 = pneg %p244
        %p509 = pneg %p268
        %p510 = pneg %p265
        %p511 = pneg %p289
        %p512 = pneg %p286
        %p513 = pneg %p315
        %p514 = pneg %p312
        %s515 = sand.u32 %s302, 1
        %s516 = scalar_lea.sflag [#allocation3], %s515
        %s517 = sand.u32 %s302, 1
        %s518 = smul.addr %s517, 8
        %s519 = scalar_lea.vmem [#allocation2], %s518
        %p520 = pneg %p341
        %p521 = pneg %p338
        %s522 = sand.u32 %s37, 1
        %s523 = scalar_lea.sflag [#allocation5], %s522
        %s524 = sand.u32 %s328, 1
        %s525 = scalar_lea.vmem [#allocation4], %s524
        %p526 = pneg %p367
        %p527 = pneg %p364
        %s528 = sand.u32 %s37, 1
        %s529 = scalar_lea.sflag [#allocation5], %s528
        %s530 = sand.u32 %s354, 1
        %s531 = smul.addr %s530, 16
        %s532 = scalar_lea.vmem [#allocation6], %s531
        %p533 = pneg %p393
        %p534 = pneg %p390
        %s535 = sand.u32 %s37, 1
        %s536 = scalar_lea.sflag [#allocation8], %s535
        %s537 = sand.u32 %s380, 1
        %s538 = smul.addr %s537, 16
        %s539 = scalar_lea.vmem [#allocation7], %s538
        %p540 = pneg %p419
        %p541 = pneg %p416
        %s542 = sand.u32 %s37, 1
        %s543 = scalar_lea.sflag [#allocation8], %s542
        %s544 = sand.u32 %s406, 1
        %s545 = smul.addr %s544, 64
        %s546 = scalar_lea.vmem [#allocation9], %s545
        %p547 = scmp.lt.s32.totalorder %s37, 1
        %s548 = scalar_select %p547, %s37, 1
        %s549 = smul.addr %s548, 8
        %s550 = scalar_lea.vmem %s0, %s549
        %v551 = vld [vmem:[%s550] sm:$0xff]
        %v552 = vlaneseq
        %v553 = vshrl.u32 %v552, 7
        %v554 = vlaneseq
        %v555 = vand.u32 %v554, 127
        %vm556 = vcmp.ge.s32.totalorder %v553, %v555
        %v557 = vld [vmem:[%s2] sm:$0x3]
        %v558 = vld [vmem:[%s1] sm:$0xf]
        %vm559 = vcmask 261120
        %v560 = vsel %vm559, %v551, 0.0
        %561 = vadd.xlane.f32.xlu0 %v560
        %v562 = vpop.xlane.xlu0 %561
        %v563 = vrcp.pop 32.0
        %v564 = vmul.f32 %v562, %v563
        %v565 = vsub.f32 %v551, %v564
        %v566 = vmul.f32 %v565, %v565
        %v567 = vsel %vm559, %v566, 0.0
        %568 = vadd.xlane.f32.xlu0 %v567
        %v569 = vpop.xlane.xlu0 %568
        %v570 = vrcp.pop 31.0
        %v571 = vmul.f32 %v569, %v570
        %v572 = vrsqrt.pop %v571
        %v573 = vmul.f32 %v571, %v572
        %vm574 = vcmp.eq.f32.partialorder %v571, inf
        %v575 = vsel %vm574, %v571, %v573
        %vm576 = vcmp.eq.f32.partialorder %v571, 0.0
        %v577 = vand.u32 %v571, 2147483648
        %v578 = vsel %vm576, %v577, %v575
        %v579 = vlaneseq
        %v580 = vshrl.u32 %v579, 7
        %v581 = vsub.s32 0, %v580
        %v582 = vrot.slane %v558, %v581
        %v583 = vmul.f32 %v582, %v565
        %v584 = vadd.f32 %v578, 1e-05
        %v585 = vrcp.pop %v584
        %v586 = vmul.f32 %v583, %v585
        %v587 = vlaneseq
        %v588 = vshrl.u32 %v587, 7
        %v589 = vsub.s32 1, %v588
        %v590 = vrot.slane %v558, %v589
        %v591 = vadd.f32 %v586, %v590
        %v592 = vld [vmem:[%s3] sm:$0xff]
        %v593 = vld [vmem:[%s3 + $0x8] sm:$0xff]
        %v594 = vld [vmem:[%s3 + $0x10] sm:$0xff]
        %v595 = vld [vmem:[%s3 + $0x18] sm:$0xff]
        %v596 = vld [vmem:[%s4] sm:$0x1]
        %v598 = vlaneseq
        %v599 = vshrl.u32 %v598, 7
        %v600 = vsub.s32 0, %v599
        %v601 = vrot.slane %v596, %v600
        %v604 = vsel %vm559, %v591, 0
        %606 = vmatprep.subr.mxu0 0.0
        %607 = vmatpush1.msra.mxu0 0.0
        %608 = vmatprep.subr.mxu0 0.0
        %609 = vmatpush1.msra.mxu0 0.0
        %610 = vmatprep.subr.mxu0 0.0
        %611 = vmatpush1.msra.mxu0 0.0
        %612 = vmatprep.subr.mxu0 0.0
        %613 = vmatpush1.msra.mxu0 0.0
        %614 = vmatprep.subr.mxu0 0.0
        %615 = vmatpush1.msra.mxu0 0.0
        %616 = vmatprep.subr.mxu0 0.0
        %617 = vmatpush1.msra.mxu0 0.0
        %618 = vmatprep.subr.mxu0 0.0
        %619 = vmatpush1.msra.mxu0 0.0
        %620 = vmatprep.subr.mxu0 0.0
        %621 = vmatpush1.msra.mxu0 0.0
        %622 = vmatprep.subr.mxu0 0.0
        %623 = vmatpush1.msra.mxu0 0.0
        %624 = vmatprep.subr.mxu0 0.0
        %625 = vmatpush1.msra.mxu0 0.0
        %626 = vmatprep.subr.mxu0 0.0
        %627 = vmatpush1.msra.mxu0 0.0
        %628 = vmatprep.subr.mxu0 0.0
        %629 = vmatpush1.msra.mxu0 0.0
        %630 = vmatprep.subr.mxu0 0.0
        %631 = vmatpush1.msra.mxu0 %v595
        %632 = vmatprep.subr.mxu0 0.0
        %633 = vmatpush1.msra.mxu0 %v594
        %634 = vmatprep.subr.mxu0 0.0
        %635 = vmatpush1.msra.mxu0 %v593
        %636 = vmatprep.subr.mxu0 0.0
        %637 = vmatpush1.msra.mxu0 %v592
        %638 = vmatprep.subr.mxu0 0.0
        %639 = vmatpush2.msra.mxu0 0.0
        %640 = vmatprep.subr.mxu0 0.0
        %641 = vmatpush2.msra.mxu0 0.0
        %642 = vmatprep.subr.mxu0 0.0
        %643 = vmatpush2.msra.mxu0 0.0
        %644 = vmatprep.subr.mxu0 0.0
        %645 = vmatpush2.msra.mxu0 0.0
        %646 = vmatprep.subr.mxu0 0.0
        %647 = vmatpush2.msra.mxu0 0.0
        %648 = vmatprep.subr.mxu0 0.0
        %649 = vmatpush2.msra.mxu0 0.0
        %650 = vmatprep.subr.mxu0 0.0
        %651 = vmatpush2.msra.mxu0 0.0
        %652 = vmatprep.subr.mxu0 0.0
        %653 = vmatpush2.msra.mxu0 0.0
        %654 = vmatprep.subr.mxu0 0.0
        %655 = vmatpush2.msra.mxu0 0.0
        %656 = vmatprep.subr.mxu0 0.0
        %657 = vmatpush2.msra.mxu0 0.0
        %658 = vmatprep.subr.mxu0 0.0
        %659 = vmatpush2.msra.mxu0 0.0
        %660 = vmatprep.subr.mxu0 0.0
        %661 = vmatpush2.msra.mxu0 0.0
        %662 = vmatprep.subr.mxu0 0.0
        %663 = vmatpush2.msra.mxu0 0.0
        %664 = vmatprep.subr.mxu0 0.0
        %665 = vmatpush2.msra.mxu0 0.0
        %666 = vmatprep.subr.mxu0 0.0
        %667 = vmatpush2.msra.mxu0 0.0
        %668 = vmatprep.subr.mxu0 0.0
        %669 = vmatpush2.msra.mxu0 0.0
        %670 = vmatprep.mubr.f32.mxu0 0.0
        %671 = vmatmul.mubr.f32.gmra.mxu0 %v604
        %v672 = vpop.f32.mrf.mxu0
        %v673 = vadd.f32 %v601, %v672
        %v674 = vpop.f32.mrf.mxu0
        %675 = vdwg.mxu0
        %677 = vrot.lane.b32.xlu0 %v673, 120
        %v678 = vpop.permute.xlu0 %677
        %679 = vrot.lane.b32.xlu0 %v673, 112
        %v680 = vpop.permute.xlu0 %679
        %681 = vrot.lane.b32.xlu0 %v673, 104
        %v682 = vpop.permute.xlu0 %681
        %683 = vrot.lane.b32.xlu0 %v673, 96
        %v684 = vpop.permute.xlu0 %683
        %vm685 = vcmask 64512
        %v686 = vsel %vm685, %v673, 0
        %v688 = vsel %vm685, %v684, 0
        %690 = vmatprep.subr.mxu0 0.0
        %691 = vmatpush1.xpose.msra.mxu0 0.0
        %692 = vmatprep.subr.mxu0 0.0
        %693 = vmatpush1.xpose.msra.mxu0 0.0
        %694 = vmatprep.subr.mxu0 0.0
        %695 = vmatpush1.xpose.msra.mxu0 0.0
        %696 = vmatprep.subr.mxu0 0.0
        %697 = vmatpush1.xpose.msra.mxu0 0.0
        %698 = vmatprep.subr.mxu0 0.0
        %699 = vmatpush1.xpose.msra.mxu0 0.0
        %700 = vmatprep.subr.mxu0 0.0
        %701 = vmatpush1.xpose.msra.mxu0 0.0
        %702 = vmatprep.subr.mxu0 0.0
        %703 = vmatpush1.xpose.msra.mxu0 0.0
        %704 = vmatprep.subr.mxu0 0.0
        %705 = vmatpush1.xpose.msra.mxu0 0.0
        %706 = vmatprep.subr.mxu0 0.0
        %707 = vmatpush1.xpose.msra.mxu0 0.0
        %708 = vmatprep.subr.mxu0 0.0
        %709 = vmatpush1.xpose.msra.mxu0 0.0
        %710 = vmatprep.subr.mxu0 0.0
        %711 = vmatpush1.xpose.msra.mxu0 0.0
        %712 = vmatprep.subr.mxu0 0.0
        %713 = vmatpush1.xpose.msra.mxu0 0.0
        %714 = vmatprep.subr.mxu0 0.0
        %715 = vmatpush1.xpose.msra.mxu0 0.0
        %716 = vmatprep.subr.mxu0 0.0
        %717 = vmatpush1.xpose.msra.mxu0 0.0
        %718 = vmatprep.subr.mxu0 0.0
        %719 = vmatpush1.xpose.msra.mxu0 0.0
        %720 = vmatprep.subr.mxu0 0.0
        %721 = vmatpush1.xpose.msra.mxu0 %v688
        %722 = vmatprep.subr.mxu0 0.0
        %723 = vmatpush2.xpose.msra.mxu0 0.0
        %724 = vmatprep.subr.mxu0 0.0
        %725 = vmatpush2.xpose.msra.mxu0 0.0
        %726 = vmatprep.subr.mxu0 0.0
        %727 = vmatpush2.xpose.msra.mxu0 0.0
        %728 = vmatprep.subr.mxu0 0.0
        %729 = vmatpush2.xpose.msra.mxu0 0.0
        %730 = vmatprep.subr.mxu0 0.0
        %731 = vmatpush2.xpose.msra.mxu0 0.0
        %732 = vmatprep.subr.mxu0 0.0
        %733 = vmatpush2.xpose.msra.mxu0 0.0
        %734 = vmatprep.subr.mxu0 0.0
        %735 = vmatpush2.xpose.msra.mxu0 0.0
        %736 = vmatprep.subr.mxu0 0.0
        %737 = vmatpush2.xpose.msra.mxu0 0.0
        %738 = vmatprep.subr.mxu0 0.0
        %739 = vmatpush2.xpose.msra.mxu0 0.0
        %740 = vmatprep.subr.mxu0 0.0
        %741 = vmatpush2.xpose.msra.mxu0 0.0
        %742 = vmatprep.subr.mxu0 0.0
        %743 = vmatpush2.xpose.msra.mxu0 0.0
        %744 = vmatprep.subr.mxu0 0.0
        %745 = vmatpush2.xpose.msra.mxu0 0.0
        %746 = vmatprep.subr.mxu0 0.0
        %747 = vmatpush2.xpose.msra.mxu0 0.0
        %748 = vmatprep.subr.mxu0 0.0
        %749 = vmatpush2.xpose.msra.mxu0 0.0
        %750 = vmatprep.subr.mxu0 0.0
        %751 = vmatpush2.xpose.msra.mxu0 0.0
        %752 = vmatprep.subr.mxu0 0.0
        %753 = vmatpush2.xpose.msra.mxu0 0.0
        %754 = vmatprep.mubr.f32.mxu0 0.0
        %755 = vmatmul.mubr.f32.gmra.mxu0 %v686
        %v756 = vpop.f32.mrf.mxu0
        %v757 = vadd.f32 0.0, %v756
        %v758 = vpop.f32.mrf.mxu0
        %759 = vdwg.mxu0
        %760 = vrot.lane.b32.xlu0 %v678, 96
        %v761 = vpop.permute.xlu0 %760
        %v762 = vsel %vm685, %v678, 0
        %v764 = vsel %vm685, %v761, 0
        %766 = vmatprep.subr.mxu0 0.0
        %767 = vmatpush1.xpose.msra.mxu0 0.0
        %768 = vmatprep.subr.mxu0 0.0
        %769 = vmatpush1.xpose.msra.mxu0 0.0
        %770 = vmatprep.subr.mxu0 0.0
        %771 = vmatpush1.xpose.msra.mxu0 0.0
        %772 = vmatprep.subr.mxu0 0.0
        %773 = vmatpush1.xpose.msra.mxu0 0.0
        %774 = vmatprep.subr.mxu0 0.0
        %775 = vmatpush1.xpose.msra.mxu0 0.0
        %776 = vmatprep.subr.mxu0 0.0
        %777 = vmatpush1.xpose.msra.mxu0 0.0
        %778 = vmatprep.subr.mxu0 0.0
        %779 = vmatpush1.xpose.msra.mxu0 0.0
        %780 = vmatprep.subr.mxu0 0.0
        %781 = vmatpush1.xpose.msra.mxu0 0.0
        %782 = vmatprep.subr.mxu0 0.0
        %783 = vmatpush1.xpose.msra.mxu0 0.0
        %784 = vmatprep.subr.mxu0 0.0
        %785 = vmatpush1.xpose.msra.mxu0 0.0
        %786 = vmatprep.subr.mxu0 0.0
        %787 = vmatpush1.xpose.msra.mxu0 0.0
        %788 = vmatprep.subr.mxu0 0.0
        %789 = vmatpush1.xpose.msra.mxu0 0.0
        %790 = vmatprep.subr.mxu0 0.0
        %791 = vmatpush1.xpose.msra.mxu0 0.0
        %792 = vmatprep.subr.mxu0 0.0
        %793 = vmatpush1.xpose.msra.mxu0 0.0
        %794 = vmatprep.subr.mxu0 0.0
        %795 = vmatpush1.xpose.msra.mxu0 0.0
        %796 = vmatprep.subr.mxu0 0.0
        %797 = vmatpush1.xpose.msra.mxu0 %v764
        %798 = vmatprep.subr.mxu0 0.0
        %799 = vmatpush2.xpose.msra.mxu0 0.0
        %800 = vmatprep.subr.mxu0 0.0
        %801 = vmatpush2.xpose.msra.mxu0 0.0
        %802 = vmatprep.subr.mxu0 0.0
        %803 = vmatpush2.xpose.msra.mxu0 0.0
        %804 = vmatprep.subr.mxu0 0.0
        %805 = vmatpush2.xpose.msra.mxu0 0.0
        %806 = vmatprep.subr.mxu0 0.0
        %807 = vmatpush2.xpose.msra.mxu0 0.0
        %808 = vmatprep.subr.mxu0 0.0
        %809 = vmatpush2.xpose.msra.mxu0 0.0
        %810 = vmatprep.subr.mxu0 0.0
        %811 = vmatpush2.xpose.msra.mxu0 0.0
        %812 = vmatprep.subr.mxu0 0.0
        %813 = vmatpush2.xpose.msra.mxu0 0.0
        %814 = vmatprep.subr.mxu0 0.0
        %815 = vmatpush2.xpose.msra.mxu0 0.0
        %816 = vmatprep.subr.mxu0 0.0
        %817 = vmatpush2.xpose.msra.mxu0 0.0
        %818 = vmatprep.subr.mxu0 0.0
        %819 = vmatpush2.xpose.msra.mxu0 0.0
        %820 = vmatprep.subr.mxu0 0.0
        %821 = vmatpush2.xpose.msra.mxu0 0.0
        %822 = vmatprep.subr.mxu0 0.0
        %823 = vmatpush2.xpose.msra.mxu0 0.0
        %824 = vmatprep.subr.mxu0 0.0
        %825 = vmatpush2.xpose.msra.mxu0 0.0
        %826 = vmatprep.subr.mxu0 0.0
        %827 = vmatpush2.xpose.msra.mxu0 0.0
        %828 = vmatprep.subr.mxu0 0.0
        %829 = vmatpush2.xpose.msra.mxu0 0.0
        %830 = vmatprep.mubr.f32.mxu0 0.0
        %831 = vmatmul.mubr.f32.gmra.mxu0 %v762
        %v832 = vpop.f32.mrf.mxu0
        %v833 = vadd.f32 0.0, %v832
        %v834 = vpop.f32.mrf.mxu0
        %835 = vdwg.mxu0
        %836 = vrot.lane.b32.xlu0 %v680, 96
        %v837 = vpop.permute.xlu0 %836
        %v838 = vsel %vm685, %v680, 0
        %v840 = vsel %vm685, %v837, 0
        %842 = vmatprep.subr.mxu0 0.0
        %843 = vmatpush1.xpose.msra.mxu0 0.0
        %844 = vmatprep.subr.mxu0 0.0
        %845 = vmatpush1.xpose.msra.mxu0 0.0
        %846 = vmatprep.subr.mxu0 0.0
        %847 = vmatpush1.xpose.msra.mxu0 0.0
        %848 = vmatprep.subr.mxu0 0.0
        %849 = vmatpush1.xpose.msra.mxu0 0.0
        %850 = vmatprep.subr.mxu0 0.0
        %851 = vmatpush1.xpose.msra.mxu0 0.0
        %852 = vmatprep.subr.mxu0 0.0
        %853 = vmatpush1.xpose.msra.mxu0 0.0
        %854 = vmatprep.subr.mxu0 0.0
        %855 = vmatpush1.xpose.msra.mxu0 0.0
        %856 = vmatprep.subr.mxu0 0.0
        %857 = vmatpush1.xpose.msra.mxu0 0.0
        %858 = vmatprep.subr.mxu0 0.0
        %859 = vmatpush1.xpose.msra.mxu0 0.0
        %860 = vmatprep.subr.mxu0 0.0
        %861 = vmatpush1.xpose.msra.mxu0 0.0
        %862 = vmatprep.subr.mxu0 0.0
        %863 = vmatpush1.xpose.msra.mxu0 0.0
        %864 = vmatprep.subr.mxu0 0.0
        %865 = vmatpush1.xpose.msra.mxu0 0.0
        %866 = vmatprep.subr.mxu0 0.0
        %867 = vmatpush1.xpose.msra.mxu0 0.0
        %868 = vmatprep.subr.mxu0 0.0
        %869 = vmatpush1.xpose.msra.mxu0 0.0
        %870 = vmatprep.subr.mxu0 0.0
        %871 = vmatpush1.xpose.msra.mxu0 0.0
        %872 = vmatprep.subr.mxu0 0.0
        %873 = vmatpush1.xpose.msra.mxu0 %v840
        %874 = vmatprep.subr.mxu0 0.0
        %875 = vmatpush2.xpose.msra.mxu0 0.0
        %876 = vmatprep.subr.mxu0 0.0
        %877 = vmatpush2.xpose.msra.mxu0 0.0
        %878 = vmatprep.subr.mxu0 0.0
        %879 = vmatpush2.xpose.msra.mxu0 0.0
        %880 = vmatprep.subr.mxu0 0.0
        %881 = vmatpush2.xpose.msra.mxu0 0.0
        %882 = vmatprep.subr.mxu0 0.0
        %883 = vmatpush2.xpose.msra.mxu0 0.0
        %884 = vmatprep.subr.mxu0 0.0
        %885 = vmatpush2.xpose.msra.mxu0 0.0
        %886 = vmatprep.subr.mxu0 0.0
        %887 = vmatpush2.xpose.msra.mxu0 0.0
        %888 = vmatprep.subr.mxu0 0.0
        %889 = vmatpush2.xpose.msra.mxu0 0.0
        %890 = vmatprep.subr.mxu0 0.0
        %891 = vmatpush2.xpose.msra.mxu0 0.0
        %892 = vmatprep.subr.mxu0 0.0
        %893 = vmatpush2.xpose.msra.mxu0 0.0
        %894 = vmatprep.subr.mxu0 0.0
        %895 = vmatpush2.xpose.msra.mxu0 0.0
        %896 = vmatprep.subr.mxu0 0.0
        %897 = vmatpush2.xpose.msra.mxu0 0.0
        %898 = vmatprep.subr.mxu0 0.0
        %899 = vmatpush2.xpose.msra.mxu0 0.0
        %900 = vmatprep.subr.mxu0 0.0
        %901 = vmatpush2.xpose.msra.mxu0 0.0
        %902 = vmatprep.subr.mxu0 0.0
        %903 = vmatpush2.xpose.msra.mxu0 0.0
        %904 = vmatprep.subr.mxu0 0.0
        %905 = vmatpush2.xpose.msra.mxu0 0.0
        %906 = vmatprep.mubr.f32.mxu0 0.0
        %907 = vmatmul.mubr.f32.gmra.mxu0 %v838
        %v908 = vpop.f32.mrf.mxu0
        %v909 = vadd.f32 0.0, %v908
        %v910 = vpop.f32.mrf.mxu0
        %911 = vdwg.mxu0
        %912 = vrot.lane.b32.xlu0 %v682, 96
        %v913 = vpop.permute.xlu0 %912
        %v914 = vsel %vm685, %v682, 0
        %v916 = vsel %vm685, %v913, 0
        %918 = vmatprep.subr.mxu0 0.0
        %919 = vmatpush1.xpose.msra.mxu0 0.0
        %920 = vmatprep.subr.mxu0 0.0
        %921 = vmatpush1.xpose.msra.mxu0 0.0
        %922 = vmatprep.subr.mxu0 0.0
        %923 = vmatpush1.xpose.msra.mxu0 0.0
        %924 = vmatprep.subr.mxu0 0.0
        %925 = vmatpush1.xpose.msra.mxu0 0.0
        %926 = vmatprep.subr.mxu0 0.0
        %927 = vmatpush1.xpose.msra.mxu0 0.0
        %928 = vmatprep.subr.mxu0 0.0
        %929 = vmatpush1.xpose.msra.mxu0 0.0
        %930 = vmatprep.subr.mxu0 0.0
        %931 = vmatpush1.xpose.msra.mxu0 0.0
        %932 = vmatprep.subr.mxu0 0.0
        %933 = vmatpush1.xpose.msra.mxu0 0.0
        %934 = vmatprep.subr.mxu0 0.0
        %935 = vmatpush1.xpose.msra.mxu0 0.0
        %936 = vmatprep.subr.mxu0 0.0
        %937 = vmatpush1.xpose.msra.mxu0 0.0
        %938 = vmatprep.subr.mxu0 0.0
        %939 = vmatpush1.xpose.msra.mxu0 0.0
        %940 = vmatprep.subr.mxu0 0.0
        %941 = vmatpush1.xpose.msra.mxu0 0.0
        %942 = vmatprep.subr.mxu0 0.0
        %943 = vmatpush1.xpose.msra.mxu0 0.0
        %944 = vmatprep.subr.mxu0 0.0
        %945 = vmatpush1.xpose.msra.mxu0 0.0
        %946 = vmatprep.subr.mxu0 0.0
        %947 = vmatpush1.xpose.msra.mxu0 0.0
        %948 = vmatprep.subr.mxu0 0.0
        %949 = vmatpush1.xpose.msra.mxu0 %v916
        %950 = vmatprep.subr.mxu0 0.0
        %951 = vmatpush2.xpose.msra.mxu0 0.0
        %952 = vmatprep.subr.mxu0 0.0
        %953 = vmatpush2.xpose.msra.mxu0 0.0
        %954 = vmatprep.subr.mxu0 0.0
        %955 = vmatpush2.xpose.msra.mxu0 0.0
        %956 = vmatprep.subr.mxu0 0.0
        %957 = vmatpush2.xpose.msra.mxu0 0.0
        %958 = vmatprep.subr.mxu0 0.0
        %959 = vmatpush2.xpose.msra.mxu0 0.0
        %960 = vmatprep.subr.mxu0 0.0
        %961 = vmatpush2.xpose.msra.mxu0 0.0
        %962 = vmatprep.subr.mxu0 0.0
        %963 = vmatpush2.xpose.msra.mxu0 0.0
        %964 = vmatprep.subr.mxu0 0.0
        %965 = vmatpush2.xpose.msra.mxu0 0.0
        %966 = vmatprep.subr.mxu0 0.0
        %967 = vmatpush2.xpose.msra.mxu0 0.0
        %968 = vmatprep.subr.mxu0 0.0
        %969 = vmatpush2.xpose.msra.mxu0 0.0
        %970 = vmatprep.subr.mxu0 0.0
        %971 = vmatpush2.xpose.msra.mxu0 0.0
        %972 = vmatprep.subr.mxu0 0.0
        %973 = vmatpush2.xpose.msra.mxu0 0.0
        %974 = vmatprep.subr.mxu0 0.0
        %975 = vmatpush2.xpose.msra.mxu0 0.0
        %976 = vmatprep.subr.mxu0 0.0
        %977 = vmatpush2.xpose.msra.mxu0 0.0
        %978 = vmatprep.subr.mxu0 0.0
        %979 = vmatpush2.xpose.msra.mxu0 0.0
        %980 = vmatprep.subr.mxu0 0.0
        %981 = vmatpush2.xpose.msra.mxu0 0.0
        %982 = vmatprep.mubr.f32.mxu0 0.0
        %983 = vmatmul.mubr.f32.gmra.mxu0 %v914
        %v984 = vpop.f32.mrf.mxu0
        %v985 = vadd.f32 0.0, %v984
        %v986 = vpop.f32.mrf.mxu0
        %987 = vdwg.mxu0
        %v988 = vmul.f32 %v757, 0.35355338
        %v989 = vmul.f32 %v833, 0.35355338
        %v990 = vmul.f32 %v909, 0.35355338
        %v991 = vmul.f32 %v985, 0.35355338
        %v992 = vsel %vm556, 1, 0
        %vm993 = vcmp.eq.s32.totalorder %v992, 1
        %v994 = vsel %vm993, %v988, -inf
        %v995 = vsel %vm993, %v989, -inf
        %v996 = vsel %vm993, %v990, -inf
        %v997 = vsel %vm993, %v991, -inf
        %v998 = vsel %vm685, %v994, -inf
        %999 = vmax.xlane.f32.xlu0 %v998
        %v1000 = vpop.xlane.xlu0 %999
        %v1001 = vsel %vm685, %v995, -inf
        %1002 = vmax.xlane.f32.xlu0 %v1001
        %v1003 = vpop.xlane.xlu0 %1002
        %v1004 = vsel %vm685, %v996, -inf
        %1005 = vmax.xlane.f32.xlu0 %v1004
        %v1006 = vpop.xlane.xlu0 %1005
        %v1007 = vsel %vm685, %v997, -inf
        %1008 = vmax.xlane.f32.xlu0 %v1007
        %v1009 = vpop.xlane.xlu0 %1008
        %v1010 = vsub.f32 %v994, %v1000
        %v1011 = vsub.f32 %v995, %v1003
        %v1012 = vsub.f32 %v996, %v1006
        %v1013 = vsub.f32 %v997, %v1009
        %v1014 = vmul.f32 %v1010, 1.442695
        %v1015 = vpow.pop %v1014
        %v1016 = vmul.f32 %v1011, 1.442695
        %v1017 = vpow.pop %v1016
        %v1018 = vmul.f32 %v1012, 1.442695
        %v1019 = vpow.pop %v1018
        %v1020 = vmul.f32 %v1013, 1.442695
        %v1021 = vpow.pop %v1020
        %v1022 = vsel %vm685, %v1015, 0.0
        %1023 = vadd.xlane.f32.xlu0 %v1022
        %v1024 = vpop.xlane.xlu0 %1023
        %v1025 = vsel %vm685, %v1017, 0.0
        %1026 = vadd.xlane.f32.xlu0 %v1025
        %v1027 = vpop.xlane.xlu0 %1026
        %v1028 = vsel %vm685, %v1019, 0.0
        %1029 = vadd.xlane.f32.xlu0 %v1028
        %v1030 = vpop.xlane.xlu0 %1029
        %v1031 = vsel %vm685, %v1021, 0.0
        %1032 = vadd.xlane.f32.xlu0 %v1031
        %v1033 = vpop.xlane.xlu0 %1032
        %v1034 = vrcp.pop %v1024
        %v1035 = vmul.f32 %v1015, %v1034
        %v1036 = vrcp.pop %v1027
        %v1037 = vmul.f32 %v1017, %v1036
        %v1038 = vrcp.pop %v1030
        %v1039 = vmul.f32 %v1019, %v1038
        %v1040 = vrcp.pop %v1033
        %v1041 = vmul.f32 %v1021, %v1040
        %1042 = vst.msk [vmem:[%s546] sm:$0xff] %vm685, %v1035
        %1043 = vst.msk [vmem:[%s546 + $0x8] sm:$0xff] %vm685, %v1037
        %1044 = vst.msk [vmem:[%s546 + $0x10] sm:$0xff] %vm685, %v1039
        %1045 = vst.msk [vmem:[%s546 + $0x18] sm:$0xff] %vm685, %v1041
        %1046 = vrot.lane.b32.xlu0 %v673, 64
        %v1047 = vpop.permute.xlu0 %1046
        %v1050 = vsel %vm685, %v1035, 0
        %1052 = vmatprep.subr.mxu0 0.0
        %1053 = vmatpush1.msra.mxu0 0.0
        %1054 = vmatprep.subr.mxu0 0.0
        %1055 = vmatpush1.msra.mxu0 0.0
        %1056 = vmatprep.subr.mxu0 0.0
        %1057 = vmatpush1.msra.mxu0 0.0
        %1058 = vmatprep.subr.mxu0 0.0
        %1059 = vmatpush1.msra.mxu0 0.0
        %1060 = vmatprep.subr.mxu0 0.0
        %1061 = vmatpush1.msra.mxu0 0.0
        %1062 = vmatprep.subr.mxu0 0.0
        %1063 = vmatpush1.msra.mxu0 0.0
        %1064 = vmatprep.subr.mxu0 0.0
        %1065 = vmatpush1.msra.mxu0 0.0
        %1066 = vmatprep.subr.mxu0 0.0
        %1067 = vmatpush1.msra.mxu0 0.0
        %1068 = vmatprep.subr.mxu0 0.0
        %1069 = vmatpush1.msra.mxu0 0.0
        %1070 = vmatprep.subr.mxu0 0.0
        %1071 = vmatpush1.msra.mxu0 0.0
        %1072 = vmatprep.subr.mxu0 0.0
        %1073 = vmatpush1.msra.mxu0 0.0
        %1074 = vmatprep.subr.mxu0 0.0
        %1075 = vmatpush1.msra.mxu0 0.0
        %1076 = vmatprep.subr.mxu0 0.0
        %1077 = vmatpush1.msra.mxu0 0.0
        %1078 = vmatprep.subr.mxu0 0.0
        %1079 = vmatpush1.msra.mxu0 0.0
        %1080 = vmatprep.subr.mxu0 0.0
        %1081 = vmatpush1.msra.mxu0 0.0
        %1082 = vmatprep.subr.mxu0 0.0
        %1083 = vmatpush1.msra.mxu0 %v1047
        %1084 = vmatprep.subr.mxu0 0.0
        %1085 = vmatpush2.msra.mxu0 0.0
        %1086 = vmatprep.subr.mxu0 0.0
        %1087 = vmatpush2.msra.mxu0 0.0
        %1088 = vmatprep.subr.mxu0 0.0
        %1089 = vmatpush2.msra.mxu0 0.0
        %1090 = vmatprep.subr.mxu0 0.0
        %1091 = vmatpush2.msra.mxu0 0.0
        %1092 = vmatprep.subr.mxu0 0.0
        %1093 = vmatpush2.msra.mxu0 0.0
        %1094 = vmatprep.subr.mxu0 0.0
        %1095 = vmatpush2.msra.mxu0 0.0
        %1096 = vmatprep.subr.mxu0 0.0
        %1097 = vmatpush2.msra.mxu0 0.0
        %1098 = vmatprep.subr.mxu0 0.0
        %1099 = vmatpush2.msra.mxu0 0.0
        %1100 = vmatprep.subr.mxu0 0.0
        %1101 = vmatpush2.msra.mxu0 0.0
        %1102 = vmatprep.subr.mxu0 0.0
        %1103 = vmatpush2.msra.mxu0 0.0
        %1104 = vmatprep.subr.mxu0 0.0
        %1105 = vmatpush2.msra.mxu0 0.0
        %1106 = vmatprep.subr.mxu0 0.0
        %1107 = vmatpush2.msra.mxu0 0.0
        %1108 = vmatprep.subr.mxu0 0.0
        %1109 = vmatpush2.msra.mxu0 0.0
        %1110 = vmatprep.subr.mxu0 0.0
        %1111 = vmatpush2.msra.mxu0 0.0
        %1112 = vmatprep.subr.mxu0 0.0
        %1113 = vmatpush2.msra.mxu0 0.0
        %1114 = vmatprep.subr.mxu0 0.0
        %1115 = vmatpush2.msra.mxu0 0.0
        %1116 = vmatprep.mubr.f32.mxu0 0.0
        %1117 = vmatmul.mubr.f32.gmra.mxu0 %v1050
        %v1118 = vpop.f32.mrf.mxu0
        %v1119 = vadd.f32 0.0, %v1118
        %v1120 = vpop.f32.mrf.mxu0
        %1121 = vdwg.mxu0
        %1122 = vrot.lane.b32.xlu0 %v678, 64
        %v1123 = vpop.permute.xlu0 %1122
        %v1126 = vsel %vm685, %v1037, 0
        %1128 = vmatprep.subr.mxu0 0.0
        %1129 = vmatpush1.msra.mxu0 0.0
        %1130 = vmatprep.subr.mxu0 0.0
        %1131 = vmatpush1.msra.mxu0 0.0
        %1132 = vmatprep.subr.mxu0 0.0
        %1133 = vmatpush1.msra.mxu0 0.0
        %1134 = vmatprep.subr.mxu0 0.0
        %1135 = vmatpush1.msra.mxu0 0.0
        %1136 = vmatprep.subr.mxu0 0.0
        %1137 = vmatpush1.msra.mxu0 0.0
        %1138 = vmatprep.subr.mxu0 0.0
        %1139 = vmatpush1.msra.mxu0 0.0
        %1140 = vmatprep.subr.mxu0 0.0
        %1141 = vmatpush1.msra.mxu0 0.0
        %1142 = vmatprep.subr.mxu0 0.0
        %1143 = vmatpush1.msra.mxu0 0.0
        %1144 = vmatprep.subr.mxu0 0.0
        %1145 = vmatpush1.msra.mxu0 0.0
        %1146 = vmatprep.subr.mxu0 0.0
        %1147 = vmatpush1.msra.mxu0 0.0
        %1148 = vmatprep.subr.mxu0 0.0
        %1149 = vmatpush1.msra.mxu0 0.0
        %1150 = vmatprep.subr.mxu0 0.0
        %1151 = vmatpush1.msra.mxu0 0.0
        %1152 = vmatprep.subr.mxu0 0.0
        %1153 = vmatpush1.msra.mxu0 0.0
        %1154 = vmatprep.subr.mxu0 0.0
        %1155 = vmatpush1.msra.mxu0 0.0
        %1156 = vmatprep.subr.mxu0 0.0
        %1157 = vmatpush1.msra.mxu0 0.0
        %1158 = vmatprep.subr.mxu0 0.0
        %1159 = vmatpush1.msra.mxu0 %v1123
        %1160 = vmatprep.subr.mxu0 0.0
        %1161 = vmatpush2.msra.mxu0 0.0
        %1162 = vmatprep.subr.mxu0 0.0
        %1163 = vmatpush2.msra.mxu0 0.0
        %1164 = vmatprep.subr.mxu0 0.0
        %1165 = vmatpush2.msra.mxu0 0.0
        %1166 = vmatprep.subr.mxu0 0.0
        %1167 = vmatpush2.msra.mxu0 0.0
        %1168 = vmatprep.subr.mxu0 0.0
        %1169 = vmatpush2.msra.mxu0 0.0
        %1170 = vmatprep.subr.mxu0 0.0
        %1171 = vmatpush2.msra.mxu0 0.0
        %1172 = vmatprep.subr.mxu0 0.0
        %1173 = vmatpush2.msra.mxu0 0.0
        %1174 = vmatprep.subr.mxu0 0.0
        %1175 = vmatpush2.msra.mxu0 0.0
        %1176 = vmatprep.subr.mxu0 0.0
        %1177 = vmatpush2.msra.mxu0 0.0
        %1178 = vmatprep.subr.mxu0 0.0
        %1179 = vmatpush2.msra.mxu0 0.0
        %1180 = vmatprep.subr.mxu0 0.0
        %1181 = vmatpush2.msra.mxu0 0.0
        %1182 = vmatprep.subr.mxu0 0.0
        %1183 = vmatpush2.msra.mxu0 0.0
        %1184 = vmatprep.subr.mxu0 0.0
        %1185 = vmatpush2.msra.mxu0 0.0
        %1186 = vmatprep.subr.mxu0 0.0
        %1187 = vmatpush2.msra.mxu0 0.0
        %1188 = vmatprep.subr.mxu0 0.0
        %1189 = vmatpush2.msra.mxu0 0.0
        %1190 = vmatprep.subr.mxu0 0.0
        %1191 = vmatpush2.msra.mxu0 0.0
        %1192 = vmatprep.mubr.f32.mxu0 0.0
        %1193 = vmatmul.mubr.f32.gmra.mxu0 %v1126
        %v1194 = vpop.f32.mrf.mxu0
        %v1195 = vadd.f32 0.0, %v1194
        %v1196 = vpop.f32.mrf.mxu0
        %1197 = vdwg.mxu0
        %1198 = vrot.lane.b32.xlu0 %v680, 64
        %v1199 = vpop.permute.xlu0 %1198
        %v1202 = vsel %vm685, %v1039, 0
        %1204 = vmatprep.subr.mxu0 0.0
        %1205 = vmatpush1.msra.mxu0 0.0
        %1206 = vmatprep.subr.mxu0 0.0
        %1207 = vmatpush1.msra.mxu0 0.0
        %1208 = vmatprep.subr.mxu0 0.0
        %1209 = vmatpush1.msra.mxu0 0.0
        %1210 = vmatprep.subr.mxu0 0.0
        %1211 = vmatpush1.msra.mxu0 0.0
        %1212 = vmatprep.subr.mxu0 0.0
        %1213 = vmatpush1.msra.mxu0 0.0
        %1214 = vmatprep.subr.mxu0 0.0
        %1215 = vmatpush1.msra.mxu0 0.0
        %1216 = vmatprep.subr.mxu0 0.0
        %1217 = vmatpush1.msra.mxu0 0.0
        %1218 = vmatprep.subr.mxu0 0.0
        %1219 = vmatpush1.msra.mxu0 0.0
        %1220 = vmatprep.subr.mxu0 0.0
        %1221 = vmatpush1.msra.mxu0 0.0
        %1222 = vmatprep.subr.mxu0 0.0
        %1223 = vmatpush1.msra.mxu0 0.0
        %1224 = vmatprep.subr.mxu0 0.0
        %1225 = vmatpush1.msra.mxu0 0.0
        %1226 = vmatprep.subr.mxu0 0.0
        %1227 = vmatpush1.msra.mxu0 0.0
        %1228 = vmatprep.subr.mxu0 0.0
        %1229 = vmatpush1.msra.mxu0 0.0
        %1230 = vmatprep.subr.mxu0 0.0
        %1231 = vmatpush1.msra.mxu0 0.0
        %1232 = vmatprep.subr.mxu0 0.0
        %1233 = vmatpush1.msra.mxu0 0.0
        %1234 = vmatprep.subr.mxu0 0.0
        %1235 = vmatpush1.msra.mxu0 %v1199
        %1236 = vmatprep.subr.mxu0 0.0
        %1237 = vmatpush2.msra.mxu0 0.0
        %1238 = vmatprep.subr.mxu0 0.0
        %1239 = vmatpush2.msra.mxu0 0.0
        %1240 = vmatprep.subr.mxu0 0.0
        %1241 = vmatpush2.msra.mxu0 0.0
        %1242 = vmatprep.subr.mxu0 0.0
        %1243 = vmatpush2.msra.mxu0 0.0
        %1244 = vmatprep.subr.mxu0 0.0
        %1245 = vmatpush2.msra.mxu0 0.0
        %1246 = vmatprep.subr.mxu0 0.0
        %1247 = vmatpush2.msra.mxu0 0.0
        %1248 = vmatprep.subr.mxu0 0.0
        %1249 = vmatpush2.msra.mxu0 0.0
        %1250 = vmatprep.subr.mxu0 0.0
        %1251 = vmatpush2.msra.mxu0 0.0
        %1252 = vmatprep.subr.mxu0 0.0
        %1253 = vmatpush2.msra.mxu0 0.0
        %1254 = vmatprep.subr.mxu0 0.0
        %1255 = vmatpush2.msra.mxu0 0.0
        %1256 = vmatprep.subr.mxu0 0.0
        %1257 = vmatpush2.msra.mxu0 0.0
        %1258 = vmatprep.subr.mxu0 0.0
        %1259 = vmatpush2.msra.mxu0 0.0
        %1260 = vmatprep.subr.mxu0 0.0
        %1261 = vmatpush2.msra.mxu0 0.0
        %1262 = vmatprep.subr.mxu0 0.0
        %1263 = vmatpush2.msra.mxu0 0.0
        %1264 = vmatprep.subr.mxu0 0.0
        %1265 = vmatpush2.msra.mxu0 0.0
        %1266 = vmatprep.subr.mxu0 0.0
        %1267 = vmatpush2.msra.mxu0 0.0
        %1268 = vmatprep.mubr.f32.mxu0 0.0
        %1269 = vmatmul.mubr.f32.gmra.mxu0 %v1202
        %v1270 = vpop.f32.mrf.mxu0
        %v1271 = vadd.f32 0.0, %v1270
        %v1272 = vpop.f32.mrf.mxu0
        %1273 = vdwg.mxu0
        %1274 = vrot.lane.b32.xlu0 %v682, 64
        %v1275 = vpop.permute.xlu0 %1274
        %v1278 = vsel %vm685, %v1041, 0
        %1280 = vmatprep.subr.mxu0 0.0
        %1281 = vmatpush1.msra.mxu0 0.0
        %1282 = vmatprep.subr.mxu0 0.0
        %1283 = vmatpush1.msra.mxu0 0.0
        %1284 = vmatprep.subr.mxu0 0.0
        %1285 = vmatpush1.msra.mxu0 0.0
        %1286 = vmatprep.subr.mxu0 0.0
        %1287 = vmatpush1.msra.mxu0 0.0
        %1288 = vmatprep.subr.mxu0 0.0
        %1289 = vmatpush1.msra.mxu0 0.0
        %1290 = vmatprep.subr.mxu0 0.0
        %1291 = vmatpush1.msra.mxu0 0.0
        %1292 = vmatprep.subr.mxu0 0.0
        %1293 = vmatpush1.msra.mxu0 0.0
        %1294 = vmatprep.subr.mxu0 0.0
        %1295 = vmatpush1.msra.mxu0 0.0
        %1296 = vmatprep.subr.mxu0 0.0
        %1297 = vmatpush1.msra.mxu0 0.0
        %1298 = vmatprep.subr.mxu0 0.0
        %1299 = vmatpush1.msra.mxu0 0.0
        %1300 = vmatprep.subr.mxu0 0.0
        %1301 = vmatpush1.msra.mxu0 0.0
        %1302 = vmatprep.subr.mxu0 0.0
        %1303 = vmatpush1.msra.mxu0 0.0
        %1304 = vmatprep.subr.mxu0 0.0
        %1305 = vmatpush1.msra.mxu0 0.0
        %1306 = vmatprep.subr.mxu0 0.0
        %1307 = vmatpush1.msra.mxu0 0.0
        %1308 = vmatprep.subr.mxu0 0.0
        %1309 = vmatpush1.msra.mxu0 0.0
        %1310 = vmatprep.subr.mxu0 0.0
        %1311 = vmatpush1.msra.mxu0 %v1275
        %1312 = vmatprep.subr.mxu0 0.0
        %1313 = vmatpush2.msra.mxu0 0.0
        %1314 = vmatprep.subr.mxu0 0.0
        %1315 = vmatpush2.msra.mxu0 0.0
        %1316 = vmatprep.subr.mxu0 0.0
        %1317 = vmatpush2.msra.mxu0 0.0
        %1318 = vmatprep.subr.mxu0 0.0
        %1319 = vmatpush2.msra.mxu0 0.0
        %1320 = vmatprep.subr.mxu0 0.0
        %1321 = vmatpush2.msra.mxu0 0.0
        %1322 = vmatprep.subr.mxu0 0.0
        %1323 = vmatpush2.msra.mxu0 0.0
        %1324 = vmatprep.subr.mxu0 0.0
        %1325 = vmatpush2.msra.mxu0 0.0
        %1326 = vmatprep.subr.mxu0 0.0
        %1327 = vmatpush2.msra.mxu0 0.0
        %1328 = vmatprep.subr.mxu0 0.0
        %1329 = vmatpush2.msra.mxu0 0.0
        %1330 = vmatprep.subr.mxu0 0.0
        %1331 = vmatpush2.msra.mxu0 0.0
        %1332 = vmatprep.subr.mxu0 0.0
        %1333 = vmatpush2.msra.mxu0 0.0
        %1334 = vmatprep.subr.mxu0 0.0
        %1335 = vmatpush2.msra.mxu0 0.0
        %1336 = vmatprep.subr.mxu0 0.0
        %1337 = vmatpush2.msra.mxu0 0.0
        %1338 = vmatprep.subr.mxu0 0.0
        %1339 = vmatpush2.msra.mxu0 0.0
        %1340 = vmatprep.subr.mxu0 0.0
        %1341 = vmatpush2.msra.mxu0 0.0
        %1342 = vmatprep.subr.mxu0 0.0
        %1343 = vmatpush2.msra.mxu0 0.0
        %1344 = vmatprep.mubr.f32.mxu0 0.0
        %1345 = vmatmul.mubr.f32.gmra.mxu0 %v1278
        %v1346 = vpop.f32.mrf.mxu0
        %v1347 = vadd.f32 0.0, %v1346
        %v1348 = vpop.f32.mrf.mxu0
        %1349 = vdwg.mxu0
        %1351 = vrot.lane.b32.xlu0 %v1195, 8
        %v1352 = vpop.permute.xlu0 %1351
        %1355 = vrot.lane.b32.xlu0 %v1271, 16
        %v1356 = vpop.permute.xlu0 %1355
        %1359 = vrot.lane.b32.xlu0 %v1347, 24
        %v1360 = vpop.permute.xlu0 %1359
        %v1362 = vsel %vm685, %v1119, %v1352
        %vm1363 = vcmask 130048
        %v1364 = vsel %vm1363, %v1362, %v1356
        %vm1365 = vcmask 195584
        %v1366 = vsel %vm1365, %v1364, %v1360
        %v1367 = vld [vmem:[%s5] sm:$0xff]
        %v1368 = vld [vmem:[%s5 + $0x8] sm:$0xff]
        %v1369 = vld [vmem:[%s5 + $0x10] sm:$0xff]
        %v1370 = vld [vmem:[%s5 + $0x18] sm:$0xff]
        %v1371 = vld [vmem:[%s6] sm:$0x1]
        %v1373 = vlaneseq
        %v1374 = vshrl.u32 %v1373, 7
        %v1375 = vsub.s32 0, %v1374
        %v1376 = vrot.slane %v1371, %v1375
        %v1379 = vsel %vm559, %v1366, 0
        %1381 = vmatprep.subr.mxu0 0.0
        %1382 = vmatpush1.msra.mxu0 0.0
        %1383 = vmatprep.subr.mxu0 0.0
        %1384 = vmatpush1.msra.mxu0 0.0
        %1385 = vmatprep.subr.mxu0 0.0
        %1386 = vmatpush1.msra.mxu0 0.0
        %1387 = vmatprep.subr.mxu0 0.0
        %1388 = vmatpush1.msra.mxu0 0.0
        %1389 = vmatprep.subr.mxu0 0.0
        %1390 = vmatpush1.msra.mxu0 0.0
        %1391 = vmatprep.subr.mxu0 0.0
        %1392 = vmatpush1.msra.mxu0 0.0
        %1393 = vmatprep.subr.mxu0 0.0
        %1394 = vmatpush1.msra.mxu0 0.0
        %1395 = vmatprep.subr.mxu0 0.0
        %1396 = vmatpush1.msra.mxu0 0.0
        %1397 = vmatprep.subr.mxu0 0.0
        %1398 = vmatpush1.msra.mxu0 0.0
        %1399 = vmatprep.subr.mxu0 0.0
        %1400 = vmatpush1.msra.mxu0 0.0
        %1401 = vmatprep.subr.mxu0 0.0
        %1402 = vmatpush1.msra.mxu0 0.0
        %1403 = vmatprep.subr.mxu0 0.0
        %1404 = vmatpush1.msra.mxu0 0.0
        %1405 = vmatprep.subr.mxu0 0.0
        %1406 = vmatpush1.msra.mxu0 %v1370
        %1407 = vmatprep.subr.mxu0 0.0
        %1408 = vmatpush1.msra.mxu0 %v1369
        %1409 = vmatprep.subr.mxu0 0.0
        %1410 = vmatpush1.msra.mxu0 %v1368
        %1411 = vmatprep.subr.mxu0 0.0
        %1412 = vmatpush1.msra.mxu0 %v1367
        %1413 = vmatprep.subr.mxu0 0.0
        %1414 = vmatpush2.msra.mxu0 0.0
        %1415 = vmatprep.subr.mxu0 0.0
        %1416 = vmatpush2.msra.mxu0 0.0
        %1417 = vmatprep.subr.mxu0 0.0
        %1418 = vmatpush2.msra.mxu0 0.0
        %1419 = vmatprep.subr.mxu0 0.0
        %1420 = vmatpush2.msra.mxu0 0.0
        %1421 = vmatprep.subr.mxu0 0.0
        %1422 = vmatpush2.msra.mxu0 0.0
        %1423 = vmatprep.subr.mxu0 0.0
        %1424 = vmatpush2.msra.mxu0 0.0
        %1425 = vmatprep.subr.mxu0 0.0
        %1426 = vmatpush2.msra.mxu0 0.0
        %1427 = vmatprep.subr.mxu0 0.0
        %1428 = vmatpush2.msra.mxu0 0.0
        %1429 = vmatprep.subr.mxu0 0.0
        %1430 = vmatpush2.msra.mxu0 0.0
        %1431 = vmatprep.subr.mxu0 0.0
        %1432 = vmatpush2.msra.mxu0 0.0
        %1433 = vmatprep.subr.mxu0 0.0
        %1434 = vmatpush2.msra.mxu0 0.0
        %1435 = vmatprep.subr.mxu0 0.0
        %1436 = vmatpush2.msra.mxu0 0.0
        %1437 = vmatprep.subr.mxu0 0.0
        %1438 = vmatpush2.msra.mxu0 0.0
        %1439 = vmatprep.subr.mxu0 0.0
        %1440 = vmatpush2.msra.mxu0 0.0
        %1441 = vmatprep.subr.mxu0 0.0
        %1442 = vmatpush2.msra.mxu0 0.0
        %1443 = vmatprep.subr.mxu0 0.0
        %1444 = vmatpush2.msra.mxu0 0.0
        %1445 = vmatprep.mubr.f32.mxu0 0.0
        %1446 = vmatmul.mubr.f32.gmra.mxu0 %v1379
        %v1447 = vpop.f32.mrf.mxu0
        %v1448 = vadd.f32 %v1376, %v1447
        %v1449 = vpop.f32.mrf.mxu0
        %1450 = vdwg.mxu0
        %1451 = vst.msk [vmem:[%s539] sm:$0xff] %vm559, %v1448
        %v1452 = vadd.f32 %v551, %v1448
        %v1453 = vsel %vm559, %v1452, 0.0
        %1454 = vadd.xlane.f32.xlu0 %v1453
        %v1455 = vpop.xlane.xlu0 %1454
        %v1456 = vmul.f32 %v1455, %v563
        %v1457 = vsub.f32 %v1452, %v1456
        %v1458 = vmul.f32 %v1457, %v1457
        %v1459 = vsel %vm559, %v1458, 0.0
        %1460 = vadd.xlane.f32.xlu0 %v1459
        %v1461 = vpop.xlane.xlu0 %1460
        %v1462 = vmul.f32 %v1461, %v570
        %v1463 = vrsqrt.pop %v1462
        %v1464 = vmul.f32 %v1462, %v1463
        %vm1465 = vcmp.eq.f32.partialorder %v1462, inf
        %v1466 = vsel %vm1465, %v1462, %v1464
        %vm1467 = vcmp.eq.f32.partialorder %v1462, 0.0
        %v1468 = vand.u32 %v1462, 2147483648
        %v1469 = vsel %vm1467, %v1468, %v1466
        %v1470 = vlaneseq
        %v1471 = vshrl.u32 %v1470, 7
        %v1472 = vsub.s32 2, %v1471
        %v1473 = vrot.slane %v558, %v1472
        %v1474 = vmul.f32 %v1473, %v1457
        %v1475 = vadd.f32 %v1469, 1e-05
        %v1476 = vrcp.pop %v1475
        %v1477 = vmul.f32 %v1474, %v1476
        %v1478 = vlaneseq
        %v1479 = vshrl.u32 %v1478, 7
        %v1480 = vsub.s32 3, %v1479
        %v1481 = vrot.slane %v558, %v1480
        %v1482 = vadd.f32 %v1477, %v1481
        %v1483 = vld [vmem:[%s7] sm:$0xff]
        %v1484 = vld [vmem:[%s7 + $0x8] sm:$0xff]
        %v1485 = vld [vmem:[%s7 + $0x10] sm:$0xff]
        %v1486 = vld [vmem:[%s7 + $0x18] sm:$0xff]
        %v1487 = vld [vmem:[%s8] sm:$0x1]
        %v1489 = vlaneseq
        %v1490 = vshrl.u32 %v1489, 7
        %v1491 = vsub.s32 0, %v1490
        %v1492 = vrot.slane %v1487, %v1491
        %v1495 = vsel %vm559, %v1482, 0
        %1497 = vmatprep.subr.mxu0 0.0
        %1498 = vmatpush1.msra.mxu0 0.0
        %1499 = vmatprep.subr.mxu0 0.0
        %1500 = vmatpush1.msra.mxu0 0.0
        %1501 = vmatprep.subr.mxu0 0.0
        %1502 = vmatpush1.msra.mxu0 0.0
        %1503 = vmatprep.subr.mxu0 0.0
        %1504 = vmatpush1.msra.mxu0 0.0
        %1505 = vmatprep.subr.mxu0 0.0
        %1506 = vmatpush1.msra.mxu0 0.0
        %1507 = vmatprep.subr.mxu0 0.0
        %1508 = vmatpush1.msra.mxu0 0.0
        %1509 = vmatprep.subr.mxu0 0.0
        %1510 = vmatpush1.msra.mxu0 0.0
        %1511 = vmatprep.subr.mxu0 0.0
        %1512 = vmatpush1.msra.mxu0 0.0
        %1513 = vmatprep.subr.mxu0 0.0
        %1514 = vmatpush1.msra.mxu0 0.0
        %1515 = vmatprep.subr.mxu0 0.0
        %1516 = vmatpush1.msra.mxu0 0.0
        %1517 = vmatprep.subr.mxu0 0.0
        %1518 = vmatpush1.msra.mxu0 0.0
        %1519 = vmatprep.subr.mxu0 0.0
        %1520 = vmatpush1.msra.mxu0 0.0
        %1521 = vmatprep.subr.mxu0 0.0
        %1522 = vmatpush1.msra.mxu0 %v1486
        %1523 = vmatprep.subr.mxu0 0.0
        %1524 = vmatpush1.msra.mxu0 %v1485
        %1525 = vmatprep.subr.mxu0 0.0
        %1526 = vmatpush1.msra.mxu0 %v1484
        %1527 = vmatprep.subr.mxu0 0.0
        %1528 = vmatpush1.msra.mxu0 %v1483
        %1529 = vmatprep.subr.mxu0 0.0
        %1530 = vmatpush2.msra.mxu0 0.0
        %1531 = vmatprep.subr.mxu0 0.0
        %1532 = vmatpush2.msra.mxu0 0.0
        %1533 = vmatprep.subr.mxu0 0.0
        %1534 = vmatpush2.msra.mxu0 0.0
        %1535 = vmatprep.subr.mxu0 0.0
        %1536 = vmatpush2.msra.mxu0 0.0
        %1537 = vmatprep.subr.mxu0 0.0
        %1538 = vmatpush2.msra.mxu0 0.0
        %1539 = vmatprep.subr.mxu0 0.0
        %1540 = vmatpush2.msra.mxu0 0.0
        %1541 = vmatprep.subr.mxu0 0.0
        %1542 = vmatpush2.msra.mxu0 0.0
        %1543 = vmatprep.subr.mxu0 0.0
        %1544 = vmatpush2.msra.mxu0 0.0
        %1545 = vmatprep.subr.mxu0 0.0
        %1546 = vmatpush2.msra.mxu0 0.0
        %1547 = vmatprep.subr.mxu0 0.0
        %1548 = vmatpush2.msra.mxu0 0.0
        %1549 = vmatprep.subr.mxu0 0.0
        %1550 = vmatpush2.msra.mxu0 0.0
        %1551 = vmatprep.subr.mxu0 0.0
        %1552 = vmatpush2.msra.mxu0 0.0
        %1553 = vmatprep.subr.mxu0 0.0
        %1554 = vmatpush2.msra.mxu0 0.0
        %1555 = vmatprep.subr.mxu0 0.0
        %1556 = vmatpush2.msra.mxu0 0.0
        %1557 = vmatprep.subr.mxu0 0.0
        %1558 = vmatpush2.msra.mxu0 0.0
        %1559 = vmatprep.subr.mxu0 0.0
        %1560 = vmatpush2.msra.mxu0 0.0
        %1561 = vmatprep.mubr.f32.mxu0 0.0
        %1562 = vmatmul.mubr.f32.gmra.mxu0 %v1495
        %v1563 = vpop.f32.mrf.mxu0
        %v1564 = vadd.f32 %v1492, %v1563
        %v1565 = vpop.f32.mrf.mxu0
        %1566 = vdwg.mxu0
        %v1567 = vmul.f32 %v1564, 0.5
        %v1568 = vmul.f32 %v1564, %v1564
        %v1569 = vmul.f32 %v1564, %v1568
        %v1570 = vmul.f32 %v1569, 0.044715
        %v1571 = vadd.f32 %v1564, %v1570
        %v1572 = vmul.f32 %v1571, 0.7978846
        %v1573 = vtanh.pop %v1572
        %v1574 = vadd.f32 %v1573, 1.0
        %v1575 = vmul.f32 %v1567, %v1574
        %v1576 = vld [vmem:[%s9] sm:$0xff]
        %v1577 = vld [vmem:[%s9 + $0x8] sm:$0xff]
        %v1578 = vld [vmem:[%s9 + $0x10] sm:$0xff]
        %v1579 = vld [vmem:[%s9 + $0x18] sm:$0xff]
        %v1580 = vld [vmem:[%s9 + $0x20] sm:$0xff]
        %v1581 = vld [vmem:[%s9 + $0x28] sm:$0xff]
        %v1582 = vld [vmem:[%s9 + $0x30] sm:$0xff]
        %v1583 = vld [vmem:[%s9 + $0x38] sm:$0xff]
        %v1584 = vld [vmem:[%s9 + $0x40] sm:$0xff]
        %v1585 = vld [vmem:[%s9 + $0x48] sm:$0xff]
        %v1586 = vld [vmem:[%s9 + $0x50] sm:$0xff]
        %v1587 = vld [vmem:[%s9 + $0x58] sm:$0xff]
        %v1588 = vld [vmem:[%s9 + $0x60] sm:$0xff]
        %v1589 = vld [vmem:[%s9 + $0x68] sm:$0xff]
        %v1590 = vld [vmem:[%s9 + $0x70] sm:$0xff]
        %v1591 = vld [vmem:[%s9 + $0x78] sm:$0xff]
        %v1592 = vld [vmem:[%s10] sm:$0x1]
        %v1594 = vlaneseq
        %v1595 = vshrl.u32 %v1594, 7
        %v1596 = vsub.s32 0, %v1595
        %v1597 = vrot.slane %v1592, %v1596
        %1599 = vmatprep.subr.mxu0 0.0
        %1600 = vmatpush1.msra.mxu0 %v1591
        %1601 = vmatprep.subr.mxu0 0.0
        %1602 = vmatpush1.msra.mxu0 %v1590
        %1603 = vmatprep.subr.mxu0 0.0
        %1604 = vmatpush1.msra.mxu0 %v1589
        %1605 = vmatprep.subr.mxu0 0.0
        %1606 = vmatpush1.msra.mxu0 %v1588
        %1607 = vmatprep.subr.mxu0 0.0
        %1608 = vmatpush1.msra.mxu0 %v1587
        %1609 = vmatprep.subr.mxu0 0.0
        %1610 = vmatpush1.msra.mxu0 %v1586
        %1611 = vmatprep.subr.mxu0 0.0
        %1612 = vmatpush1.msra.mxu0 %v1585
        %1613 = vmatprep.subr.mxu0 0.0
        %1614 = vmatpush1.msra.mxu0 %v1584
        %1615 = vmatprep.subr.mxu0 0.0
        %1616 = vmatpush1.msra.mxu0 %v1583
        %1617 = vmatprep.subr.mxu0 0.0
        %1618 = vmatpush1.msra.mxu0 %v1582
        %1619 = vmatprep.subr.mxu0 0.0
        %1620 = vmatpush1.msra.mxu0 %v1581
        %1621 = vmatprep.subr.mxu0 0.0
        %1622 = vmatpush1.msra.mxu0 %v1580
        %1623 = vmatprep.subr.mxu0 0.0
        %1624 = vmatpush1.msra.mxu0 %v1579
        %1625 = vmatprep.subr.mxu0 0.0
        %1626 = vmatpush1.msra.mxu0 %v1578
        %1627 = vmatprep.subr.mxu0 0.0
        %1628 = vmatpush1.msra.mxu0 %v1577
        %1629 = vmatprep.subr.mxu0 0.0
        %1630 = vmatpush1.msra.mxu0 %v1576
        %1631 = vmatprep.subr.mxu0 0.0
        %1632 = vmatpush2.msra.mxu0 0.0
        %1633 = vmatprep.subr.mxu0 0.0
        %1634 = vmatpush2.msra.mxu0 0.0
        %1635 = vmatprep.subr.mxu0 0.0
        %1636 = vmatpush2.msra.mxu0 0.0
        %1637 = vmatprep.subr.mxu0 0.0
        %1638 = vmatpush2.msra.mxu0 0.0
        %1639 = vmatprep.subr.mxu0 0.0
        %1640 = vmatpush2.msra.mxu0 0.0
        %1641 = vmatprep.subr.mxu0 0.0
        %1642 = vmatpush2.msra.mxu0 0.0
        %1643 = vmatprep.subr.mxu0 0.0
        %1644 = vmatpush2.msra.mxu0 0.0
        %1645 = vmatprep.subr.mxu0 0.0
        %1646 = vmatpush2.msra.mxu0 0.0
        %1647 = vmatprep.subr.mxu0 0.0
        %1648 = vmatpush2.msra.mxu0 0.0
        %1649 = vmatprep.subr.mxu0 0.0
        %1650 = vmatpush2.msra.mxu0 0.0
        %1651 = vmatprep.subr.mxu0 0.0
        %1652 = vmatpush2.msra.mxu0 0.0
        %1653 = vmatprep.subr.mxu0 0.0
        %1654 = vmatpush2.msra.mxu0 0.0
        %1655 = vmatprep.subr.mxu0 0.0
        %1656 = vmatpush2.msra.mxu0 0.0
        %1657 = vmatprep.subr.mxu0 0.0
        %1658 = vmatpush2.msra.mxu0 0.0
        %1659 = vmatprep.subr.mxu0 0.0
        %1660 = vmatpush2.msra.mxu0 0.0
        %1661 = vmatprep.subr.mxu0 0.0
        %1662 = vmatpush2.msra.mxu0 0.0
        %1663 = vmatprep.mubr.f32.mxu0 0.0
        %1664 = vmatmul.mubr.f32.gmra.mxu0 %v1575
        %v1665 = vpop.f32.mrf.mxu0
        %v1666 = vadd.f32 %v1597, %v1665
        %v1667 = vpop.f32.mrf.mxu0
        %1668 = vdwg.mxu0
        %v1669 = vadd.f32 %v1452, %v1666
        %v1670 = vsel %vm559, %v1669, 0.0
        %1671 = vadd.xlane.f32.xlu0 %v1670
        %v1672 = vpop.xlane.xlu0 %1671
        %v1673 = vmul.f32 %v1672, %v563
        %v1674 = vsub.f32 %v1669, %v1673
        %v1675 = vmul.f32 %v1674, %v1674
        %v1676 = vsel %vm559, %v1675, 0.0
        %1677 = vadd.xlane.f32.xlu0 %v1676
        %v1678 = vpop.xlane.xlu0 %1677
        %v1679 = vmul.f32 %v1678, %v570
        %v1680 = vrsqrt.pop %v1679
        %v1681 = vmul.f32 %v1679, %v1680
        %vm1682 = vcmp.eq.f32.partialorder %v1679, inf
        %v1683 = vsel %vm1682, %v1679, %v1681
        %vm1684 = vcmp.eq.f32.partialorder %v1679, 0.0
        %v1685 = vand.u32 %v1679, 2147483648
        %v1686 = vsel %vm1684, %v1685, %v1683
        %v1687 = vlaneseq
        %v1688 = vshrl.u32 %v1687, 7
        %v1689 = vsub.s32 0, %v1688
        %v1690 = vrot.slane %v557, %v1689
        %v1691 = vmul.f32 %v1690, %v1674
        %v1692 = vadd.f32 %v1686, 1e-05
        %v1693 = vrcp.pop %v1692
        %v1694 = vmul.f32 %v1691, %v1693
        %v1695 = vlaneseq
        %v1696 = vshrl.u32 %v1695, 7
        %v1697 = vsub.s32 1, %v1696
        %v1698 = vrot.slane %v557, %v1697
        %v1699 = vadd.f32 %v1694, %v1698
        %1700 = vst.msk [vmem:[%s532] sm:$0xff] %vm559, %v1699
        %s1701 = scalar_lea.vmem %s1, 4
        %v1702 = vld [vmem:[%s1701] sm:$0xf]
        %v1703 = vlaneseq
        %v1704 = vshrl.u32 %v1703, 7
        %v1705 = vsub.s32 0, %v1704
        %v1706 = vrot.slane %v1702, %v1705
        %v1707 = vmul.f32 %v1706, %v1674
        %v1708 = vmul.f32 %v1707, %v1693
        %v1709 = vlaneseq
        %v1710 = vshrl.u32 %v1709, 7
        %v1711 = vsub.s32 1, %v1710
        %v1712 = vrot.slane %v1702, %v1711
        %v1713 = vadd.f32 %v1708, %v1712
        %s1714 = scalar_lea.vmem %s3, 32
        %v1715 = vld [vmem:[%s1714] sm:$0xff]
        %v1716 = vld [vmem:[%s1714 + $0x8] sm:$0xff]
        %v1717 = vld [vmem:[%s1714 + $0x10] sm:$0xff]
        %v1718 = vld [vmem:[%s1714 + $0x18] sm:$0xff]
        %s1719 = scalar_lea.vmem %s4, 1
        %v1720 = vld [vmem:[%s1719] sm:$0x1]
        %v1722 = vlaneseq
        %v1723 = vshrl.u32 %v1722, 7
        %v1724 = vsub.s32 0, %v1723
        %v1725 = vrot.slane %v1720, %v1724
        %v1728 = vsel %vm559, %v1713, 0
        %1730 = vmatprep.subr.mxu0 0.0
        %1731 = vmatpush1.msra.mxu0 0.0
        %1732 = vmatprep.subr.mxu0 0.0
        %1733 = vmatpush1.msra.mxu0 0.0
        %1734 = vmatprep.subr.mxu0 0.0
        %1735 = vmatpush1.msra.mxu0 0.0
        %1736 = vmatprep.subr.mxu0 0.0
        %1737 = vmatpush1.msra.mxu0 0.0
        %1738 = vmatprep.subr.mxu0 0.0
        %1739 = vmatpush1.msra.mxu0 0.0
        %1740 = vmatprep.subr.mxu0 0.0
        %1741 = vmatpush1.msra.mxu0 0.0
        %1742 = vmatprep.subr.mxu0 0.0
        %1743 = vmatpush1.msra.mxu0 0.0
        %1744 = vmatprep.subr.mxu0 0.0
        %1745 = vmatpush1.msra.mxu0 0.0
        %1746 = vmatprep.subr.mxu0 0.0
        %1747 = vmatpush1.msra.mxu0 0.0
        %1748 = vmatprep.subr.mxu0 0.0
        %1749 = vmatpush1.msra.mxu0 0.0
        %1750 = vmatprep.subr.mxu0 0.0
        %1751 = vmatpush1.msra.mxu0 0.0
        %1752 = vmatprep.subr.mxu0 0.0
        %1753 = vmatpush1.msra.mxu0 0.0
        %1754 = vmatprep.subr.mxu0 0.0
        %1755 = vmatpush1.msra.mxu0 %v1718
        %1756 = vmatprep.subr.mxu0 0.0
        %1757 = vmatpush1.msra.mxu0 %v1717
        %1758 = vmatprep.subr.mxu0 0.0
        %1759 = vmatpush1.msra.mxu0 %v1716
        %1760 = vmatprep.subr.mxu0 0.0
        %1761 = vmatpush1.msra.mxu0 %v1715
        %1762 = vmatprep.subr.mxu0 0.0
        %1763 = vmatpush2.msra.mxu0 0.0
        %1764 = vmatprep.subr.mxu0 0.0
        %1765 = vmatpush2.msra.mxu0 0.0
        %1766 = vmatprep.subr.mxu0 0.0
        %1767 = vmatpush2.msra.mxu0 0.0
        %1768 = vmatprep.subr.mxu0 0.0
        %1769 = vmatpush2.msra.mxu0 0.0
        %1770 = vmatprep.subr.mxu0 0.0
        %1771 = vmatpush2.msra.mxu0 0.0
        %1772 = vmatprep.subr.mxu0 0.0
        %1773 = vmatpush2.msra.mxu0 0.0
        %1774 = vmatprep.subr.mxu0 0.0
        %1775 = vmatpush2.msra.mxu0 0.0
        %1776 = vmatprep.subr.mxu0 0.0
        %1777 = vmatpush2.msra.mxu0 0.0
        %1778 = vmatprep.subr.mxu0 0.0
        %1779 = vmatpush2.msra.mxu0 0.0
        %1780 = vmatprep.subr.mxu0 0.0
        %1781 = vmatpush2.msra.mxu0 0.0
        %1782 = vmatprep.subr.mxu0 0.0
        %1783 = vmatpush2.msra.mxu0 0.0
        %1784 = vmatprep.subr.mxu0 0.0
        %1785 = vmatpush2.msra.mxu0 0.0
        %1786 = vmatprep.subr.mxu0 0.0
        %1787 = vmatpush2.msra.mxu0 0.0
        %1788 = vmatprep.subr.mxu0 0.0
        %1789 = vmatpush2.msra.mxu0 0.0
        %1790 = vmatprep.subr.mxu0 0.0
        %1791 = vmatpush2.msra.mxu0 0.0
        %1792 = vmatprep.subr.mxu0 0.0
        %1793 = vmatpush2.msra.mxu0 0.0
        %1794 = vmatprep.mubr.f32.mxu0 0.0
        %1795 = vmatmul.mubr.f32.gmra.mxu0 %v1728
        %v1796 = vpop.f32.mrf.mxu0
        %v1797 = vadd.f32 %v1725, %v1796
        %v1798 = vpop.f32.mrf.mxu0
        %1799 = vdwg.mxu0
        %1801 = vrot.lane.b32.xlu0 %v1797, 120
        %v1802 = vpop.permute.xlu0 %1801
        %1803 = vrot.lane.b32.xlu0 %v1797, 112
        %v1804 = vpop.permute.xlu0 %1803
        %1805 = vrot.lane.b32.xlu0 %v1797, 104
        %v1806 = vpop.permute.xlu0 %1805
        %1807 = vrot.lane.b32.xlu0 %v1797, 96
        %v1808 = vpop.permute.xlu0 %1807
        %v1809 = vsel %vm685, %v1797, 0
        %v1811 = vsel %vm685, %v1808, 0
        %1813 = vmatprep.subr.mxu0 0.0
        %1814 = vmatpush1.xpose.msra.mxu0 0.0
        %1815 = vmatprep.subr.mxu0 0.0
        %1816 = vmatpush1.xpose.msra.mxu0 0.0
        %1817 = vmatprep.subr.mxu0 0.0
        %1818 = vmatpush1.xpose.msra.mxu0 0.0
        %1819 = vmatprep.subr.mxu0 0.0
        %1820 = vmatpush1.xpose.msra.mxu0 0.0
        %1821 = vmatprep.subr.mxu0 0.0
        %1822 = vmatpush1.xpose.msra.mxu0 0.0
        %1823 = vmatprep.subr.mxu0 0.0
        %1824 = vmatpush1.xpose.msra.mxu0 0.0
        %1825 = vmatprep.subr.mxu0 0.0
        %1826 = vmatpush1.xpose.msra.mxu0 0.0
        %1827 = vmatprep.subr.mxu0 0.0
        %1828 = vmatpush1.xpose.msra.mxu0 0.0
        %1829 = vmatprep.subr.mxu0 0.0
        %1830 = vmatpush1.xpose.msra.mxu0 0.0
        %1831 = vmatprep.subr.mxu0 0.0
        %1832 = vmatpush1.xpose.msra.mxu0 0.0
        %1833 = vmatprep.subr.mxu0 0.0
        %1834 = vmatpush1.xpose.msra.mxu0 0.0
        %1835 = vmatprep.subr.mxu0 0.0
        %1836 = vmatpush1.xpose.msra.mxu0 0.0
        %1837 = vmatprep.subr.mxu0 0.0
        %1838 = vmatpush1.xpose.msra.mxu0 0.0
        %1839 = vmatprep.subr.mxu0 0.0
        %1840 = vmatpush1.xpose.msra.mxu0 0.0
        %1841 = vmatprep.subr.mxu0 0.0
        %1842 = vmatpush1.xpose.msra.mxu0 0.0
        %1843 = vmatprep.subr.mxu0 0.0
        %1844 = vmatpush1.xpose.msra.mxu0 %v1811
        %1845 = vmatprep.subr.mxu0 0.0
        %1846 = vmatpush2.xpose.msra.mxu0 0.0
        %1847 = vmatprep.subr.mxu0 0.0
        %1848 = vmatpush2.xpose.msra.mxu0 0.0
        %1849 = vmatprep.subr.mxu0 0.0
        %1850 = vmatpush2.xpose.msra.mxu0 0.0
        %1851 = vmatprep.subr.mxu0 0.0
        %1852 = vmatpush2.xpose.msra.mxu0 0.0
        %1853 = vmatprep.subr.mxu0 0.0
        %1854 = vmatpush2.xpose.msra.mxu0 0.0
        %1855 = vmatprep.subr.mxu0 0.0
        %1856 = vmatpush2.xpose.msra.mxu0 0.0
        %1857 = vmatprep.subr.mxu0 0.0
        %1858 = vmatpush2.xpose.msra.mxu0 0.0
        %1859 = vmatprep.subr.mxu0 0.0
        %1860 = vmatpush2.xpose.msra.mxu0 0.0
        %1861 = vmatprep.subr.mxu0 0.0
        %1862 = vmatpush2.xpose.msra.mxu0 0.0
        %1863 = vmatprep.subr.mxu0 0.0
        %1864 = vmatpush2.xpose.msra.mxu0 0.0
        %1865 = vmatprep.subr.mxu0 0.0
        %1866 = vmatpush2.xpose.msra.mxu0 0.0
        %1867 = vmatprep.subr.mxu0 0.0
        %1868 = vmatpush2.xpose.msra.mxu0 0.0
        %1869 = vmatprep.subr.mxu0 0.0
        %1870 = vmatpush2.xpose.msra.mxu0 0.0
        %1871 = vmatprep.subr.mxu0 0.0
        %1872 = vmatpush2.xpose.msra.mxu0 0.0
        %1873 = vmatprep.subr.mxu0 0.0
        %1874 = vmatpush2.xpose.msra.mxu0 0.0
        %1875 = vmatprep.subr.mxu0 0.0
        %1876 = vmatpush2.xpose.msra.mxu0 0.0
        %1877 = vmatprep.mubr.f32.mxu0 0.0
        %1878 = vmatmul.mubr.f32.gmra.mxu0 %v1809
        %v1879 = vpop.f32.mrf.mxu0
        %v1880 = vadd.f32 0.0, %v1879
        %v1881 = vpop.f32.mrf.mxu0
        %1882 = vdwg.mxu0
        %1883 = vrot.lane.b32.xlu0 %v1802, 96
        %v1884 = vpop.permute.xlu0 %1883
        %v1885 = vsel %vm685, %v1802, 0
        %v1887 = vsel %vm685, %v1884, 0
        %1889 = vmatprep.subr.mxu0 0.0
        %1890 = vmatpush1.xpose.msra.mxu0 0.0
        %1891 = vmatprep.subr.mxu0 0.0
        %1892 = vmatpush1.xpose.msra.mxu0 0.0
        %1893 = vmatprep.subr.mxu0 0.0
        %1894 = vmatpush1.xpose.msra.mxu0 0.0
        %1895 = vmatprep.subr.mxu0 0.0
        %1896 = vmatpush1.xpose.msra.mxu0 0.0
        %1897 = vmatprep.subr.mxu0 0.0
        %1898 = vmatpush1.xpose.msra.mxu0 0.0
        %1899 = vmatprep.subr.mxu0 0.0
        %1900 = vmatpush1.xpose.msra.mxu0 0.0
        %1901 = vmatprep.subr.mxu0 0.0
        %1902 = vmatpush1.xpose.msra.mxu0 0.0
        %1903 = vmatprep.subr.mxu0 0.0
        %1904 = vmatpush1.xpose.msra.mxu0 0.0
        %1905 = vmatprep.subr.mxu0 0.0
        %1906 = vmatpush1.xpose.msra.mxu0 0.0
        %1907 = vmatprep.subr.mxu0 0.0
        %1908 = vmatpush1.xpose.msra.mxu0 0.0
        %1909 = vmatprep.subr.mxu0 0.0
        %1910 = vmatpush1.xpose.msra.mxu0 0.0
        %1911 = vmatprep.subr.mxu0 0.0
        %1912 = vmatpush1.xpose.msra.mxu0 0.0
        %1913 = vmatprep.subr.mxu0 0.0
        %1914 = vmatpush1.xpose.msra.mxu0 0.0
        %1915 = vmatprep.subr.mxu0 0.0
        %1916 = vmatpush1.xpose.msra.mxu0 0.0
        %1917 = vmatprep.subr.mxu0 0.0
        %1918 = vmatpush1.xpose.msra.mxu0 0.0
        %1919 = vmatprep.subr.mxu0 0.0
        %1920 = vmatpush1.xpose.msra.mxu0 %v1887
        %1921 = vmatprep.subr.mxu0 0.0
        %1922 = vmatpush2.xpose.msra.mxu0 0.0
        %1923 = vmatprep.subr.mxu0 0.0
        %1924 = vmatpush2.xpose.msra.mxu0 0.0
        %1925 = vmatprep.subr.mxu0 0.0
        %1926 = vmatpush2.xpose.msra.mxu0 0.0
        %1927 = vmatprep.subr.mxu0 0.0
        %1928 = vmatpush2.xpose.msra.mxu0 0.0
        %1929 = vmatprep.subr.mxu0 0.0
        %1930 = vmatpush2.xpose.msra.mxu0 0.0
        %1931 = vmatprep.subr.mxu0 0.0
        %1932 = vmatpush2.xpose.msra.mxu0 0.0
        %1933 = vmatprep.subr.mxu0 0.0
        %1934 = vmatpush2.xpose.msra.mxu0 0.0
        %1935 = vmatprep.subr.mxu0 0.0
        %1936 = vmatpush2.xpose.msra.mxu0 0.0
        %1937 = vmatprep.subr.mxu0 0.0
        %1938 = vmatpush2.xpose.msra.mxu0 0.0
        %1939 = vmatprep.subr.mxu0 0.0
        %1940 = vmatpush2.xpose.msra.mxu0 0.0
        %1941 = vmatprep.subr.mxu0 0.0
        %1942 = vmatpush2.xpose.msra.mxu0 0.0
        %1943 = vmatprep.subr.mxu0 0.0
        %1944 = vmatpush2.xpose.msra.mxu0 0.0
        %1945 = vmatprep.subr.mxu0 0.0
        %1946 = vmatpush2.xpose.msra.mxu0 0.0
        %1947 = vmatprep.subr.mxu0 0.0
        %1948 = vmatpush2.xpose.msra.mxu0 0.0
        %1949 = vmatprep.subr.mxu0 0.0
        %1950 = vmatpush2.xpose.msra.mxu0 0.0
        %1951 = vmatprep.subr.mxu0 0.0
        %1952 = vmatpush2.xpose.msra.mxu0 0.0
        %1953 = vmatprep.mubr.f32.mxu0 0.0
        %1954 = vmatmul.mubr.f32.gmra.mxu0 %v1885
        %v1955 = vpop.f32.mrf.mxu0
        %v1956 = vadd.f32 0.0, %v1955
        %v1957 = vpop.f32.mrf.mxu0
        %1958 = vdwg.mxu0
        %1959 = vrot.lane.b32.xlu0 %v1804, 96
        %v1960 = vpop.permute.xlu0 %1959
        %v1961 = vsel %vm685, %v1804, 0
        %v1963 = vsel %vm685, %v1960, 0
        %1965 = vmatprep.subr.mxu0 0.0
        %1966 = vmatpush1.xpose.msra.mxu0 0.0
        %1967 = vmatprep.subr.mxu0 0.0
        %1968 = vmatpush1.xpose.msra.mxu0 0.0
        %1969 = vmatprep.subr.mxu0 0.0
        %1970 = vmatpush1.xpose.msra.mxu0 0.0
        %1971 = vmatprep.subr.mxu0 0.0
        %1972 = vmatpush1.xpose.msra.mxu0 0.0
        %1973 = vmatprep.subr.mxu0 0.0
        %1974 = vmatpush1.xpose.msra.mxu0 0.0
        %1975 = vmatprep.subr.mxu0 0.0
        %1976 = vmatpush1.xpose.msra.mxu0 0.0
        %1977 = vmatprep.subr.mxu0 0.0
        %1978 = vmatpush1.xpose.msra.mxu0 0.0
        %1979 = vmatprep.subr.mxu0 0.0
        %1980 = vmatpush1.xpose.msra.mxu0 0.0
        %1981 = vmatprep.subr.mxu0 0.0
        %1982 = vmatpush1.xpose.msra.mxu0 0.0
        %1983 = vmatprep.subr.mxu0 0.0
        %1984 = vmatpush1.xpose.msra.mxu0 0.0
        %1985 = vmatprep.subr.mxu0 0.0
        %1986 = vmatpush1.xpose.msra.mxu0 0.0
        %1987 = vmatprep.subr.mxu0 0.0
        %1988 = vmatpush1.xpose.msra.mxu0 0.0
        %1989 = vmatprep.subr.mxu0 0.0
        %1990 = vmatpush1.xpose.msra.mxu0 0.0
        %1991 = vmatprep.subr.mxu0 0.0
        %1992 = vmatpush1.xpose.msra.mxu0 0.0
        %1993 = vmatprep.subr.mxu0 0.0
        %1994 = vmatpush1.xpose.msra.mxu0 0.0
        %1995 = vmatprep.subr.mxu0 0.0
        %1996 = vmatpush1.xpose.msra.mxu0 %v1963
        %1997 = vmatprep.subr.mxu0 0.0
        %1998 = vmatpush2.xpose.msra.mxu0 0.0
        %1999 = vmatprep.subr.mxu0 0.0
        %2000 = vmatpush2.xpose.msra.mxu0 0.0
        %2001 = vmatprep.subr.mxu0 0.0
        %2002 = vmatpush2.xpose.msra.mxu0 0.0
        %2003 = vmatprep.subr.mxu0 0.0
        %2004 = vmatpush2.xpose.msra.mxu0 0.0
        %2005 = vmatprep.subr.mxu0 0.0
        %2006 = vmatpush2.xpose.msra.mxu0 0.0
        %2007 = vmatprep.subr.mxu0 0.0
        %2008 = vmatpush2.xpose.msra.mxu0 0.0
        %2009 = vmatprep.subr.mxu0 0.0
        %2010 = vmatpush2.xpose.msra.mxu0 0.0
        %2011 = vmatprep.subr.mxu0 0.0
        %2012 = vmatpush2.xpose.msra.mxu0 0.0
        %2013 = vmatprep.subr.mxu0 0.0
        %2014 = vmatpush2.xpose.msra.mxu0 0.0
        %2015 = vmatprep.subr.mxu0 0.0
        %2016 = vmatpush2.xpose.msra.mxu0 0.0
        %2017 = vmatprep.subr.mxu0 0.0
        %2018 = vmatpush2.xpose.msra.mxu0 0.0
        %2019 = vmatprep.subr.mxu0 0.0
        %2020 = vmatpush2.xpose.msra.mxu0 0.0
        %2021 = vmatprep.subr.mxu0 0.0
        %2022 = vmatpush2.xpose.msra.mxu0 0.0
        %2023 = vmatprep.subr.mxu0 0.0
        %2024 = vmatpush2.xpose.msra.mxu0 0.0
        %2025 = vmatprep.subr.mxu0 0.0
        %2026 = vmatpush2.xpose.msra.mxu0 0.0
        %2027 = vmatprep.subr.mxu0 0.0
        %2028 = vmatpush2.xpose.msra.mxu0 0.0
        %2029 = vmatprep.mubr.f32.mxu0 0.0
        %2030 = vmatmul.mubr.f32.gmra.mxu0 %v1961
        %v2031 = vpop.f32.mrf.mxu0
        %v2032 = vadd.f32 0.0, %v2031
        %v2033 = vpop.f32.mrf.mxu0
        %2034 = vdwg.mxu0
        %2035 = vrot.lane.b32.xlu0 %v1806, 96
        %v2036 = vpop.permute.xlu0 %2035
        %v2037 = vsel %vm685, %v1806, 0
        %v2039 = vsel %vm685, %v2036, 0
        %2041 = vmatprep.subr.mxu0 0.0
        %2042 = vmatpush1.xpose.msra.mxu0 0.0
        %2043 = vmatprep.subr.mxu0 0.0
        %2044 = vmatpush1.xpose.msra.mxu0 0.0
        %2045 = vmatprep.subr.mxu0 0.0
        %2046 = vmatpush1.xpose.msra.mxu0 0.0
        %2047 = vmatprep.subr.mxu0 0.0
        %2048 = vmatpush1.xpose.msra.mxu0 0.0
        %2049 = vmatprep.subr.mxu0 0.0
        %2050 = vmatpush1.xpose.msra.mxu0 0.0
        %2051 = vmatprep.subr.mxu0 0.0
        %2052 = vmatpush1.xpose.msra.mxu0 0.0
        %2053 = vmatprep.subr.mxu0 0.0
        %2054 = vmatpush1.xpose.msra.mxu0 0.0
        %2055 = vmatprep.subr.mxu0 0.0
        %2056 = vmatpush1.xpose.msra.mxu0 0.0
        %2057 = vmatprep.subr.mxu0 0.0
        %2058 = vmatpush1.xpose.msra.mxu0 0.0
        %2059 = vmatprep.subr.mxu0 0.0
        %2060 = vmatpush1.xpose.msra.mxu0 0.0
        %2061 = vmatprep.subr.mxu0 0.0
        %2062 = vmatpush1.xpose.msra.mxu0 0.0
        %2063 = vmatprep.subr.mxu0 0.0
        %2064 = vmatpush1.xpose.msra.mxu0 0.0
        %2065 = vmatprep.subr.mxu0 0.0
        %2066 = vmatpush1.xpose.msra.mxu0 0.0
        %2067 = vmatprep.subr.mxu0 0.0
        %2068 = vmatpush1.xpose.msra.mxu0 0.0
        %2069 = vmatprep.subr.mxu0 0.0
        %2070 = vmatpush1.xpose.msra.mxu0 0.0
        %2071 = vmatprep.subr.mxu0 0.0
        %2072 = vmatpush1.xpose.msra.mxu0 %v2039
        %2073 = vmatprep.subr.mxu0 0.0
        %2074 = vmatpush2.xpose.msra.mxu0 0.0
        %2075 = vmatprep.subr.mxu0 0.0
        %2076 = vmatpush2.xpose.msra.mxu0 0.0
        %2077 = vmatprep.subr.mxu0 0.0
        %2078 = vmatpush2.xpose.msra.mxu0 0.0
        %2079 = vmatprep.subr.mxu0 0.0
        %2080 = vmatpush2.xpose.msra.mxu0 0.0
        %2081 = vmatprep.subr.mxu0 0.0
        %2082 = vmatpush2.xpose.msra.mxu0 0.0
        %2083 = vmatprep.subr.mxu0 0.0
        %2084 = vmatpush2.xpose.msra.mxu0 0.0
        %2085 = vmatprep.subr.mxu0 0.0
        %2086 = vmatpush2.xpose.msra.mxu0 0.0
        %2087 = vmatprep.subr.mxu0 0.0
        %2088 = vmatpush2.xpose.msra.mxu0 0.0
        %2089 = vmatprep.subr.mxu0 0.0
        %2090 = vmatpush2.xpose.msra.mxu0 0.0
        %2091 = vmatprep.subr.mxu0 0.0
        %2092 = vmatpush2.xpose.msra.mxu0 0.0
        %2093 = vmatprep.subr.mxu0 0.0
        %2094 = vmatpush2.xpose.msra.mxu0 0.0
        %2095 = vmatprep.subr.mxu0 0.0
        %2096 = vmatpush2.xpose.msra.mxu0 0.0
        %2097 = vmatprep.subr.mxu0 0.0
        %2098 = vmatpush2.xpose.msra.mxu0 0.0
        %2099 = vmatprep.subr.mxu0 0.0
        %2100 = vmatpush2.xpose.msra.mxu0 0.0
        %2101 = vmatprep.subr.mxu0 0.0
        %2102 = vmatpush2.xpose.msra.mxu0 0.0
        %2103 = vmatprep.subr.mxu0 0.0
        %2104 = vmatpush2.xpose.msra.mxu0 0.0
        %2105 = vmatprep.mubr.f32.mxu0 0.0
        %2106 = vmatmul.mubr.f32.gmra.mxu0 %v2037
        %v2107 = vpop.f32.mrf.mxu0
        %v2108 = vadd.f32 0.0, %v2107
        %v2109 = vpop.f32.mrf.mxu0
        %2110 = vdwg.mxu0
        %v2111 = vmul.f32 %v1880, 0.35355338
        %v2112 = vmul.f32 %v1956, 0.35355338
        %v2113 = vmul.f32 %v2032, 0.35355338
        %v2114 = vmul.f32 %v2108, 0.35355338
        %v2115 = vsel %vm993, %v2111, -inf
        %v2116 = vsel %vm993, %v2112, -inf
        %v2117 = vsel %vm993, %v2113, -inf
        %v2118 = vsel %vm993, %v2114, -inf
        %v2119 = vsel %vm685, %v2115, -inf
        %2120 = vmax.xlane.f32.xlu0 %v2119
        %v2121 = vpop.xlane.xlu0 %2120
        %v2122 = vsel %vm685, %v2116, -inf
        %2123 = vmax.xlane.f32.xlu0 %v2122
        %v2124 = vpop.xlane.xlu0 %2123
        %v2125 = vsel %vm685, %v2117, -inf
        %2126 = vmax.xlane.f32.xlu0 %v2125
        %v2127 = vpop.xlane.xlu0 %2126
        %v2128 = vsel %vm685, %v2118, -inf
        %2129 = vmax.xlane.f32.xlu0 %v2128
        %v2130 = vpop.xlane.xlu0 %2129
        %v2131 = vsub.f32 %v2115, %v2121
        %v2132 = vsub.f32 %v2116, %v2124
        %v2133 = vsub.f32 %v2117, %v2127
        %v2134 = vsub.f32 %v2118, %v2130
        %v2135 = vmul.f32 %v2131, 1.442695
        %v2136 = vpow.pop %v2135
        %v2137 = vmul.f32 %v2132, 1.442695
        %v2138 = vpow.pop %v2137
        %v2139 = vmul.f32 %v2133, 1.442695
        %v2140 = vpow.pop %v2139
        %v2141 = vmul.f32 %v2134, 1.442695
        %v2142 = vpow.pop %v2141
        %v2143 = vsel %vm685, %v2136, 0.0
        %2144 = vadd.xlane.f32.xlu0 %v2143
        %v2145 = vpop.xlane.xlu0 %2144
        %v2146 = vsel %vm685, %v2138, 0.0
        %2147 = vadd.xlane.f32.xlu0 %v2146
        %v2148 = vpop.xlane.xlu0 %2147
        %v2149 = vsel %vm685, %v2140, 0.0
        %2150 = vadd.xlane.f32.xlu0 %v2149
        %v2151 = vpop.xlane.xlu0 %2150
        %v2152 = vsel %vm685, %v2142, 0.0
        %2153 = vadd.xlane.f32.xlu0 %v2152
        %v2154 = vpop.xlane.xlu0 %2153
        %v2155 = vrcp.pop %v2145
        %v2156 = vmul.f32 %v2136, %v2155
        %v2157 = vrcp.pop %v2148
        %v2158 = vmul.f32 %v2138, %v2157
        %v2159 = vrcp.pop %v2151
        %v2160 = vmul.f32 %v2140, %v2159
        %v2161 = vrcp.pop %v2154
        %v2162 = vmul.f32 %v2142, %v2161
        %s2163 = scalar_lea.vmem %s546, 32 [#allocation9]
        %2164 = vst.msk [vmem:[%s2163] sm:$0xff] %vm685, %v2156
        %2165 = vst.msk [vmem:[%s2163 + $0x8] sm:$0xff] %vm685, %v2158
        %2166 = vst.msk [vmem:[%s2163 + $0x10] sm:$0xff] %vm685, %v2160
        %2167 = vst.msk [vmem:[%s2163 + $0x18] sm:$0xff] %vm685, %v2162
        %2168 = vrot.lane.b32.xlu0 %v1797, 64
        %v2169 = vpop.permute.xlu0 %2168
        %v2172 = vsel %vm685, %v2156, 0
        %2174 = vmatprep.subr.mxu0 0.0
        %2175 = vmatpush1.msra.mxu0 0.0
        %2176 = vmatprep.subr.mxu0 0.0
        %2177 = vmatpush1.msra.mxu0 0.0
        %2178 = vmatprep.subr.mxu0 0.0
        %2179 = vmatpush1.msra.mxu0 0.0
        %2180 = vmatprep.subr.mxu0 0.0
        %2181 = vmatpush1.msra.mxu0 0.0
        %2182 = vmatprep.subr.mxu0 0.0
        %2183 = vmatpush1.msra.mxu0 0.0
        %2184 = vmatprep.subr.mxu0 0.0
        %2185 = vmatpush1.msra.mxu0 0.0
        %2186 = vmatprep.subr.mxu0 0.0
        %2187 = vmatpush1.msra.mxu0 0.0
        %2188 = vmatprep.subr.mxu0 0.0
        %2189 = vmatpush1.msra.mxu0 0.0
        %2190 = vmatprep.subr.mxu0 0.0
        %2191 = vmatpush1.msra.mxu0 0.0
        %2192 = vmatprep.subr.mxu0 0.0
        %2193 = vmatpush1.msra.mxu0 0.0
        %2194 = vmatprep.subr.mxu0 0.0
        %2195 = vmatpush1.msra.mxu0 0.0
        %2196 = vmatprep.subr.mxu0 0.0
        %2197 = vmatpush1.msra.mxu0 0.0
        %2198 = vmatprep.subr.mxu0 0.0
        %2199 = vmatpush1.msra.mxu0 0.0
        %2200 = vmatprep.subr.mxu0 0.0
        %2201 = vmatpush1.msra.mxu0 0.0
        %2202 = vmatprep.subr.mxu0 0.0
        %2203 = vmatpush1.msra.mxu0 0.0
        %2204 = vmatprep.subr.mxu0 0.0
        %2205 = vmatpush1.msra.mxu0 %v2169
        %2206 = vmatprep.subr.mxu0 0.0
        %2207 = vmatpush2.msra.mxu0 0.0
        %2208 = vmatprep.subr.mxu0 0.0
        %2209 = vmatpush2.msra.mxu0 0.0
        %2210 = vmatprep.subr.mxu0 0.0
        %2211 = vmatpush2.msra.mxu0 0.0
        %2212 = vmatprep.subr.mxu0 0.0
        %2213 = vmatpush2.msra.mxu0 0.0
        %2214 = vmatprep.subr.mxu0 0.0
        %2215 = vmatpush2.msra.mxu0 0.0
        %2216 = vmatprep.subr.mxu0 0.0
        %2217 = vmatpush2.msra.mxu0 0.0
        %2218 = vmatprep.subr.mxu0 0.0
        %2219 = vmatpush2.msra.mxu0 0.0
        %2220 = vmatprep.subr.mxu0 0.0
        %2221 = vmatpush2.msra.mxu0 0.0
        %2222 = vmatprep.subr.mxu0 0.0
        %2223 = vmatpush2.msra.mxu0 0.0
        %2224 = vmatprep.subr.mxu0 0.0
        %2225 = vmatpush2.msra.mxu0 0.0
        %2226 = vmatprep.subr.mxu0 0.0
        %2227 = vmatpush2.msra.mxu0 0.0
        %2228 = vmatprep.subr.mxu0 0.0
        %2229 = vmatpush2.msra.mxu0 0.0
        %2230 = vmatprep.subr.mxu0 0.0
        %2231 = vmatpush2.msra.mxu0 0.0
        %2232 = vmatprep.subr.mxu0 0.0
        %2233 = vmatpush2.msra.mxu0 0.0
        %2234 = vmatprep.subr.mxu0 0.0
        %2235 = vmatpush2.msra.mxu0 0.0
        %2236 = vmatprep.subr.mxu0 0.0
        %2237 = vmatpush2.msra.mxu0 0.0
        %2238 = vmatprep.mubr.f32.mxu0 0.0
        %2239 = vmatmul.mubr.f32.gmra.mxu0 %v2172
        %v2240 = vpop.f32.mrf.mxu0
        %v2241 = vadd.f32 0.0, %v2240
        %v2242 = vpop.f32.mrf.mxu0
        %2243 = vdwg.mxu0
        %2244 = vrot.lane.b32.xlu0 %v1802, 64
        %v2245 = vpop.permute.xlu0 %2244
        %v2248 = vsel %vm685, %v2158, 0
        %2250 = vmatprep.subr.mxu0 0.0
        %2251 = vmatpush1.msra.mxu0 0.0
        %2252 = vmatprep.subr.mxu0 0.0
        %2253 = vmatpush1.msra.mxu0 0.0
        %2254 = vmatprep.subr.mxu0 0.0
        %2255 = vmatpush1.msra.mxu0 0.0
        %2256 = vmatprep.subr.mxu0 0.0
        %2257 = vmatpush1.msra.mxu0 0.0
        %2258 = vmatprep.subr.mxu0 0.0
        %2259 = vmatpush1.msra.mxu0 0.0
        %2260 = vmatprep.subr.mxu0 0.0
        %2261 = vmatpush1.msra.mxu0 0.0
        %2262 = vmatprep.subr.mxu0 0.0
        %2263 = vmatpush1.msra.mxu0 0.0
        %2264 = vmatprep.subr.mxu0 0.0
        %2265 = vmatpush1.msra.mxu0 0.0
        %2266 = vmatprep.subr.mxu0 0.0
        %2267 = vmatpush1.msra.mxu0 0.0
        %2268 = vmatprep.subr.mxu0 0.0
        %2269 = vmatpush1.msra.mxu0 0.0
        %2270 = vmatprep.subr.mxu0 0.0
        %2271 = vmatpush1.msra.mxu0 0.0
        %2272 = vmatprep.subr.mxu0 0.0
        %2273 = vmatpush1.msra.mxu0 0.0
        %2274 = vmatprep.subr.mxu0 0.0
        %2275 = vmatpush1.msra.mxu0 0.0
        %2276 = vmatprep.subr.mxu0 0.0
        %2277 = vmatpush1.msra.mxu0 0.0
        %2278 = vmatprep.subr.mxu0 0.0
        %2279 = vmatpush1.msra.mxu0 0.0
        %2280 = vmatprep.subr.mxu0 0.0
        %2281 = vmatpush1.msra.mxu0 %v2245
        %2282 = vmatprep.subr.mxu0 0.0
        %2283 = vmatpush2.msra.mxu0 0.0
        %2284 = vmatprep.subr.mxu0 0.0
        %2285 = vmatpush2.msra.mxu0 0.0
        %2286 = vmatprep.subr.mxu0 0.0
        %2287 = vmatpush2.msra.mxu0 0.0
        %2288 = vmatprep.subr.mxu0 0.0
        %2289 = vmatpush2.msra.mxu0 0.0
        %2290 = vmatprep.subr.mxu0 0.0
        %2291 = vmatpush2.msra.mxu0 0.0
        %2292 = vmatprep.subr.mxu0 0.0
        %2293 = vmatpush2.msra.mxu0 0.0
        %2294 = vmatprep.subr.mxu0 0.0
        %2295 = vmatpush2.msra.mxu0 0.0
        %2296 = vmatprep.subr.mxu0 0.0
        %2297 = vmatpush2.msra.mxu0 0.0
        %2298 = vmatprep.subr.mxu0 0.0
        %2299 = vmatpush2.msra.mxu0 0.0
        %2300 = vmatprep.subr.mxu0 0.0
        %2301 = vmatpush2.msra.mxu0 0.0
        %2302 = vmatprep.subr.mxu0 0.0
        %2303 = vmatpush2.msra.mxu0 0.0
        %2304 = vmatprep.subr.mxu0 0.0
        %2305 = vmatpush2.msra.mxu0 0.0
        %2306 = vmatprep.subr.mxu0 0.0
        %2307 = vmatpush2.msra.mxu0 0.0
        %2308 = vmatprep.subr.mxu0 0.0
        %2309 = vmatpush2.msra.mxu0 0.0
        %2310 = vmatprep.subr.mxu0 0.0
        %2311 = vmatpush2.msra.mxu0 0.0
        %2312 = vmatprep.subr.mxu0 0.0
        %2313 = vmatpush2.msra.mxu0 0.0
        %2314 = vmatprep.mubr.f32.mxu0 0.0
        %2315 = vmatmul.mubr.f32.gmra.mxu0 %v2248
        %v2316 = vpop.f32.mrf.mxu0
        %v2317 = vadd.f32 0.0, %v2316
        %v2318 = vpop.f32.mrf.mxu0
        %2319 = vdwg.mxu0
        %2320 = vrot.lane.b32.xlu0 %v1804, 64
        %v2321 = vpop.permute.xlu0 %2320
        %v2324 = vsel %vm685, %v2160, 0
        %2326 = vmatprep.subr.mxu0 0.0
        %2327 = vmatpush1.msra.mxu0 0.0
        %2328 = vmatprep.subr.mxu0 0.0
        %2329 = vmatpush1.msra.mxu0 0.0
        %2330 = vmatprep.subr.mxu0 0.0
        %2331 = vmatpush1.msra.mxu0 0.0
        %2332 = vmatprep.subr.mxu0 0.0
        %2333 = vmatpush1.msra.mxu0 0.0
        %2334 = vmatprep.subr.mxu0 0.0
        %2335 = vmatpush1.msra.mxu0 0.0
        %2336 = vmatprep.subr.mxu0 0.0
        %2337 = vmatpush1.msra.mxu0 0.0
        %2338 = vmatprep.subr.mxu0 0.0
        %2339 = vmatpush1.msra.mxu0 0.0
        %2340 = vmatprep.subr.mxu0 0.0
        %2341 = vmatpush1.msra.mxu0 0.0
        %2342 = vmatprep.subr.mxu0 0.0
        %2343 = vmatpush1.msra.mxu0 0.0
        %2344 = vmatprep.subr.mxu0 0.0
        %2345 = vmatpush1.msra.mxu0 0.0
        %2346 = vmatprep.subr.mxu0 0.0
        %2347 = vmatpush1.msra.mxu0 0.0
        %2348 = vmatprep.subr.mxu0 0.0
        %2349 = vmatpush1.msra.mxu0 0.0
        %2350 = vmatprep.subr.mxu0 0.0
        %2351 = vmatpush1.msra.mxu0 0.0
        %2352 = vmatprep.subr.mxu0 0.0
        %2353 = vmatpush1.msra.mxu0 0.0
        %2354 = vmatprep.subr.mxu0 0.0
        %2355 = vmatpush1.msra.mxu0 0.0
        %2356 = vmatprep.subr.mxu0 0.0
        %2357 = vmatpush1.msra.mxu0 %v2321
        %2358 = vmatprep.subr.mxu0 0.0
        %2359 = vmatpush2.msra.mxu0 0.0
        %2360 = vmatprep.subr.mxu0 0.0
        %2361 = vmatpush2.msra.mxu0 0.0
        %2362 = vmatprep.subr.mxu0 0.0
        %2363 = vmatpush2.msra.mxu0 0.0
        %2364 = vmatprep.subr.mxu0 0.0
        %2365 = vmatpush2.msra.mxu0 0.0
        %2366 = vmatprep.subr.mxu0 0.0
        %2367 = vmatpush2.msra.mxu0 0.0
        %2368 = vmatprep.subr.mxu0 0.0
        %2369 = vmatpush2.msra.mxu0 0.0
        %2370 = vmatprep.subr.mxu0 0.0
        %2371 = vmatpush2.msra.mxu0 0.0
        %2372 = vmatprep.subr.mxu0 0.0
        %2373 = vmatpush2.msra.mxu0 0.0
        %2374 = vmatprep.subr.mxu0 0.0
        %2375 = vmatpush2.msra.mxu0 0.0
        %2376 = vmatprep.subr.mxu0 0.0
        %2377 = vmatpush2.msra.mxu0 0.0
        %2378 = vmatprep.subr.mxu0 0.0
        %2379 = vmatpush2.msra.mxu0 0.0
        %2380 = vmatprep.subr.mxu0 0.0
        %2381 = vmatpush2.msra.mxu0 0.0
        %2382 = vmatprep.subr.mxu0 0.0
        %2383 = vmatpush2.msra.mxu0 0.0
        %2384 = vmatprep.subr.mxu0 0.0
        %2385 = vmatpush2.msra.mxu0 0.0
        %2386 = vmatprep.subr.mxu0 0.0
        %2387 = vmatpush2.msra.mxu0 0.0
        %2388 = vmatprep.subr.mxu0 0.0
        %2389 = vmatpush2.msra.mxu0 0.0
        %2390 = vmatprep.mubr.f32.mxu0 0.0
        %2391 = vmatmul.mubr.f32.gmra.mxu0 %v2324
        %v2392 = vpop.f32.mrf.mxu0
        %v2393 = vadd.f32 0.0, %v2392
        %v2394 = vpop.f32.mrf.mxu0
        %2395 = vdwg.mxu0
        %2396 = vrot.lane.b32.xlu0 %v1806, 64
        %v2397 = vpop.permute.xlu0 %2396
        %v2400 = vsel %vm685, %v2162, 0
        %2402 = vmatprep.subr.mxu0 0.0
        %2403 = vmatpush1.msra.mxu0 0.0
        %2404 = vmatprep.subr.mxu0 0.0
        %2405 = vmatpush1.msra.mxu0 0.0
        %2406 = vmatprep.subr.mxu0 0.0
        %2407 = vmatpush1.msra.mxu0 0.0
        %2408 = vmatprep.subr.mxu0 0.0
        %2409 = vmatpush1.msra.mxu0 0.0
        %2410 = vmatprep.subr.mxu0 0.0
        %2411 = vmatpush1.msra.mxu0 0.0
        %2412 = vmatprep.subr.mxu0 0.0
        %2413 = vmatpush1.msra.mxu0 0.0
        %2414 = vmatprep.subr.mxu0 0.0
        %2415 = vmatpush1.msra.mxu0 0.0
        %2416 = vmatprep.subr.mxu0 0.0
        %2417 = vmatpush1.msra.mxu0 0.0
        %2418 = vmatprep.subr.mxu0 0.0
        %2419 = vmatpush1.msra.mxu0 0.0
        %2420 = vmatprep.subr.mxu0 0.0
        %2421 = vmatpush1.msra.mxu0 0.0
        %2422 = vmatprep.subr.mxu0 0.0
        %2423 = vmatpush1.msra.mxu0 0.0
        %2424 = vmatprep.subr.mxu0 0.0
        %2425 = vmatpush1.msra.mxu0 0.0
        %2426 = vmatprep.subr.mxu0 0.0
        %2427 = vmatpush1.msra.mxu0 0.0
        %2428 = vmatprep.subr.mxu0 0.0
        %2429 = vmatpush1.msra.mxu0 0.0
        %2430 = vmatprep.subr.mxu0 0.0
        %2431 = vmatpush1.msra.mxu0 0.0
        %2432 = vmatprep.subr.mxu0 0.0
        %2433 = vmatpush1.msra.mxu0 %v2397
        %2434 = vmatprep.subr.mxu0 0.0
        %2435 = vmatpush2.msra.mxu0 0.0
        %2436 = vmatprep.subr.mxu0 0.0
        %2437 = vmatpush2.msra.mxu0 0.0
        %2438 = vmatprep.subr.mxu0 0.0
        %2439 = vmatpush2.msra.mxu0 0.0
        %2440 = vmatprep.subr.mxu0 0.0
        %2441 = vmatpush2.msra.mxu0 0.0
        %2442 = vmatprep.subr.mxu0 0.0
        %2443 = vmatpush2.msra.mxu0 0.0
        %2444 = vmatprep.subr.mxu0 0.0
        %2445 = vmatpush2.msra.mxu0 0.0
        %2446 = vmatprep.subr.mxu0 0.0
        %2447 = vmatpush2.msra.mxu0 0.0
        %2448 = vmatprep.subr.mxu0 0.0
        %2449 = vmatpush2.msra.mxu0 0.0
        %2450 = vmatprep.subr.mxu0 0.0
        %2451 = vmatpush2.msra.mxu0 0.0
        %2452 = vmatprep.subr.mxu0 0.0
        %2453 = vmatpush2.msra.mxu0 0.0
        %2454 = vmatprep.subr.mxu0 0.0
        %2455 = vmatpush2.msra.mxu0 0.0
        %2456 = vmatprep.subr.mxu0 0.0
        %2457 = vmatpush2.msra.mxu0 0.0
        %2458 = vmatprep.subr.mxu0 0.0
        %2459 = vmatpush2.msra.mxu0 0.0
        %2460 = vmatprep.subr.mxu0 0.0
        %2461 = vmatpush2.msra.mxu0 0.0
        %2462 = vmatprep.subr.mxu0 0.0
        %2463 = vmatpush2.msra.mxu0 0.0
        %2464 = vmatprep.subr.mxu0 0.0
        %2465 = vmatpush2.msra.mxu0 0.0
        %2466 = vmatprep.mubr.f32.mxu0 0.0
        %2467 = vmatmul.mubr.f32.gmra.mxu0 %v2400
        %v2468 = vpop.f32.mrf.mxu0
        %v2469 = vadd.f32 0.0, %v2468
        %v2470 = vpop.f32.mrf.mxu0
        %2471 = vdwg.mxu0
        %2473 = vrot.lane.b32.xlu0 %v2317, 8
        %v2474 = vpop.permute.xlu0 %2473
        %2477 = vrot.lane.b32.xlu0 %v2393, 16
        %v2478 = vpop.permute.xlu0 %2477
        %2481 = vrot.lane.b32.xlu0 %v2469, 24
        %v2482 = vpop.permute.xlu0 %2481
        %v2484 = vsel %vm685, %v2241, %v2474
        %v2485 = vsel %vm1363, %v2484, %v2478
        %v2486 = vsel %vm1365, %v2485, %v2482
        %s2487 = scalar_lea.vmem %s5, 32
        %v2488 = vld [vmem:[%s2487] sm:$0xff]
        %v2489 = vld [vmem:[%s2487 + $0x8] sm:$0xff]
        %v2490 = vld [vmem:[%s2487 + $0x10] sm:$0xff]
        %v2491 = vld [vmem:[%s2487 + $0x18] sm:$0xff]
        %s2492 = scalar_lea.vmem %s6, 1
        %v2493 = vld [vmem:[%s2492] sm:$0x1]
        %v2495 = vlaneseq
        %v2496 = vshrl.u32 %v2495, 7
        %v2497 = vsub.s32 0, %v2496
        %v2498 = vrot.slane %v2493, %v2497
        %v2501 = vsel %vm559, %v2486, 0
        %2503 = vmatprep.subr.mxu0 0.0
        %2504 = vmatpush1.msra.mxu0 0.0
        %2505 = vmatprep.subr.mxu0 0.0
        %2506 = vmatpush1.msra.mxu0 0.0
        %2507 = vmatprep.subr.mxu0 0.0
        %2508 = vmatpush1.msra.mxu0 0.0
        %2509 = vmatprep.subr.mxu0 0.0
        %2510 = vmatpush1.msra.mxu0 0.0
        %2511 = vmatprep.subr.mxu0 0.0
        %2512 = vmatpush1.msra.mxu0 0.0
        %2513 = vmatprep.subr.mxu0 0.0
        %2514 = vmatpush1.msra.mxu0 0.0
        %2515 = vmatprep.subr.mxu0 0.0
        %2516 = vmatpush1.msra.mxu0 0.0
        %2517 = vmatprep.subr.mxu0 0.0
        %2518 = vmatpush1.msra.mxu0 0.0
        %2519 = vmatprep.subr.mxu0 0.0
        %2520 = vmatpush1.msra.mxu0 0.0
        %2521 = vmatprep.subr.mxu0 0.0
        %2522 = vmatpush1.msra.mxu0 0.0
        %2523 = vmatprep.subr.mxu0 0.0
        %2524 = vmatpush1.msra.mxu0 0.0
        %2525 = vmatprep.subr.mxu0 0.0
        %2526 = vmatpush1.msra.mxu0 0.0
        %2527 = vmatprep.subr.mxu0 0.0
        %2528 = vmatpush1.msra.mxu0 %v2491
        %2529 = vmatprep.subr.mxu0 0.0
        %2530 = vmatpush1.msra.mxu0 %v2490
        %2531 = vmatprep.subr.mxu0 0.0
        %2532 = vmatpush1.msra.mxu0 %v2489
        %2533 = vmatprep.subr.mxu0 0.0
        %2534 = vmatpush1.msra.mxu0 %v2488
        %2535 = vmatprep.subr.mxu0 0.0
        %2536 = vmatpush2.msra.mxu0 0.0
        %2537 = vmatprep.subr.mxu0 0.0
        %2538 = vmatpush2.msra.mxu0 0.0
        %2539 = vmatprep.subr.mxu0 0.0
        %2540 = vmatpush2.msra.mxu0 0.0
        %2541 = vmatprep.subr.mxu0 0.0
        %2542 = vmatpush2.msra.mxu0 0.0
        %2543 = vmatprep.subr.mxu0 0.0
        %2544 = vmatpush2.msra.mxu0 0.0
        %2545 = vmatprep.subr.mxu0 0.0
        %2546 = vmatpush2.msra.mxu0 0.0
        %2547 = vmatprep.subr.mxu0 0.0
        %2548 = vmatpush2.msra.mxu0 0.0
        %2549 = vmatprep.subr.mxu0 0.0
        %2550 = vmatpush2.msra.mxu0 0.0
        %2551 = vmatprep.subr.mxu0 0.0
        %2552 = vmatpush2.msra.mxu0 0.0
        %2553 = vmatprep.subr.mxu0 0.0
        %2554 = vmatpush2.msra.mxu0 0.0
        %2555 = vmatprep.subr.mxu0 0.0
        %2556 = vmatpush2.msra.mxu0 0.0
        %2557 = vmatprep.subr.mxu0 0.0
        %2558 = vmatpush2.msra.mxu0 0.0
        %2559 = vmatprep.subr.mxu0 0.0
        %2560 = vmatpush2.msra.mxu0 0.0
        %2561 = vmatprep.subr.mxu0 0.0
        %2562 = vmatpush2.msra.mxu0 0.0
        %2563 = vmatprep.subr.mxu0 0.0
        %2564 = vmatpush2.msra.mxu0 0.0
        %2565 = vmatprep.subr.mxu0 0.0
        %2566 = vmatpush2.msra.mxu0 0.0
        %2567 = vmatprep.mubr.f32.mxu0 0.0
        %2568 = vmatmul.mubr.f32.gmra.mxu0 %v2501
        %v2569 = vpop.f32.mrf.mxu0
        %v2570 = vadd.f32 %v2498, %v2569
        %v2571 = vpop.f32.mrf.mxu0
        %2572 = vdwg.mxu0
        %s2573 = scalar_lea.vmem %s539, 8 [#allocation7]
        %2574 = vst.msk [vmem:[%s2573] sm:$0xff] %vm559, %v2570
        %v2575 = vadd.f32 %v1669, %v2570
        %v2576 = vsel %vm559, %v2575, 0.0
        %2577 = vadd.xlane.f32.xlu0 %v2576
        %v2578 = vpop.xlane.xlu0 %2577
        %v2579 = vmul.f32 %v2578, %v563
        %v2580 = vsub.f32 %v2575, %v2579
        %v2581 = vmul.f32 %v2580, %v2580
        %v2582 = vsel %vm559, %v2581, 0.0
        %2583 = vadd.xlane.f32.xlu0 %v2582
        %v2584 = vpop.xlane.xlu0 %2583
        %v2585 = vmul.f32 %v2584, %v570
        %v2586 = vrsqrt.pop %v2585
        %v2587 = vmul.f32 %v2585, %v2586
        %vm2588 = vcmp.eq.f32.partialorder %v2585, inf
        %v2589 = vsel %vm2588, %v2585, %v2587
        %vm2590 = vcmp.eq.f32.partialorder %v2585, 0.0
        %v2591 = vand.u32 %v2585, 2147483648
        %v2592 = vsel %vm2590, %v2591, %v2589
        %v2593 = vlaneseq
        %v2594 = vshrl.u32 %v2593, 7
        %v2595 = vsub.s32 2, %v2594
        %v2596 = vrot.slane %v1702, %v2595
        %v2597 = vmul.f32 %v2596, %v2580
        %v2598 = vadd.f32 %v2592, 1e-05
        %v2599 = vrcp.pop %v2598
        %v2600 = vmul.f32 %v2597, %v2599
        %v2601 = vlaneseq
        %v2602 = vshrl.u32 %v2601, 7
        %v2603 = vsub.s32 3, %v2602
        %v2604 = vrot.slane %v1702, %v2603
        %v2605 = vadd.f32 %v2600, %v2604
        %s2606 = scalar_lea.vmem %s7, 32
        %v2607 = vld [vmem:[%s2606] sm:$0xff]
        %v2608 = vld [vmem:[%s2606 + $0x8] sm:$0xff]
        %v2609 = vld [vmem:[%s2606 + $0x10] sm:$0xff]
        %v2610 = vld [vmem:[%s2606 + $0x18] sm:$0xff]
        %s2611 = scalar_lea.vmem %s8, 1
        %v2612 = vld [vmem:[%s2611] sm:$0x1]
        %v2614 = vlaneseq
        %v2615 = vshrl.u32 %v2614, 7
        %v2616 = vsub.s32 0, %v2615
        %v2617 = vrot.slane %v2612, %v2616
        %v2620 = vsel %vm559, %v2605, 0
        %2622 = vmatprep.subr.mxu0 0.0
        %2623 = vmatpush1.msra.mxu0 0.0
        %2624 = vmatprep.subr.mxu0 0.0
        %2625 = vmatpush1.msra.mxu0 0.0
        %2626 = vmatprep.subr.mxu0 0.0
        %2627 = vmatpush1.msra.mxu0 0.0
        %2628 = vmatprep.subr.mxu0 0.0
        %2629 = vmatpush1.msra.mxu0 0.0
        %2630 = vmatprep.subr.mxu0 0.0
        %2631 = vmatpush1.msra.mxu0 0.0
        %2632 = vmatprep.subr.mxu0 0.0
        %2633 = vmatpush1.msra.mxu0 0.0
        %2634 = vmatprep.subr.mxu0 0.0
        %2635 = vmatpush1.msra.mxu0 0.0
        %2636 = vmatprep.subr.mxu0 0.0
        %2637 = vmatpush1.msra.mxu0 0.0
        %2638 = vmatprep.subr.mxu0 0.0
        %2639 = vmatpush1.msra.mxu0 0.0
        %2640 = vmatprep.subr.mxu0 0.0
        %2641 = vmatpush1.msra.mxu0 0.0
        %2642 = vmatprep.subr.mxu0 0.0
        %2643 = vmatpush1.msra.mxu0 0.0
        %2644 = vmatprep.subr.mxu0 0.0
        %2645 = vmatpush1.msra.mxu0 0.0
        %2646 = vmatprep.subr.mxu0 0.0
        %2647 = vmatpush1.msra.mxu0 %v2610
        %2648 = vmatprep.subr.mxu0 0.0
        %2649 = vmatpush1.msra.mxu0 %v2609
        %2650 = vmatprep.subr.mxu0 0.0
        %2651 = vmatpush1.msra.mxu0 %v2608
        %2652 = vmatprep.subr.mxu0 0.0
        %2653 = vmatpush1.msra.mxu0 %v2607
        %2654 = vmatprep.subr.mxu0 0.0
        %2655 = vmatpush2.msra.mxu0 0.0
        %2656 = vmatprep.subr.mxu0 0.0
        %2657 = vmatpush2.msra.mxu0 0.0
        %2658 = vmatprep.subr.mxu0 0.0
        %2659 = vmatpush2.msra.mxu0 0.0
        %2660 = vmatprep.subr.mxu0 0.0
        %2661 = vmatpush2.msra.mxu0 0.0
        %2662 = vmatprep.subr.mxu0 0.0
        %2663 = vmatpush2.msra.mxu0 0.0
        %2664 = vmatprep.subr.mxu0 0.0
        %2665 = vmatpush2.msra.mxu0 0.0
        %2666 = vmatprep.subr.mxu0 0.0
        %2667 = vmatpush2.msra.mxu0 0.0
        %2668 = vmatprep.subr.mxu0 0.0
        %2669 = vmatpush2.msra.mxu0 0.0
        %2670 = vmatprep.subr.mxu0 0.0
        %2671 = vmatpush2.msra.mxu0 0.0
        %2672 = vmatprep.subr.mxu0 0.0
        %2673 = vmatpush2.msra.mxu0 0.0
        %2674 = vmatprep.subr.mxu0 0.0
        %2675 = vmatpush2.msra.mxu0 0.0
        %2676 = vmatprep.subr.mxu0 0.0
        %2677 = vmatpush2.msra.mxu0 0.0
        %2678 = vmatprep.subr.mxu0 0.0
        %2679 = vmatpush2.msra.mxu0 0.0
        %2680 = vmatprep.subr.mxu0 0.0
        %2681 = vmatpush2.msra.mxu0 0.0
        %2682 = vmatprep.subr.mxu0 0.0
        %2683 = vmatpush2.msra.mxu0 0.0
        %2684 = vmatprep.subr.mxu0 0.0
        %2685 = vmatpush2.msra.mxu0 0.0
        %2686 = vmatprep.mubr.f32.mxu0 0.0
        %2687 = vmatmul.mubr.f32.gmra.mxu0 %v2620
        %v2688 = vpop.f32.mrf.mxu0
        %v2689 = vadd.f32 %v2617, %v2688
        %v2690 = vpop.f32.mrf.mxu0
        %2691 = vdwg.mxu0
        %v2692 = vmul.f32 %v2689, 0.5
        %v2693 = vmul.f32 %v2689, %v2689
        %v2694 = vmul.f32 %v2689, %v2693
        %v2695 = vmul.f32 %v2694, 0.044715
        %v2696 = vadd.f32 %v2689, %v2695
        %v2697 = vmul.f32 %v2696, 0.7978846
        %v2698 = vtanh.pop %v2697
        %v2699 = vadd.f32 %v2698, 1.0
        %v2700 = vmul.f32 %v2692, %v2699
        %s2701 = scalar_lea.vmem %s9, 128
        %v2702 = vld [vmem:[%s2701] sm:$0xff]
        %v2703 = vld [vmem:[%s2701 + $0x8] sm:$0xff]
        %v2704 = vld [vmem:[%s2701 + $0x10] sm:$0xff]
        %v2705 = vld [vmem:[%s2701 + $0x18] sm:$0xff]
        %v2706 = vld [vmem:[%s2701 + $0x20] sm:$0xff]
        %v2707 = vld [vmem:[%s2701 + $0x28] sm:$0xff]
        %v2708 = vld [vmem:[%s2701 + $0x30] sm:$0xff]
        %v2709 = vld [vmem:[%s2701 + $0x38] sm:$0xff]
        %v2710 = vld [vmem:[%s2701 + $0x40] sm:$0xff]
        %v2711 = vld [vmem:[%s2701 + $0x48] sm:$0xff]
        %v2712 = vld [vmem:[%s2701 + $0x50] sm:$0xff]
        %v2713 = vld [vmem:[%s2701 + $0x58] sm:$0xff]
        %v2714 = vld [vmem:[%s2701 + $0x60] sm:$0xff]
        %v2715 = vld [vmem:[%s2701 + $0x68] sm:$0xff]
        %v2716 = vld [vmem:[%s2701 + $0x70] sm:$0xff]
        %v2717 = vld [vmem:[%s2701 + $0x78] sm:$0xff]
        %s2718 = scalar_lea.vmem %s10, 1
        %v2719 = vld [vmem:[%s2718] sm:$0x1]
        %v2721 = vlaneseq
        %v2722 = vshrl.u32 %v2721, 7
        %v2723 = vsub.s32 0, %v2722
        %v2724 = vrot.slane %v2719, %v2723
        %2726 = vmatprep.subr.mxu0 0.0
        %2727 = vmatpush1.msra.mxu0 %v2717
        %2728 = vmatprep.subr.mxu0 0.0
        %2729 = vmatpush1.msra.mxu0 %v2716
        %2730 = vmatprep.subr.mxu0 0.0
        %2731 = vmatpush1.msra.mxu0 %v2715
        %2732 = vmatprep.subr.mxu0 0.0
        %2733 = vmatpush1.msra.mxu0 %v2714
        %2734 = vmatprep.subr.mxu0 0.0
        %2735 = vmatpush1.msra.mxu0 %v2713
        %2736 = vmatprep.subr.mxu0 0.0
        %2737 = vmatpush1.msra.mxu0 %v2712
        %2738 = vmatprep.subr.mxu0 0.0
        %2739 = vmatpush1.msra.mxu0 %v2711
        %2740 = vmatprep.subr.mxu0 0.0
        %2741 = vmatpush1.msra.mxu0 %v2710
        %2742 = vmatprep.subr.mxu0 0.0
        %2743 = vmatpush1.msra.mxu0 %v2709
        %2744 = vmatprep.subr.mxu0 0.0
        %2745 = vmatpush1.msra.mxu0 %v2708
        %2746 = vmatprep.subr.mxu0 0.0
        %2747 = vmatpush1.msra.mxu0 %v2707
        %2748 = vmatprep.subr.mxu0 0.0
        %2749 = vmatpush1.msra.mxu0 %v2706
        %2750 = vmatprep.subr.mxu0 0.0
        %2751 = vmatpush1.msra.mxu0 %v2705
        %2752 = vmatprep.subr.mxu0 0.0
        %2753 = vmatpush1.msra.mxu0 %v2704
        %2754 = vmatprep.subr.mxu0 0.0
        %2755 = vmatpush1.msra.mxu0 %v2703
        %2756 = vmatprep.subr.mxu0 0.0
        %2757 = vmatpush1.msra.mxu0 %v2702
        %2758 = vmatprep.subr.mxu0 0.0
        %2759 = vmatpush2.msra.mxu0 0.0
        %2760 = vmatprep.subr.mxu0 0.0
        %2761 = vmatpush2.msra.mxu0 0.0
        %2762 = vmatprep.subr.mxu0 0.0
        %2763 = vmatpush2.msra.mxu0 0.0
        %2764 = vmatprep.subr.mxu0 0.0
        %2765 = vmatpush2.msra.mxu0 0.0
        %2766 = vmatprep.subr.mxu0 0.0
        %2767 = vmatpush2.msra.mxu0 0.0
        %2768 = vmatprep.subr.mxu0 0.0
        %2769 = vmatpush2.msra.mxu0 0.0
        %2770 = vmatprep.subr.mxu0 0.0
        %2771 = vmatpush2.msra.mxu0 0.0
        %2772 = vmatprep.subr.mxu0 0.0
        %2773 = vmatpush2.msra.mxu0 0.0
        %2774 = vmatprep.subr.mxu0 0.0
        %2775 = vmatpush2.msra.mxu0 0.0
        %2776 = vmatprep.subr.mxu0 0.0
        %2777 = vmatpush2.msra.mxu0 0.0
        %2778 = vmatprep.subr.mxu0 0.0
        %2779 = vmatpush2.msra.mxu0 0.0
        %2780 = vmatprep.subr.mxu0 0.0
        %2781 = vmatpush2.msra.mxu0 0.0
        %2782 = vmatprep.subr.mxu0 0.0
        %2783 = vmatpush2.msra.mxu0 0.0
        %2784 = vmatprep.subr.mxu0 0.0
        %2785 = vmatpush2.msra.mxu0 0.0
        %2786 = vmatprep.subr.mxu0 0.0
        %2787 = vmatpush2.msra.mxu0 0.0
        %2788 = vmatprep.subr.mxu0 0.0
        %2789 = vmatpush2.msra.mxu0 0.0
        %2790 = vmatprep.mubr.f32.mxu0 0.0
        %2791 = vmatmul.mubr.f32.gmra.mxu0 %v2700
        %v2792 = vpop.f32.mrf.mxu0
        %v2793 = vadd.f32 %v2724, %v2792
        %v2794 = vpop.f32.mrf.mxu0
        %2795 = vdwg.mxu0
        %v2796 = vadd.f32 %v2575, %v2793
        %v2797 = vsel %vm559, %v2796, 0.0
        %2798 = vadd.xlane.f32.xlu0 %v2797
        %v2799 = vpop.xlane.xlu0 %2798
        %v2800 = vmul.f32 %v2799, %v563
        %v2801 = vsub.f32 %v2796, %v2800
        %v2802 = vmul.f32 %v2801, %v2801
        %v2803 = vsel %vm559, %v2802, 0.0
        %2804 = vadd.xlane.f32.xlu0 %v2803
        %v2805 = vpop.xlane.xlu0 %2804
        %v2806 = vmul.f32 %v2805, %v570
        %v2807 = vrsqrt.pop %v2806
        %v2808 = vmul.f32 %v2806, %v2807
        %vm2809 = vcmp.eq.f32.partialorder %v2806, inf
        %v2810 = vsel %vm2809, %v2806, %v2808
        %vm2811 = vcmp.eq.f32.partialorder %v2806, 0.0
        %v2812 = vand.u32 %v2806, 2147483648
        %v2813 = vsel %vm2811, %v2812, %v2810
        %v2814 = vmul.f32 %v1690, %v2801
        %v2815 = vadd.f32 %v2813, 1e-05
        %v2816 = vrcp.pop %v2815
        %v2817 = vmul.f32 %v2814, %v2816
        %v2818 = vadd.f32 %v2817, %v1698
        %s2819 = scalar_lea.vmem %s532, 8 [#allocation6]
        %2820 = vst.msk [vmem:[%s2819] sm:$0xff] %vm559, %v2818
        %2821 = vst.msk [vmem:[%s519] sm:$0xff] %vm559, %v2818
        %v2822 = vld [vmem:[%s11] sm:$0xff]
        %v2823 = vld [vmem:[%s11 + $0x8] sm:$0xff]
        %v2824 = vld [vmem:[%s11 + $0x10] sm:$0xff]
        %v2825 = vld [vmem:[%s11 + $0x18] sm:$0xff]
        %v2827 = vrot.slane %v2818, 7
        %v2828 = vsel %vm559, %v2827, 0
        %2830 = vmatprep.subr.mxu0 0.0
        %2831 = vmatpush1.msra.mxu0 0.0
        %2832 = vmatprep.subr.mxu0 0.0
        %2833 = vmatpush1.msra.mxu0 0.0
        %2834 = vmatprep.subr.mxu0 0.0
        %2835 = vmatpush1.msra.mxu0 0.0
        %2836 = vmatprep.subr.mxu0 0.0
        %2837 = vmatpush1.msra.mxu0 0.0
        %2838 = vmatprep.subr.mxu0 0.0
        %2839 = vmatpush1.msra.mxu0 0.0
        %2840 = vmatprep.subr.mxu0 0.0
        %2841 = vmatpush1.msra.mxu0 0.0
        %2842 = vmatprep.subr.mxu0 0.0
        %2843 = vmatpush1.msra.mxu0 0.0
        %2844 = vmatprep.subr.mxu0 0.0
        %2845 = vmatpush1.msra.mxu0 0.0
        %2846 = vmatprep.subr.mxu0 0.0
        %2847 = vmatpush1.msra.mxu0 0.0
        %2848 = vmatprep.subr.mxu0 0.0
        %2849 = vmatpush1.msra.mxu0 0.0
        %2850 = vmatprep.subr.mxu0 0.0
        %2851 = vmatpush1.msra.mxu0 0.0
        %2852 = vmatprep.subr.mxu0 0.0
        %2853 = vmatpush1.msra.mxu0 0.0
        %2854 = vmatprep.subr.mxu0 0.0
        %2855 = vmatpush1.msra.mxu0 %v2825
        %2856 = vmatprep.subr.mxu0 0.0
        %2857 = vmatpush1.msra.mxu0 %v2824
        %2858 = vmatprep.subr.mxu0 0.0
        %2859 = vmatpush1.msra.mxu0 %v2823
        %2860 = vmatprep.subr.mxu0 0.0
        %2861 = vmatpush1.msra.mxu0 %v2822
        %2862 = vmatprep.subr.mxu0 0.0
        %2863 = vmatpush2.msra.mxu0 0.0
        %2864 = vmatprep.subr.mxu0 0.0
        %2865 = vmatpush2.msra.mxu0 0.0
        %2866 = vmatprep.subr.mxu0 0.0
        %2867 = vmatpush2.msra.mxu0 0.0
        %2868 = vmatprep.subr.mxu0 0.0
        %2869 = vmatpush2.msra.mxu0 0.0
        %2870 = vmatprep.subr.mxu0 0.0
        %2871 = vmatpush2.msra.mxu0 0.0
        %2872 = vmatprep.subr.mxu0 0.0
        %2873 = vmatpush2.msra.mxu0 0.0
        %2874 = vmatprep.subr.mxu0 0.0
        %2875 = vmatpush2.msra.mxu0 0.0
        %2876 = vmatprep.subr.mxu0 0.0
        %2877 = vmatpush2.msra.mxu0 0.0
        %2878 = vmatprep.subr.mxu0 0.0
        %2879 = vmatpush2.msra.mxu0 0.0
        %2880 = vmatprep.subr.mxu0 0.0
        %2881 = vmatpush2.msra.mxu0 0.0
        %2882 = vmatprep.subr.mxu0 0.0
        %2883 = vmatpush2.msra.mxu0 0.0
        %2884 = vmatprep.subr.mxu0 0.0
        %2885 = vmatpush2.msra.mxu0 0.0
        %2886 = vmatprep.subr.mxu0 0.0
        %2887 = vmatpush2.msra.mxu0 0.0
        %2888 = vmatprep.subr.mxu0 0.0
        %2889 = vmatpush2.msra.mxu0 0.0
        %2890 = vmatprep.subr.mxu0 0.0
        %2891 = vmatpush2.msra.mxu0 0.0
        %2892 = vmatprep.subr.mxu0 0.0
        %2893 = vmatpush2.msra.mxu0 0.0
        %2894 = vmatprep.mubr.f32.mxu0 0.0
        %2895 = vmatmul.mubr.f32.gmra.mxu0 %v2828
        %v2896 = vpop.f32.mrf.mxu0
        %v2897 = vadd.f32 0.0, %v2896
        %v2898 = vpop.f32.mrf.mxu0
        %2899 = vdwg.mxu0
        %vm2900 = vcmask 516096
        %2901 = vst.msk [vmem:[%s525] sm:$0x1] %vm2900, %v2897
        %s2902 = sand.u32 %s302, 1
        %s2903 = scalar_lea.sflag [#allocation3], %s2902
        %s2904 = sand.u32 %s302, 1
        %s2905 = smul.addr %s2904, 8
        %s2906 = scalar_lea.vmem [#allocation2], %s2905
        %s2907 = sand.u32 %s37, 1
        %s2908 = scalar_lea.sflag [#allocation5], %s2907
        %s2909 = sand.u32 %s328, 1
        %s2910 = scalar_lea.vmem [#allocation4], %s2909
        %s2911 = sand.u32 %s37, 1
        %s2912 = scalar_lea.sflag [#allocation5], %s2911
        %s2913 = sand.u32 %s354, 1
        %s2914 = smul.addr %s2913, 16
        %s2915 = scalar_lea.vmem [#allocation6], %s2914
        %s2916 = sand.u32 %s37, 1
        %s2917 = scalar_lea.sflag [#allocation8], %s2916
        %s2918 = sand.u32 %s380, 1
        %s2919 = smul.addr %s2918, 16
        %s2920 = scalar_lea.vmem [#allocation7], %s2919
        %s2921 = sand.u32 %s37, 1
        %s2922 = scalar_lea.sflag [#allocation8], %s2921
        %s2923 = sand.u32 %s406, 1
        %s2924 = smul.addr %s2923, 64
        %s2925 = scalar_lea.vmem [#allocation9], %s2924
        // Predicated region
        $region69: #{tpu_custom_call.1} parent=67 // pred_check
          %p2926 = pneg %p312
        $region70: #{tpu_custom_call.1} parent=67 // pred_check_branch
          %2928 = sbr.rel (%p2926) target = $region72
        $region71: #{tpu_custom_call.1} parent=67 // pred_region
          %s2930 = ssub.s32 128, 128
          %2931 = vsyncadd %s2903, %s2930
          %s2932 = smul.addr %s37, 128
          %s2933 = scalar_lea.hbm %s12, %s2932
          %s2935 = sshll.u32 %s2906, 4
          %s2936 = int_to_ptr.vmem [resolvable:$true] %s2935
          %2938 = dma.vmem_to_hbm [thread:$0]  %s2936, 128, %s2933, %s2903
        $region72: #{tpu_custom_call.1} parent=67 // pred_fallthru
          _
        // Predicated region
        $region73: #{tpu_custom_call.1} parent=67 // pred_check
          %p2939 = pneg %p338
        $region74: #{tpu_custom_call.1} parent=67 // pred_check_branch
          %2941 = sbr.rel (%p2939) target = $region76
        $region75: #{tpu_custom_call.1} parent=67 // pred_region
          %s2943 = ssub.s32 16, 16
          %2944 = vsyncadd %s2908, %s2943
          %s2945 = smul.addr %s37, 16
          %s2946 = scalar_lea.hbm %s13, %s2945
          %s2948 = sshll.u32 %s2910, 4
          %s2949 = int_to_ptr.vmem [resolvable:$true] %s2948
          %2951 = dma.vmem_to_hbm [thread:$0]  %s2949, 16, %s2946, %s2908
        $region76: #{tpu_custom_call.1} parent=67 // pred_fallthru
          _
        // Predicated region
        $region77: #{tpu_custom_call.1} parent=67 // pred_check
          %p2952 = pneg %p364
        $region78: #{tpu_custom_call.1} parent=67 // pred_check_branch
          %2954 = sbr.rel (%p2952) target = $region80
        $region79: #{tpu_custom_call.1} parent=67 // pred_region
          %s2956 = ssub.s32 256, 256
          %2957 = vsyncadd %s2912, %s2956
          %s2958 = smul.addr %s37, 2
          %s2959 = smul.addr %s2958, 128
          %s2960 = scalar_lea.hbm %s14, %s2959
          %s2961 = sshll.u32 %s2915, 4
          %s2962 = int_to_ptr.vmem [resolvable:$true] %s2961
          %2967 = dma.vmem_to_hbm [thread:$0]  %s2962, 256, %s2960, %s2912, 128, 128, 8
        $region80: #{tpu_custom_call.1} parent=67 // pred_fallthru
          _
        // Predicated region
        $region81: #{tpu_custom_call.1} parent=67 // pred_check
          %p2968 = pneg %p390
        $region82: #{tpu_custom_call.1} parent=67 // pred_check_branch
          %2970 = sbr.rel (%p2968) target = $region84
        $region83: #{tpu_custom_call.1} parent=67 // pred_region
          %s2972 = ssub.s32 256, 256
          %2973 = vsyncadd %s2917, %s2972
          %s2974 = smul.addr %s37, 2
          %s2975 = smul.addr %s2974, 128
          %s2976 = scalar_lea.hbm %s15, %s2975
          %s2977 = sshll.u32 %s2920, 4
          %s2978 = int_to_ptr.vmem [resolvable:$true] %s2977
          %2983 = dma.vmem_to_hbm [thread:$0]  %s2978, 256, %s2976, %s2917, 128, 128, 8
        $region84: #{tpu_custom_call.1} parent=67 // pred_fallthru
          _
        // Predicated region
        $region85: #{tpu_custom_call.1} parent=67 // pred_check
          %p2984 = pneg %p416
        $region86: #{tpu_custom_call.1} parent=67 // pred_check_branch
          %2986 = sbr.rel (%p2984) target = $region88
        $region87: #{tpu_custom_call.1} parent=67 // pred_region
          %s2988 = ssub.s32 1024, 1024
          %2989 = vsyncadd %s2922, %s2988
          %s2990 = smul.addr %s37, 8
          %s2991 = smul.addr %s2990, 128
          %s2992 = scalar_lea.hbm %s16, %s2991
          %s2993 = sshll.u32 %s2925, 4
          %s2994 = int_to_ptr.vmem [resolvable:$true] %s2993
          %2999 = dma.vmem_to_hbm [thread:$0]  %s2994, 1024, %s2992, %s2922, 128, 128, 8
        $region88: #{tpu_custom_call.1} parent=67 // pred_fallthru
          _
      $region68: #{tpu_custom_call.1} parent=5 // pred_fallthru
        _
      %p3000 = scmp.le.s32.totalorder 2, %s32
      // Predicated region
      $region89: #{tpu_custom_call.1} parent=5 // pred_check
        %p3001 = pneg %p3000
      $region90: #{tpu_custom_call.1} parent=5 // pred_check_branch
        %3003 = sbr.rel (%p3001) target = $region92
      $region91: #{tpu_custom_call.1} parent=5 // pred_region
        %s3004 = ssub.s32 %s32, 2
        // Predicated region
        $region93: #{tpu_custom_call.1} parent=91 // pred_check
          %p3005 = pneg %p318
        $region94: #{tpu_custom_call.1} parent=91 // pred_check_branch
          %3007 = sbr.rel (%p3005) target = $region96
        $region95: #{tpu_custom_call.1} parent=91 // pred_region
          %s3008 = sand.u32 %s303, 1
          %s3009 = scalar_lea.sflag [#allocation3], %s3008
          %s3010 = sand.u32 %s303, 1
          %s3011 = smul.addr %s3010, 8
          %s3012 = scalar_lea.vmem [#allocation2], %s3011
          %3013 = dma.done %s3009, 128
        $region96: #{tpu_custom_call.1} parent=91 // pred_fallthru
          _
        // Predicated region
        $region97: #{tpu_custom_call.1} parent=91 // pred_check
          %p3014 = pneg %p344
        $region98: #{tpu_custom_call.1} parent=91 // pred_check_branch
          %3016 = sbr.rel (%p3014) target = $region100
        $region99: #{tpu_custom_call.1} parent=91 // pred_region
          %s3017 = sand.u32 %s38, 1
          %s3018 = scalar_lea.sflag [#allocation5], %s3017
          %s3019 = sand.u32 %s329, 1
          %s3020 = scalar_lea.vmem [#allocation4], %s3019
          %3021 = dma.done %s3018, 16
        $region100: #{tpu_custom_call.1} parent=91 // pred_fallthru
          _
        // Predicated region
        $region101: #{tpu_custom_call.1} parent=91 // pred_check
          %p3022 = pneg %p370
        $region102: #{tpu_custom_call.1} parent=91 // pred_check_branch
          %3024 = sbr.rel (%p3022) target = $region104
        $region103: #{tpu_custom_call.1} parent=91 // pred_region
          %s3025 = sand.u32 %s38, 1
          %s3026 = scalar_lea.sflag [#allocation5], %s3025
          %s3027 = sand.u32 %s355, 1
          %s3028 = smul.addr %s3027, 16
          %s3029 = scalar_lea.vmem [#allocation6], %s3028
          %3030 = dma.done %s3026, 256
        $region104: #{tpu_custom_call.1} parent=91 // pred_fallthru
          _
        // Predicated region
        $region105: #{tpu_custom_call.1} parent=91 // pred_check
          %p3031 = pneg %p396
        $region106: #{tpu_custom_call.1} parent=91 // pred_check_branch
          %3033 = sbr.rel (%p3031) target = $region108
        $region107: #{tpu_custom_call.1} parent=91 // pred_region
          %s3034 = sand.u32 %s38, 1
          %s3035 = scalar_lea.sflag [#allocation8], %s3034
          %s3036 = sand.u32 %s381, 1
          %s3037 = smul.addr %s3036, 16
          %s3038 = scalar_lea.vmem [#allocation7], %s3037
          %3039 = dma.done %s3035, 256
        $region108: #{tpu_custom_call.1} parent=91 // pred_fallthru
          _
        // Predicated region
        $region109: #{tpu_custom_call.1} parent=91 // pred_check
          %p3040 = pneg %p422
        $region110: #{tpu_custom_call.1} parent=91 // pred_check_branch
          %3042 = sbr.rel (%p3040) target = $region112
        $region111: #{tpu_custom_call.1} parent=91 // pred_region
          %s3043 = sand.u32 %s38, 1
          %s3044 = scalar_lea.sflag [#allocation8], %s3043
          %s3045 = sand.u32 %s407, 1
          %s3046 = smul.addr %s3045, 64
          %s3047 = scalar_lea.vmem [#allocation9], %s3046
          %3048 = dma.done %s3044, 1024
        $region112: #{tpu_custom_call.1} parent=91 // pred_fallthru
          _
      $region92: #{tpu_custom_call.1} parent=5 // pred_fallthru
        _
    $region6: #{tpu_custom_call.1} parent=1 // loop_footer
      %s36 = sadd.s32 1, %s32
    $region7: #{tpu_custom_call.1} parent=1 // loop_footer_branch
      %31 = sbr.rel target = $region3
    $region8: #{tpu_custom_call.1} parent=1 // loop_exit
      _
    %3049 = vsyncpa [#allocation3], 1
    %s3050 = scalar_lea.sflag [#allocation3], 1
    %3051 = vsyncpa %s3050, 1
    %3052 = vsyncpa [#allocation5], 1
    %s3053 = scalar_lea.sflag [#allocation5], 1
    %3054 = vsyncpa %s3053, 1
    %3055 = vsyncpa [#allocation8], 1
    %s3056 = scalar_lea.sflag [#allocation8], 1
    %3057 = vsyncpa %s3056, 1

</llo_original>
